<compile_context>
chip_gen: v7x
topology: tpu7x:2x2x1
jax: 0.10.0
libtpu: 0.0.40
codegen_flags: <defaults>
</compile_context>

<pallas_src>
import functools
import math

import numpy as np

import jax
import jax.numpy as jnp
from jax import lax
from jax.experimental import pallas as pl
from jax.experimental.pallas import tpu as pltpu

_LANE = 128           # lane width of the flattened (rows, 128) input view
_MAX_ROW_TILE = 4096  # rows per block -> 2 MiB in / 4 MiB out (f32), ~12 MiB dbl-buffered

_STATE = {"shuffle_ok": None}   # lazily-probed: does the lane-interleave path lower?


# --------------------------------------------------------------------------------------
# Kernels
# --------------------------------------------------------------------------------------
def _log_transform(x, *, eps, log_eps, half_inv_denom):
    """Single-log formulation, bit-identical to the two-branch reference."""
    y = jnp.minimum(x, 1.0 - x)                       # x if x<=0.5 else 1-x
    t = (jnp.log(y + eps) - log_eps) * half_inv_denom
    return jnp.where(x > 0.5, 1.0 - t, t)


def _kernel_interleave(x_ref, o_ref, *, eps, log_eps, half_inv_denom):
    """Elementwise transform + in-register lane riffle (no MXU)."""
    x = x_ref[...].astype(jnp.float32)
    g = _log_transform(x, eps=eps, log_eps=log_eps, half_inv_denom=half_inv_denom)
    tm, tc = x.shape
    # out[:, 2k] = x[:, k], out[:, 2k+1] = g[:, k] — pure data movement (XLU/VPU).
    out = jnp.stack([x, g], axis=-1).reshape(tm, 2 * tc)
    o_ref[...] = out.astype(o_ref.dtype)


def _kernel_mxu(r_even_ref, r_odd_ref, x_ref, o_ref, *, eps, log_eps, half_inv_denom):
    """Fallback: riffle via two selection matmuls with resident constant 0/1 matrices."""
    x = x_ref[...].astype(jnp.float32)
    g = _log_transform(x, eps=eps, log_eps=log_eps, half_inv_denom=half_inv_denom)
    out = jnp.dot(x, r_even_ref[...], precision=lax.Precision.HIGHEST,
                  preferred_element_type=jnp.float32)
    out = out + jnp.dot(g, r_odd_ref[...], precision=lax.Precision.HIGHEST,
                        preferred_element_type=jnp.float32)
    o_ref[...] = out.astype(o_ref.dtype)


@functools.lru_cache(maxsize=1)
def _riffle_mats():
    """Constant (128, 256) 0/1 riffle matrices for the MXU fallback (built once)."""
    k = np.arange(_LANE)
    r_even = np.zeros((_LANE, 2 * _LANE), np.float32)
    r_odd = np.zeros((_LANE, 2 * _LANE), np.float32)
    r_even[k, 2 * k] = 1.0
    r_odd[k, 2 * k + 1] = 1.0
    return jnp.asarray(r_even), jnp.asarray(r_odd)


# --------------------------------------------------------------------------------------
# pallas_call wrapper
# --------------------------------------------------------------------------------------
def _run(x2, out_dtype, tm, eps, log_eps, half_inv_denom, *, use_mxu):
    """Run one pallas_call over a (rows, 128) view, producing (rows, 256)."""
    r = x2.shape[0]
    grid_rows = pl.cdiv(r, tm)
    n_elems = r * _LANE
    in_bytes = jnp.dtype(x2.dtype).itemsize
    out_bytes = jnp.dtype(out_dtype).itemsize

    flops = 8 * n_elems                       # min/add/sub/mul/cmp/select + interleave
    if use_mxu:
        flops += 1024 * n_elems               # two (tm,128)x(128,256) matmuls per block
    cost = pl.CostEstimate(
        flops=int(flops),
        transcendentals=int(n_elems),         # one log per input element
        bytes_accessed=int(n_elems * in_bytes + 2 * n_elems * out_bytes),
    )
    params = pltpu.CompilerParams(
        dimension_semantics=("parallel",),    # row blocks are independent (megacore)
        vmem_limit_bytes=32 * 1024 * 1024,
    )
    x_spec = pl.BlockSpec((tm, _LANE), lambda i: (i, 0))
    o_spec = pl.BlockSpec((tm, 2 * _LANE), lambda i: (i, 0))   # lane-dense output
    out_shape = jax.ShapeDtypeStruct((r, 2 * _LANE), out_dtype)
    kw = dict(eps=eps, log_eps=log_eps, half_inv_denom=half_inv_denom)

    if use_mxu:
        r_even, r_odd = _riffle_mats()
        const_spec = pl.BlockSpec((_LANE, 2 * _LANE), lambda i: (0, 0))  # resident
        return pl.pallas_call(
            functools.partial(_kernel_mxu, **kw),
            out_shape=out_shape,
            grid=(grid_rows,),
            in_specs=[const_spec, const_spec, x_spec],
            out_specs=o_spec,
            compiler_params=params,
            cost_estimate=cost,
        )(r_even, r_odd, x2)

    return pl.pallas_call(
        functools.partial(_kernel_interleave, **kw),
        out_shape=out_shape,
        grid=(grid_rows,),
        in_specs=[x_spec],
        out_specs=o_spec,
        compiler_params=params,
        cost_estimate=cost,
    )(x2)


def _shuffle_supported():
    """One-time tiny probe: does the lane-interleave kernel lower and compute correctly?"""
    if _STATE["shuffle_ok"] is None:
        try:
            with jax.ensure_compile_time_eval():
                eps = 1e-10
                log_eps = math.log(eps)
                hid = 0.5 / (math.log(1.0 + eps) - log_eps)
                xp = jnp.linspace(0.0, 1.0, 8 * _LANE, dtype=jnp.float32).reshape(8, _LANE)
                got = _run(xp, jnp.float32, 8, eps, log_eps, hid, use_mxu=False)
                want = _reference(xp, eps)
                _STATE["shuffle_ok"] = bool(jnp.allclose(got, want, rtol=1e-5, atol=1e-5))
        except Exception:
            _STATE["shuffle_ok"] = False
    return _STATE["shuffle_ok"]


def add_log_neglog_dims(x, eps=1e-10):
    """Pallas forward of AddLogNegLogDims: (..., D) -> (..., 2*D)."""
    orig_shape = x.shape
    d = orig_shape[-1]
    n = x.size
    out_dtype = x.dtype

    # Scalar constants as Python floats -> folded into the kernel as literals.
    log_eps = math.log(eps)
    half_inv_denom = 0.5 / (math.log(1.0 + eps) - log_eps)

    # Lane-dense flattened view (rows, 128).  Zero-copy when n % 128 == 0 (common
    # case); otherwise pad only the < 128-element tail.  Partial *row* blocks are
    # handled by Pallas edge masking (no whole-array pad / output slice).
    flat = x.reshape(-1)
    r = pl.cdiv(n, _LANE)
    pad = r * _LANE - n
    if pad:
        flat = jnp.pad(flat, (0, pad))
    x2 = flat.reshape(r, _LANE)

    # Row tile: as large as fits comfortably, rounded to the dtype's packed sublane
    # multiple (8 for 32-bit, 16 for 16-bit, 32 for 8-bit).
    sub = max(8, 32 // jnp.dtype(x.dtype).itemsize)
    tm = min(_MAX_ROW_TILE, r)
    if tm >= sub:
        tm = (tm // sub) * sub

    args = (x2, out_dtype, tm, float(eps), float(log_eps), float(half_inv_denom))
    if _shuffle_supported():
        try:
            out2 = _run(*args, use_mxu=False)
        except Exception:
            _STATE["shuffle_ok"] = False          # e.g. relayout VMEM blow-up at big tm
            out2 = _run(*args, use_mxu=True)
    else:
        out2 = _run(*args, use_mxu=True)

    out_flat = out2.reshape(-1)
    if pad:
        out_flat = out_flat[: 2 * n]
    return out_flat.reshape(*orig_shape[:-1], 2 * d)


# --------------------------------------------------------------------------------------
# Pure-JAX reference (matches the PyTorch module)
# --------------------------------------------------------------------------------------
def _reference(x, eps=1e-10):
    log_eps = math.log(eps)
    denom = math.log(1.0 + eps) - log_eps
    logged = (jnp.log(x + eps) - log_eps) / denom / 2.0
    neglogged = 1.0 - (jnp.log((1.0 - x) + eps) - log_eps) / denom / 2.0
    g = jnp.where(x > 0.5, neglogged, logged)
    return jnp.stack([x, g], axis=-1).reshape(*x.shape[:-1], -1)


if __name__ == "__main__":
    EPS = 1e-10  # module __init__ default

    key = jax.random.PRNGKey(0)
    # Values in [0, 1) as the module expects: (batch=2, seq=8, hidden=64).
    x = jax.random.uniform(key, (2, 8, 64), dtype=jnp.float32)

    out = jax.block_until_ready(add_log_neglog_dims(x, EPS))
    ref = _reference(x, EPS)
    assert out.shape == (2, 8, 128) and out.dtype == x.dtype
    assert jnp.allclose(out, ref, atol=1e-5, rtol=1e-5)

    # Also exercise the tail-padding / partial-block path (numel % 128 != 0).
    x_tail = jax.random.uniform(jax.random.PRNGKey(1), (3, 5, 7), dtype=jnp.float32)
    out_tail = jax.block_until_ready(add_log_neglog_dims(x_tail, EPS))
    ref_tail = _reference(x_tail, EPS)
    assert out_tail.shape == (3, 5, 14)
    assert jnp.allclose(out_tail, ref_tail, atol=1e-5, rtol=1e-5)

    print("KERNEL_OK")
</pallas_src>

<mosaic_0001>
module attributes {stable_mosaic.version = 11 : i64} {
  func.func @_kernel_interleave(%arg0: i32, %arg1: memref<8x128xf32, #tpu.memory_space<vmem>>, %arg2: memref<8x256xf32, #tpu.memory_space<vmem>>) attributes {dimension_semantics = [#tpu.dimension_semantics<parallel>], iteration_bounds = array<i64: 1>, scalar_prefetch = 0 : i64, scratch_operands = 0 : i64, tpu.core_type = #tpu.core_type<tc>, window_params = [{transform_indices = @transform_0, window_bounds = array<i64: 8, 128>}, {transform_indices = @transform_1, window_bounds = array<i64: 8, 256>}]} {
    %c0 = arith.constant 0 : index
    %c0_0 = arith.constant 0 : index
    %0 = vector.load %arg1[%c0, %c0_0] : memref<8x128xf32, #tpu.memory_space<vmem>>, vector<8x128xf32>
    %cst = arith.constant 1.000000e+00 : f32
    %1 = vector.broadcast %cst : f32 to vector<8x128xf32>
    %2 = arith.subf %1, %0 : vector<8x128xf32>
    %3 = arith.minimumf %0, %2 : vector<8x128xf32>
    %cst_1 = arith.constant 1.000000e-10 : f32
    %4 = vector.broadcast %cst_1 : f32 to vector<8x128xf32>
    %5 = arith.addf %3, %4 : vector<8x128xf32>
    %6 = math.log %5 : vector<8x128xf32>
    %cst_2 = arith.constant -23.0258503 : f32
    %7 = vector.broadcast %cst_2 : f32 to vector<8x128xf32>
    %8 = arith.subf %6, %7 : vector<8x128xf32>
    %cst_3 = arith.constant 0.0217147246 : f32
    %9 = vector.broadcast %cst_3 : f32 to vector<8x128xf32>
    %10 = arith.mulf %8, %9 : vector<8x128xf32>
    %cst_4 = arith.constant 5.000000e-01 : f32
    %11 = vector.broadcast %cst_4 : f32 to vector<8x128xf32>
    %12 = arith.cmpf ogt, %0, %11 : vector<8x128xf32>
    %cst_5 = arith.constant 1.000000e+00 : f32
    %13 = vector.broadcast %cst_5 : f32 to vector<8x128xf32>
    %14 = arith.subf %13, %10 : vector<8x128xf32>
    %15 = arith.select %12, %14, %10 : vector<8x128xi1>, vector<8x128xf32>
    %16 = vector.shape_cast %0 : vector<8x128xf32> to vector<8x128x1xf32>
    %17 = vector.shape_cast %15 : vector<8x128xf32> to vector<8x128x1xf32>
    %18 = tpu.concatenate %16, %17 in 2 : vector<8x128x1xf32>, vector<8x128x1xf32> -> vector<8x128x2xf32>
    %19 = vector.shape_cast %18 : vector<8x128x2xf32> to vector<8x256xf32>
    %c0_6 = arith.constant 0 : index
    %c0_7 = arith.constant 0 : index
    %20 = vector.load %arg2[%c0_6, %c0_7] : memref<8x256xf32, #tpu.memory_space<vmem>>, vector<8x256xf32>
    tpu.vector_store %arg2[%c0_6, %c0_7], %19 {strides = array<i32>} : memref<8x256xf32, #tpu.memory_space<vmem>>, vector<8x256xf32>,
    return
  }
  func.func @transform_0(%arg0: i32) -> (i32, i32) {
    %c0_i32 = arith.constant 0 : i32
    %c0_i32_0 = arith.constant 0 : i32
    return %arg0, %c0_i32 : i32, i32
  }
  func.func @transform_1(%arg0: i32) -> (i32, i32) {
    %c0_i32 = arith.constant 0 : i32
    %c0_i32_0 = arith.constant 0 : i32
    return %arg0, %c0_i32 : i32, i32
  }
}

module attributes {stable_mosaic.version = 11 : i64} {
  func.func @_kernel_mxu(%arg0: i32, %arg1: memref<128x256xf32, #tpu.memory_space<vmem>>, %arg2: memref<128x256xf32, #tpu.memory_space<vmem>>, %arg3: memref<8x128xf32, #tpu.memory_space<vmem>>, %arg4: memref<8x256xf32, #tpu.memory_space<vmem>>) attributes {dimension_semantics = [#tpu.dimension_semantics<parallel>], iteration_bounds = array<i64: 1>, scalar_prefetch = 0 : i64, scratch_operands = 0 : i64, tpu.core_type = #tpu.core_type<tc>, window_params = [{pipeline_mode = #tpu.pipeline_mode<synchronous>, transform_indices = @transform_0, window_bounds = array<i64: 128, 256>}, {pipeline_mode = #tpu.pipeline_mode<synchronous>, transform_indices = @transform_1, window_bounds = array<i64: 128, 256>}, {transform_indices = @transform_2, window_bounds = array<i64: 8, 128>}, {transform_indices = @transform_3, window_bounds = array<i64: 8, 256>}]} {
    %c0 = arith.constant 0 : index
    %c0_0 = arith.constant 0 : index
    %0 = vector.load %arg3[%c0, %c0_0] : memref<8x128xf32, #tpu.memory_space<vmem>>, vector<8x128xf32>
    %cst = arith.constant 1.000000e+00 : f32
    %1 = vector.broadcast %cst : f32 to vector<8x128xf32>
    %2 = arith.subf %1, %0 : vector<8x128xf32>
    %3 = arith.minimumf %0, %2 : vector<8x128xf32>
    %cst_1 = arith.constant 1.000000e-10 : f32
    %4 = vector.broadcast %cst_1 : f32 to vector<8x128xf32>
    %5 = arith.addf %3, %4 : vector<8x128xf32>
    %6 = math.log %5 : vector<8x128xf32>
    %cst_2 = arith.constant -23.0258503 : f32
    %7 = vector.broadcast %cst_2 : f32 to vector<8x128xf32>
    %8 = arith.subf %6, %7 : vector<8x128xf32>
    %cst_3 = arith.constant 0.0217147246 : f32
    %9 = vector.broadcast %cst_3 : f32 to vector<8x128xf32>
    %10 = arith.mulf %8, %9 : vector<8x128xf32>
    %cst_4 = arith.constant 5.000000e-01 : f32
    %11 = vector.broadcast %cst_4 : f32 to vector<8x128xf32>
    %12 = arith.cmpf ogt, %0, %11 : vector<8x128xf32>
    %cst_5 = arith.constant 1.000000e+00 : f32
    %13 = vector.broadcast %cst_5 : f32 to vector<8x128xf32>
    %14 = arith.subf %13, %10 : vector<8x128xf32>
    %15 = arith.select %12, %14, %10 : vector<8x128xi1>, vector<8x128xf32>
    %c0_6 = arith.constant 0 : index
    %c0_7 = arith.constant 0 : index
    %16 = vector.load %arg1[%c0_6, %c0_7] : memref<128x256xf32, #tpu.memory_space<vmem>>, vector<128x256xf32>
    %cst_8 = arith.constant dense<0.000000e+00> : vector<8x256xf32>
    %17 = tpu.matmul %0, %16, %cst_8 {dimension_numbers = #tpu.dot_dimension_numbers<[1], [0], [0], [1], [0, 0, 1, 1], [], []>, precision = #tpu.contract_precision<fp32>} : vector<8x128xf32>, vector<128x256xf32>, vector<8x256xf32> -> vector<8x256xf32>
    %c0_9 = arith.constant 0 : index
    %c0_10 = arith.constant 0 : index
    %18 = vector.load %arg2[%c0_9, %c0_10] : memref<128x256xf32, #tpu.memory_space<vmem>>, vector<128x256xf32>
    %cst_11 = arith.constant dense<0.000000e+00> : vector<8x256xf32>
    %19 = tpu.matmul %15, %18, %cst_11 {dimension_numbers = #tpu.dot_dimension_numbers<[1], [0], [0], [1], [0, 0, 1, 1], [], []>, precision = #tpu.contract_precision<fp32>} : vector<8x128xf32>, vector<128x256xf32>, vector<8x256xf32> -> vector<8x256xf32>
    %20 = arith.addf %17, %19 : vector<8x256xf32>
    %c0_12 = arith.constant 0 : index
    %c0_13 = arith.constant 0 : index
    %21 = vector.load %arg4[%c0_12, %c0_13] : memref<8x256xf32, #tpu.memory_space<vmem>>, vector<8x256xf32>
    tpu.vector_store %arg4[%c0_12, %c0_13], %20 {strides = array<i32>} : memref<8x256xf32, #tpu.memory_space<vmem>>, vector<8x256xf32>,
    return
  }
  func.func @transform_0(%arg0: i32) -> (i32, i32) {
    %c0_i32 = arith.constant 0 : i32
    %c0_i32_0 = arith.constant 0 : i32
    %c0_i32_1 = arith.constant 0 : i32
    return %c0_i32, %c0_i32_0 : i32, i32
  }
  func.func @transform_1(%arg0: i32) -> (i32, i32) {
    %c0_i32 = arith.constant 0 : i32
    %c0_i32_0 = arith.constant 0 : i32
    %c0_i32_1 = arith.constant 0 : i32
    return %c0_i32, %c0_i32_0 : i32, i32
  }
  func.func @transform_2(%arg0: i32) -> (i32, i32) {
    %c0_i32 = arith.constant 0 : i32
    %c0_i32_0 = arith.constant 0 : i32
    return %arg0, %c0_i32 : i32, i32
  }
  func.func @transform_3(%arg0: i32) -> (i32, i32) {
    %c0_i32 = arith.constant 0 : i32
    %c0_i32_0 = arith.constant 0 : i32
    return %arg0, %c0_i32 : i32, i32
  }
}

</mosaic_0001>

<llo_original>
// kernel: tpu_custom_call.1
$region0: #{tpu_custom_call.1}
  #allocation0 [shape = 'u32[]', space=smem, size = 0x4, offset = 0x4, fixed_abs, tag = 'smem constant byte address 0x4 - core index']
  #allocation1 [shape = 'u32[144,128]{1,0:T(1,128)}', space=vmem, size = 0x12000, scoped, tag = 'internal scratch']
  %s0 = inlined_call_operand.hbm [shape: f32[8,128], index: 0, kind: input, shape index: {}]
  %s1 = inlined_call_operand.hbm [shape: f32[8,256], index: 1, kind: output, shape index: {}]
  %s2 = sld [smem:[#allocation0]]
  $region18: #{tpu_custom_call.1} parent=0
    _
  %s4 = ssub.s32 1, %s2
  %s5 = scalar_select 0, %s4, %s2
  $region1: #{tpu_custom_call.1} parent=0
    #allocation2 [shape = 'u8[4096]{0}', space=vmem, size = 0x1000, scoped, tag = 'input window, operand 0, single buffered']
    #allocation3 [shape = 's32[1]{0}', space=sflag, size = 0x4, scoped, tag = 'scoped memory for tpu_custom_call.1']
    #allocation4 [shape = 's32[1]{0}', space=sflag, size = 0x4, scoped, tag = 'scoped memory for tpu_custom_call.1']
    #allocation5 [shape = 'u8[8192]{0}', space=vmem, size = 0x2000, scoped, tag = 'output window, operand 0, single buffered']
    %6 = vsyncpa [#allocation3], 0
    %7 = vsyncpa [#allocation4], 0
    // Predicated region
    $region2: #{tpu_custom_call.1} parent=1 // pred_check
      _
    $region3: #{tpu_custom_call.1} parent=1 // pred_check_branch
      %9 = sbr.rel (0) target = $region5
    $region4: #{tpu_custom_call.1} parent=1 // pred_region
      %s11 = ssub.s32 128, 128
      %12 = vsyncadd [#allocation3], %s11
      %s14 = sshll.u32 [#allocation2], 4
      %s15 = int_to_ptr.vmem [resolvable:$true] %s14
      %17 = dma.hbm_to_vmem [thread:$0]  %s0, 128, %s15, [#allocation3]
    $region5: #{tpu_custom_call.1} parent=1 // pred_fallthru
      _
    // Predicated region
    $region6: #{tpu_custom_call.1} parent=1 // pred_check
      _
    $region7: #{tpu_custom_call.1} parent=1 // pred_check_branch
      %19 = sbr.rel (0) target = $region9
    $region8: #{tpu_custom_call.1} parent=1 // pred_region
      %20 = dma.done [#allocation3], 128
    $region9: #{tpu_custom_call.1} parent=1 // pred_fallthru
      _
    %v21 = vld [vmem:[#allocation2] sm:$0xff]
    %v22 = vsub.f32 1.0, %v21
    %v23 = vmin.f32 %v21, %v22
    %v24 = vadd.f32 %v23, 1e-10
    %v25 = vlog2.pop %v24
    %v26 = vmul.f32 %v25, 0.6931472
    %v27 = vsub.f32 %v26, -23.02585
    %v28 = vmul.f32 %v27, 0.021714725
    %vm29 = vcmp.gt.f32.partialorder %v21, 0.5
    %v30 = vsub.f32 1.0, %v28
    %v31 = vsel %vm29, %v30, %v28
    %v32 = vlaneseq
    %v33 = vshrl.u32 %v32, 7
    %v34 = vsub.s32 0, %v33
    %v35 = vrot.slane %v21, %v34
    %37 = vbcast.lane.b32.xlu0 %v35, 256
    %v38 = vpop.permute.xlu0 %37
    %s40 = sor.u32 256, 8
    %41 = vbcast.lane.b32.xlu0 %v35, %s40
    %v42 = vpop.permute.xlu0 %41
    %s44 = sor.u32 256, 16
    %45 = vbcast.lane.b32.xlu0 %v35, %s44
    %v46 = vpop.permute.xlu0 %45
    %s48 = sor.u32 256, 24
    %49 = vbcast.lane.b32.xlu0 %v35, %s48
    %v50 = vpop.permute.xlu0 %49
    %s52 = sor.u32 256, 32
    %53 = vbcast.lane.b32.xlu0 %v35, %s52
    %v54 = vpop.permute.xlu0 %53
    %s56 = sor.u32 256, 40
    %57 = vbcast.lane.b32.xlu0 %v35, %s56
    %v58 = vpop.permute.xlu0 %57
    %s60 = sor.u32 256, 48
    %61 = vbcast.lane.b32.xlu0 %v35, %s60
    %v62 = vpop.permute.xlu0 %61
    %s64 = sor.u32 256, 56
    %65 = vbcast.lane.b32.xlu0 %v35, %s64
    %v66 = vpop.permute.xlu0 %65
    %s68 = sor.u32 256, 64
    %69 = vbcast.lane.b32.xlu0 %v35, %s68
    %v70 = vpop.permute.xlu0 %69
    %s72 = sor.u32 256, 72
    %73 = vbcast.lane.b32.xlu0 %v35, %s72
    %v74 = vpop.permute.xlu0 %73
    %s76 = sor.u32 256, 80
    %77 = vbcast.lane.b32.xlu0 %v35, %s76
    %v78 = vpop.permute.xlu0 %77
    %s80 = sor.u32 256, 88
    %81 = vbcast.lane.b32.xlu0 %v35, %s80
    %v82 = vpop.permute.xlu0 %81
    %s84 = sor.u32 256, 96
    %85 = vbcast.lane.b32.xlu0 %v35, %s84
    %v86 = vpop.permute.xlu0 %85
    %s88 = sor.u32 256, 104
    %89 = vbcast.lane.b32.xlu0 %v35, %s88
    %v90 = vpop.permute.xlu0 %89
    %s92 = sor.u32 256, 112
    %93 = vbcast.lane.b32.xlu0 %v35, %s92
    %v94 = vpop.permute.xlu0 %93
    %s96 = sor.u32 256, 120
    %97 = vbcast.lane.b32.xlu0 %v35, %s96
    %v98 = vpop.permute.xlu0 %97
    %v99 = vlaneseq
    %v100 = vshrl.u32 %v99, 7
    %v101 = vsub.s32 1, %v100
    %v102 = vrot.slane %v21, %v101
    %104 = vbcast.lane.b32.xlu0 %v102, 256
    %v105 = vpop.permute.xlu0 %104
    %s107 = sor.u32 256, 8
    %108 = vbcast.lane.b32.xlu0 %v102, %s107
    %v109 = vpop.permute.xlu0 %108
    %s111 = sor.u32 256, 16
    %112 = vbcast.lane.b32.xlu0 %v102, %s111
    %v113 = vpop.permute.xlu0 %112
    %s115 = sor.u32 256, 24
    %116 = vbcast.lane.b32.xlu0 %v102, %s115
    %v117 = vpop.permute.xlu0 %116
    %s119 = sor.u32 256, 32
    %120 = vbcast.lane.b32.xlu0 %v102, %s119
    %v121 = vpop.permute.xlu0 %120
    %s123 = sor.u32 256, 40
    %124 = vbcast.lane.b32.xlu0 %v102, %s123
    %v125 = vpop.permute.xlu0 %124
    %s127 = sor.u32 256, 48
    %128 = vbcast.lane.b32.xlu0 %v102, %s127
    %v129 = vpop.permute.xlu0 %128
    %s131 = sor.u32 256, 56
    %132 = vbcast.lane.b32.xlu0 %v102, %s131
    %v133 = vpop.permute.xlu0 %132
    %s135 = sor.u32 256, 64
    %136 = vbcast.lane.b32.xlu0 %v102, %s135
    %v137 = vpop.permute.xlu0 %136
    %s139 = sor.u32 256, 72
    %140 = vbcast.lane.b32.xlu0 %v102, %s139
    %v141 = vpop.permute.xlu0 %140
    %s143 = sor.u32 256, 80
    %144 = vbcast.lane.b32.xlu0 %v102, %s143
    %v145 = vpop.permute.xlu0 %144
    %s147 = sor.u32 256, 88
    %148 = vbcast.lane.b32.xlu0 %v102, %s147
    %v149 = vpop.permute.xlu0 %148
    %s151 = sor.u32 256, 96
    %152 = vbcast.lane.b32.xlu0 %v102, %s151
    %v153 = vpop.permute.xlu0 %152
    %s155 = sor.u32 256, 104
    %156 = vbcast.lane.b32.xlu0 %v102, %s155
    %v157 = vpop.permute.xlu0 %156
    %s159 = sor.u32 256, 112
    %160 = vbcast.lane.b32.xlu0 %v102, %s159
    %v161 = vpop.permute.xlu0 %160
    %s163 = sor.u32 256, 120
    %164 = vbcast.lane.b32.xlu0 %v102, %s163
    %v165 = vpop.permute.xlu0 %164
    %v166 = vlaneseq
    %v167 = vshrl.u32 %v166, 7
    %v168 = vsub.s32 2, %v167
    %v169 = vrot.slane %v21, %v168
    %171 = vbcast.lane.b32.xlu0 %v169, 256
    %v172 = vpop.permute.xlu0 %171
    %s174 = sor.u32 256, 8
    %175 = vbcast.lane.b32.xlu0 %v169, %s174
    %v176 = vpop.permute.xlu0 %175
    %s178 = sor.u32 256, 16
    %179 = vbcast.lane.b32.xlu0 %v169, %s178
    %v180 = vpop.permute.xlu0 %179
    %s182 = sor.u32 256, 24
    %183 = vbcast.lane.b32.xlu0 %v169, %s182
    %v184 = vpop.permute.xlu0 %183
    %s186 = sor.u32 256, 32
    %187 = vbcast.lane.b32.xlu0 %v169, %s186
    %v188 = vpop.permute.xlu0 %187
    %s190 = sor.u32 256, 40
    %191 = vbcast.lane.b32.xlu0 %v169, %s190
    %v192 = vpop.permute.xlu0 %191
    %s194 = sor.u32 256, 48
    %195 = vbcast.lane.b32.xlu0 %v169, %s194
    %v196 = vpop.permute.xlu0 %195
    %s198 = sor.u32 256, 56
    %199 = vbcast.lane.b32.xlu0 %v169, %s198
    %v200 = vpop.permute.xlu0 %199
    %s202 = sor.u32 256, 64
    %203 = vbcast.lane.b32.xlu0 %v169, %s202
    %v204 = vpop.permute.xlu0 %203
    %s206 = sor.u32 256, 72
    %207 = vbcast.lane.b32.xlu0 %v169, %s206
    %v208 = vpop.permute.xlu0 %207
    %s210 = sor.u32 256, 80
    %211 = vbcast.lane.b32.xlu0 %v169, %s210
    %v212 = vpop.permute.xlu0 %211
    %s214 = sor.u32 256, 88
    %215 = vbcast.lane.b32.xlu0 %v169, %s214
    %v216 = vpop.permute.xlu0 %215
    %s218 = sor.u32 256, 96
    %219 = vbcast.lane.b32.xlu0 %v169, %s218
    %v220 = vpop.permute.xlu0 %219
    %s222 = sor.u32 256, 104
    %223 = vbcast.lane.b32.xlu0 %v169, %s222
    %v224 = vpop.permute.xlu0 %223
    %s226 = sor.u32 256, 112
    %227 = vbcast.lane.b32.xlu0 %v169, %s226
    %v228 = vpop.permute.xlu0 %227
    %s230 = sor.u32 256, 120
    %231 = vbcast.lane.b32.xlu0 %v169, %s230
    %v232 = vpop.permute.xlu0 %231
    %v233 = vlaneseq
    %v234 = vshrl.u32 %v233, 7
    %v235 = vsub.s32 3, %v234
    %v236 = vrot.slane %v21, %v235
    %238 = vbcast.lane.b32.xlu0 %v236, 256
    %v239 = vpop.permute.xlu0 %238
    %s241 = sor.u32 256, 8
    %242 = vbcast.lane.b32.xlu0 %v236, %s241
    %v243 = vpop.permute.xlu0 %242
    %s245 = sor.u32 256, 16
    %246 = vbcast.lane.b32.xlu0 %v236, %s245
    %v247 = vpop.permute.xlu0 %246
    %s249 = sor.u32 256, 24
    %250 = vbcast.lane.b32.xlu0 %v236, %s249
    %v251 = vpop.permute.xlu0 %250
    %s253 = sor.u32 256, 32
    %254 = vbcast.lane.b32.xlu0 %v236, %s253
    %v255 = vpop.permute.xlu0 %254
    %s257 = sor.u32 256, 40
    %258 = vbcast.lane.b32.xlu0 %v236, %s257
    %v259 = vpop.permute.xlu0 %258
    %s261 = sor.u32 256, 48
    %262 = vbcast.lane.b32.xlu0 %v236, %s261
    %v263 = vpop.permute.xlu0 %262
    %s265 = sor.u32 256, 56
    %266 = vbcast.lane.b32.xlu0 %v236, %s265
    %v267 = vpop.permute.xlu0 %266
    %s269 = sor.u32 256, 64
    %270 = vbcast.lane.b32.xlu0 %v236, %s269
    %v271 = vpop.permute.xlu0 %270
    %s273 = sor.u32 256, 72
    %274 = vbcast.lane.b32.xlu0 %v236, %s273
    %v275 = vpop.permute.xlu0 %274
    %s277 = sor.u32 256, 80
    %278 = vbcast.lane.b32.xlu0 %v236, %s277
    %v279 = vpop.permute.xlu0 %278
    %s281 = sor.u32 256, 88
    %282 = vbcast.lane.b32.xlu0 %v236, %s281
    %v283 = vpop.permute.xlu0 %282
    %s285 = sor.u32 256, 96
    %286 = vbcast.lane.b32.xlu0 %v236, %s285
    %v287 = vpop.permute.xlu0 %286
    %s289 = sor.u32 256, 104
    %290 = vbcast.lane.b32.xlu0 %v236, %s289
    %v291 = vpop.permute.xlu0 %290
    %s293 = sor.u32 256, 112
    %294 = vbcast.lane.b32.xlu0 %v236, %s293
    %v295 = vpop.permute.xlu0 %294
    %s297 = sor.u32 256, 120
    %298 = vbcast.lane.b32.xlu0 %v236, %s297
    %v299 = vpop.permute.xlu0 %298
    %v300 = vlaneseq
    %v301 = vshrl.u32 %v300, 7
    %v302 = vsub.s32 4, %v301
    %v303 = vrot.slane %v21, %v302
    %305 = vbcast.lane.b32.xlu0 %v303, 256
    %v306 = vpop.permute.xlu0 %305
    %s308 = sor.u32 256, 8
    %309 = vbcast.lane.b32.xlu0 %v303, %s308
    %v310 = vpop.permute.xlu0 %309
    %s312 = sor.u32 256, 16
    %313 = vbcast.lane.b32.xlu0 %v303, %s312
    %v314 = vpop.permute.xlu0 %313
    %s316 = sor.u32 256, 24
    %317 = vbcast.lane.b32.xlu0 %v303, %s316
    %v318 = vpop.permute.xlu0 %317
    %s320 = sor.u32 256, 32
    %321 = vbcast.lane.b32.xlu0 %v303, %s320
    %v322 = vpop.permute.xlu0 %321
    %s324 = sor.u32 256, 40
    %325 = vbcast.lane.b32.xlu0 %v303, %s324
    %v326 = vpop.permute.xlu0 %325
    %s328 = sor.u32 256, 48
    %329 = vbcast.lane.b32.xlu0 %v303, %s328
    %v330 = vpop.permute.xlu0 %329
    %s332 = sor.u32 256, 56
    %333 = vbcast.lane.b32.xlu0 %v303, %s332
    %v334 = vpop.permute.xlu0 %333
    %s336 = sor.u32 256, 64
    %337 = vbcast.lane.b32.xlu0 %v303, %s336
    %v338 = vpop.permute.xlu0 %337
    %s340 = sor.u32 256, 72
    %341 = vbcast.lane.b32.xlu0 %v303, %s340
    %v342 = vpop.permute.xlu0 %341
    %s344 = sor.u32 256, 80
    %345 = vbcast.lane.b32.xlu0 %v303, %s344
    %v346 = vpop.permute.xlu0 %345
    %s348 = sor.u32 256, 88
    %349 = vbcast.lane.b32.xlu0 %v303, %s348
    %v350 = vpop.permute.xlu0 %349
    %s352 = sor.u32 256, 96
    %353 = vbcast.lane.b32.xlu0 %v303, %s352
    %v354 = vpop.permute.xlu0 %353
    %s356 = sor.u32 256, 104
    %357 = vbcast.lane.b32.xlu0 %v303, %s356
    %v358 = vpop.permute.xlu0 %357
    %s360 = sor.u32 256, 112
    %361 = vbcast.lane.b32.xlu0 %v303, %s360
    %v362 = vpop.permute.xlu0 %361
    %s364 = sor.u32 256, 120
    %365 = vbcast.lane.b32.xlu0 %v303, %s364
    %v366 = vpop.permute.xlu0 %365
    %v367 = vlaneseq
    %v368 = vshrl.u32 %v367, 7
    %v369 = vsub.s32 5, %v368
    %v370 = vrot.slane %v21, %v369
    %372 = vbcast.lane.b32.xlu0 %v370, 256
    %v373 = vpop.permute.xlu0 %372
    %s375 = sor.u32 256, 8
    %376 = vbcast.lane.b32.xlu0 %v370, %s375
    %v377 = vpop.permute.xlu0 %376
    %s379 = sor.u32 256, 16
    %380 = vbcast.lane.b32.xlu0 %v370, %s379
    %v381 = vpop.permute.xlu0 %380
    %s383 = sor.u32 256, 24
    %384 = vbcast.lane.b32.xlu0 %v370, %s383
    %v385 = vpop.permute.xlu0 %384
    %s387 = sor.u32 256, 32
    %388 = vbcast.lane.b32.xlu0 %v370, %s387
    %v389 = vpop.permute.xlu0 %388
    %s391 = sor.u32 256, 40
    %392 = vbcast.lane.b32.xlu0 %v370, %s391
    %v393 = vpop.permute.xlu0 %392
    %s395 = sor.u32 256, 48
    %396 = vbcast.lane.b32.xlu0 %v370, %s395
    %v397 = vpop.permute.xlu0 %396
    %s399 = sor.u32 256, 56
    %400 = vbcast.lane.b32.xlu0 %v370, %s399
    %v401 = vpop.permute.xlu0 %400
    %s403 = sor.u32 256, 64
    %404 = vbcast.lane.b32.xlu0 %v370, %s403
    %v405 = vpop.permute.xlu0 %404
    %s407 = sor.u32 256, 72
    %408 = vbcast.lane.b32.xlu0 %v370, %s407
    %v409 = vpop.permute.xlu0 %408
    %s411 = sor.u32 256, 80
    %412 = vbcast.lane.b32.xlu0 %v370, %s411
    %v413 = vpop.permute.xlu0 %412
    %s415 = sor.u32 256, 88
    %416 = vbcast.lane.b32.xlu0 %v370, %s415
    %v417 = vpop.permute.xlu0 %416
    %s419 = sor.u32 256, 96
    %420 = vbcast.lane.b32.xlu0 %v370, %s419
    %v421 = vpop.permute.xlu0 %420
    %s423 = sor.u32 256, 104
    %424 = vbcast.lane.b32.xlu0 %v370, %s423
    %v425 = vpop.permute.xlu0 %424
    %s427 = sor.u32 256, 112
    %428 = vbcast.lane.b32.xlu0 %v370, %s427
    %v429 = vpop.permute.xlu0 %428
    %s431 = sor.u32 256, 120
    %432 = vbcast.lane.b32.xlu0 %v370, %s431
    %v433 = vpop.permute.xlu0 %432
    %v434 = vlaneseq
    %v435 = vshrl.u32 %v434, 7
    %v436 = vsub.s32 6, %v435
    %v437 = vrot.slane %v21, %v436
    %439 = vbcast.lane.b32.xlu0 %v437, 256
    %v440 = vpop.permute.xlu0 %439
    %s442 = sor.u32 256, 8
    %443 = vbcast.lane.b32.xlu0 %v437, %s442
    %v444 = vpop.permute.xlu0 %443
    %s446 = sor.u32 256, 16
    %447 = vbcast.lane.b32.xlu0 %v437, %s446
    %v448 = vpop.permute.xlu0 %447
    %s450 = sor.u32 256, 24
    %451 = vbcast.lane.b32.xlu0 %v437, %s450
    %v452 = vpop.permute.xlu0 %451
    %s454 = sor.u32 256, 32
    %455 = vbcast.lane.b32.xlu0 %v437, %s454
    %v456 = vpop.permute.xlu0 %455
    %s458 = sor.u32 256, 40
    %459 = vbcast.lane.b32.xlu0 %v437, %s458
    %v460 = vpop.permute.xlu0 %459
    %s462 = sor.u32 256, 48
    %463 = vbcast.lane.b32.xlu0 %v437, %s462
    %v464 = vpop.permute.xlu0 %463
    %s466 = sor.u32 256, 56
    %467 = vbcast.lane.b32.xlu0 %v437, %s466
    %v468 = vpop.permute.xlu0 %467
    %s470 = sor.u32 256, 64
    %471 = vbcast.lane.b32.xlu0 %v437, %s470
    %v472 = vpop.permute.xlu0 %471
    %s474 = sor.u32 256, 72
    %475 = vbcast.lane.b32.xlu0 %v437, %s474
    %v476 = vpop.permute.xlu0 %475
    %s478 = sor.u32 256, 80
    %479 = vbcast.lane.b32.xlu0 %v437, %s478
    %v480 = vpop.permute.xlu0 %479
    %s482 = sor.u32 256, 88
    %483 = vbcast.lane.b32.xlu0 %v437, %s482
    %v484 = vpop.permute.xlu0 %483
    %s486 = sor.u32 256, 96
    %487 = vbcast.lane.b32.xlu0 %v437, %s486
    %v488 = vpop.permute.xlu0 %487
    %s490 = sor.u32 256, 104
    %491 = vbcast.lane.b32.xlu0 %v437, %s490
    %v492 = vpop.permute.xlu0 %491
    %s494 = sor.u32 256, 112
    %495 = vbcast.lane.b32.xlu0 %v437, %s494
    %v496 = vpop.permute.xlu0 %495
    %s498 = sor.u32 256, 120
    %499 = vbcast.lane.b32.xlu0 %v437, %s498
    %v500 = vpop.permute.xlu0 %499
    %v501 = vlaneseq
    %v502 = vshrl.u32 %v501, 7
    %v503 = vsub.s32 7, %v502
    %v504 = vrot.slane %v21, %v503
    %506 = vbcast.lane.b32.xlu0 %v504, 256
    %v507 = vpop.permute.xlu0 %506
    %s509 = sor.u32 256, 8
    %510 = vbcast.lane.b32.xlu0 %v504, %s509
    %v511 = vpop.permute.xlu0 %510
    %s513 = sor.u32 256, 16
    %514 = vbcast.lane.b32.xlu0 %v504, %s513
    %v515 = vpop.permute.xlu0 %514
    %s517 = sor.u32 256, 24
    %518 = vbcast.lane.b32.xlu0 %v504, %s517
    %v519 = vpop.permute.xlu0 %518
    %s521 = sor.u32 256, 32
    %522 = vbcast.lane.b32.xlu0 %v504, %s521
    %v523 = vpop.permute.xlu0 %522
    %s525 = sor.u32 256, 40
    %526 = vbcast.lane.b32.xlu0 %v504, %s525
    %v527 = vpop.permute.xlu0 %526
    %s529 = sor.u32 256, 48
    %530 = vbcast.lane.b32.xlu0 %v504, %s529
    %v531 = vpop.permute.xlu0 %530
    %s533 = sor.u32 256, 56
    %534 = vbcast.lane.b32.xlu0 %v504, %s533
    %v535 = vpop.permute.xlu0 %534
    %s537 = sor.u32 256, 64
    %538 = vbcast.lane.b32.xlu0 %v504, %s537
    %v539 = vpop.permute.xlu0 %538
    %s541 = sor.u32 256, 72
    %542 = vbcast.lane.b32.xlu0 %v504, %s541
    %v543 = vpop.permute.xlu0 %542
    %s545 = sor.u32 256, 80
    %546 = vbcast.lane.b32.xlu0 %v504, %s545
    %v547 = vpop.permute.xlu0 %546
    %s549 = sor.u32 256, 88
    %550 = vbcast.lane.b32.xlu0 %v504, %s549
    %v551 = vpop.permute.xlu0 %550
    %s553 = sor.u32 256, 96
    %554 = vbcast.lane.b32.xlu0 %v504, %s553
    %v555 = vpop.permute.xlu0 %554
    %s557 = sor.u32 256, 104
    %558 = vbcast.lane.b32.xlu0 %v504, %s557
    %v559 = vpop.permute.xlu0 %558
    %s561 = sor.u32 256, 112
    %562 = vbcast.lane.b32.xlu0 %v504, %s561
    %v563 = vpop.permute.xlu0 %562
    %s565 = sor.u32 256, 120
    %566 = vbcast.lane.b32.xlu0 %v504, %s565
    %v567 = vpop.permute.xlu0 %566
    %v568 = vlaneseq
    %v569 = vshrl.u32 %v568, 7
    %v570 = vsub.s32 0, %v569
    %v571 = vrot.slane %v31, %v570
    %573 = vbcast.lane.b32.xlu0 %v571, 256
    %v574 = vpop.permute.xlu0 %573
    %s576 = sor.u32 256, 8
    %577 = vbcast.lane.b32.xlu0 %v571, %s576
    %v578 = vpop.permute.xlu0 %577
    %s580 = sor.u32 256, 16
    %581 = vbcast.lane.b32.xlu0 %v571, %s580
    %v582 = vpop.permute.xlu0 %581
    %s584 = sor.u32 256, 24
    %585 = vbcast.lane.b32.xlu0 %v571, %s584
    %v586 = vpop.permute.xlu0 %585
    %s588 = sor.u32 256, 32
    %589 = vbcast.lane.b32.xlu0 %v571, %s588
    %v590 = vpop.permute.xlu0 %589
    %s592 = sor.u32 256, 40
    %593 = vbcast.lane.b32.xlu0 %v571, %s592
    %v594 = vpop.permute.xlu0 %593
    %s596 = sor.u32 256, 48
    %597 = vbcast.lane.b32.xlu0 %v571, %s596
    %v598 = vpop.permute.xlu0 %597
    %s600 = sor.u32 256, 56
    %601 = vbcast.lane.b32.xlu0 %v571, %s600
    %v602 = vpop.permute.xlu0 %601
    %s604 = sor.u32 256, 64
    %605 = vbcast.lane.b32.xlu0 %v571, %s604
    %v606 = vpop.permute.xlu0 %605
    %s608 = sor.u32 256, 72
    %609 = vbcast.lane.b32.xlu0 %v571, %s608
    %v610 = vpop.permute.xlu0 %609
    %s612 = sor.u32 256, 80
    %613 = vbcast.lane.b32.xlu0 %v571, %s612
    %v614 = vpop.permute.xlu0 %613
    %s616 = sor.u32 256, 88
    %617 = vbcast.lane.b32.xlu0 %v571, %s616
    %v618 = vpop.permute.xlu0 %617
    %s620 = sor.u32 256, 96
    %621 = vbcast.lane.b32.xlu0 %v571, %s620
    %v622 = vpop.permute.xlu0 %621
    %s624 = sor.u32 256, 104
    %625 = vbcast.lane.b32.xlu0 %v571, %s624
    %v626 = vpop.permute.xlu0 %625
    %s628 = sor.u32 256, 112
    %629 = vbcast.lane.b32.xlu0 %v571, %s628
    %v630 = vpop.permute.xlu0 %629
    %s632 = sor.u32 256, 120
    %633 = vbcast.lane.b32.xlu0 %v571, %s632
    %v634 = vpop.permute.xlu0 %633
    %v635 = vlaneseq
    %v636 = vshrl.u32 %v635, 7
    %v637 = vsub.s32 1, %v636
    %v638 = vrot.slane %v31, %v637
    %640 = vbcast.lane.b32.xlu0 %v638, 256
    %v641 = vpop.permute.xlu0 %640
    %s643 = sor.u32 256, 8
    %644 = vbcast.lane.b32.xlu0 %v638, %s643
    %v645 = vpop.permute.xlu0 %644
    %s647 = sor.u32 256, 16
    %648 = vbcast.lane.b32.xlu0 %v638, %s647
    %v649 = vpop.permute.xlu0 %648
    %s651 = sor.u32 256, 24
    %652 = vbcast.lane.b32.xlu0 %v638, %s651
    %v653 = vpop.permute.xlu0 %652
    %s655 = sor.u32 256, 32
    %656 = vbcast.lane.b32.xlu0 %v638, %s655
    %v657 = vpop.permute.xlu0 %656
    %s659 = sor.u32 256, 40
    %660 = vbcast.lane.b32.xlu0 %v638, %s659
    %v661 = vpop.permute.xlu0 %660
    %s663 = sor.u32 256, 48
    %664 = vbcast.lane.b32.xlu0 %v638, %s663
    %v665 = vpop.permute.xlu0 %664
    %s667 = sor.u32 256, 56
    %668 = vbcast.lane.b32.xlu0 %v638, %s667
    %v669 = vpop.permute.xlu0 %668
    %s671 = sor.u32 256, 64
    %672 = vbcast.lane.b32.xlu0 %v638, %s671
    %v673 = vpop.permute.xlu0 %672
    %s675 = sor.u32 256, 72
    %676 = vbcast.lane.b32.xlu0 %v638, %s675
    %v677 = vpop.permute.xlu0 %676
    %s679 = sor.u32 256, 80
    %680 = vbcast.lane.b32.xlu0 %v638, %s679
    %v681 = vpop.permute.xlu0 %680
    %s683 = sor.u32 256, 88
    %684 = vbcast.lane.b32.xlu0 %v638, %s683
    %v685 = vpop.permute.xlu0 %684
    %s687 = sor.u32 256, 96
    %688 = vbcast.lane.b32.xlu0 %v638, %s687
    %v689 = vpop.permute.xlu0 %688
    %s691 = sor.u32 256, 104
    %692 = vbcast.lane.b32.xlu0 %v638, %s691
    %v693 = vpop.permute.xlu0 %692
    %s695 = sor.u32 256, 112
    %696 = vbcast.lane.b32.xlu0 %v638, %s695
    %v697 = vpop.permute.xlu0 %696
    %s699 = sor.u32 256, 120
    %700 = vbcast.lane.b32.xlu0 %v638, %s699
    %v701 = vpop.permute.xlu0 %700
    %v702 = vlaneseq
    %v703 = vshrl.u32 %v702, 7
    %v704 = vsub.s32 2, %v703
    %v705 = vrot.slane %v31, %v704
    %707 = vbcast.lane.b32.xlu0 %v705, 256
    %v708 = vpop.permute.xlu0 %707
    %s710 = sor.u32 256, 8
    %711 = vbcast.lane.b32.xlu0 %v705, %s710
    %v712 = vpop.permute.xlu0 %711
    %s714 = sor.u32 256, 16
    %715 = vbcast.lane.b32.xlu0 %v705, %s714
    %v716 = vpop.permute.xlu0 %715
    %s718 = sor.u32 256, 24
    %719 = vbcast.lane.b32.xlu0 %v705, %s718
    %v720 = vpop.permute.xlu0 %719
    %s722 = sor.u32 256, 32
    %723 = vbcast.lane.b32.xlu0 %v705, %s722
    %v724 = vpop.permute.xlu0 %723
    %s726 = sor.u32 256, 40
    %727 = vbcast.lane.b32.xlu0 %v705, %s726
    %v728 = vpop.permute.xlu0 %727
    %s730 = sor.u32 256, 48
    %731 = vbcast.lane.b32.xlu0 %v705, %s730
    %v732 = vpop.permute.xlu0 %731
    %s734 = sor.u32 256, 56
    %735 = vbcast.lane.b32.xlu0 %v705, %s734
    %v736 = vpop.permute.xlu0 %735
    %s738 = sor.u32 256, 64
    %739 = vbcast.lane.b32.xlu0 %v705, %s738
    %v740 = vpop.permute.xlu0 %739
    %s742 = sor.u32 256, 72
    %743 = vbcast.lane.b32.xlu0 %v705, %s742
    %v744 = vpop.permute.xlu0 %743
    %s746 = sor.u32 256, 80
    %747 = vbcast.lane.b32.xlu0 %v705, %s746
    %v748 = vpop.permute.xlu0 %747
    %s750 = sor.u32 256, 88
    %751 = vbcast.lane.b32.xlu0 %v705, %s750
    %v752 = vpop.permute.xlu0 %751
    %s754 = sor.u32 256, 96
    %755 = vbcast.lane.b32.xlu0 %v705, %s754
    %v756 = vpop.permute.xlu0 %755
    %s758 = sor.u32 256, 104
    %759 = vbcast.lane.b32.xlu0 %v705, %s758
    %v760 = vpop.permute.xlu0 %759
    %s762 = sor.u32 256, 112
    %763 = vbcast.lane.b32.xlu0 %v705, %s762
    %v764 = vpop.permute.xlu0 %763
    %s766 = sor.u32 256, 120
    %767 = vbcast.lane.b32.xlu0 %v705, %s766
    %v768 = vpop.permute.xlu0 %767
    %v769 = vlaneseq
    %v770 = vshrl.u32 %v769, 7
    %v771 = vsub.s32 3, %v770
    %v772 = vrot.slane %v31, %v771
    %774 = vbcast.lane.b32.xlu0 %v772, 256
    %v775 = vpop.permute.xlu0 %774
    %s777 = sor.u32 256, 8
    %778 = vbcast.lane.b32.xlu0 %v772, %s777
    %v779 = vpop.permute.xlu0 %778
    %s781 = sor.u32 256, 16
    %782 = vbcast.lane.b32.xlu0 %v772, %s781
    %v783 = vpop.permute.xlu0 %782
    %s785 = sor.u32 256, 24
    %786 = vbcast.lane.b32.xlu0 %v772, %s785
    %v787 = vpop.permute.xlu0 %786
    %s789 = sor.u32 256, 32
    %790 = vbcast.lane.b32.xlu0 %v772, %s789
    %v791 = vpop.permute.xlu0 %790
    %s793 = sor.u32 256, 40
    %794 = vbcast.lane.b32.xlu0 %v772, %s793
    %v795 = vpop.permute.xlu0 %794
    %s797 = sor.u32 256, 48
    %798 = vbcast.lane.b32.xlu0 %v772, %s797
    %v799 = vpop.permute.xlu0 %798
    %s801 = sor.u32 256, 56
    %802 = vbcast.lane.b32.xlu0 %v772, %s801
    %v803 = vpop.permute.xlu0 %802
    %s805 = sor.u32 256, 64
    %806 = vbcast.lane.b32.xlu0 %v772, %s805
    %v807 = vpop.permute.xlu0 %806
    %s809 = sor.u32 256, 72
    %810 = vbcast.lane.b32.xlu0 %v772, %s809
    %v811 = vpop.permute.xlu0 %810
    %s813 = sor.u32 256, 80
    %814 = vbcast.lane.b32.xlu0 %v772, %s813
    %v815 = vpop.permute.xlu0 %814
    %s817 = sor.u32 256, 88
    %818 = vbcast.lane.b32.xlu0 %v772, %s817
    %v819 = vpop.permute.xlu0 %818
    %s821 = sor.u32 256, 96
    %822 = vbcast.lane.b32.xlu0 %v772, %s821
    %v823 = vpop.permute.xlu0 %822
    %s825 = sor.u32 256, 104
    %826 = vbcast.lane.b32.xlu0 %v772, %s825
    %v827 = vpop.permute.xlu0 %826
    %s829 = sor.u32 256, 112
    %830 = vbcast.lane.b32.xlu0 %v772, %s829
    %v831 = vpop.permute.xlu0 %830
    %s833 = sor.u32 256, 120
    %834 = vbcast.lane.b32.xlu0 %v772, %s833
    %v835 = vpop.permute.xlu0 %834
    %v836 = vlaneseq
    %v837 = vshrl.u32 %v836, 7
    %v838 = vsub.s32 4, %v837
    %v839 = vrot.slane %v31, %v838
    %841 = vbcast.lane.b32.xlu0 %v839, 256
    %v842 = vpop.permute.xlu0 %841
    %s844 = sor.u32 256, 8
    %845 = vbcast.lane.b32.xlu0 %v839, %s844
    %v846 = vpop.permute.xlu0 %845
    %s848 = sor.u32 256, 16
    %849 = vbcast.lane.b32.xlu0 %v839, %s848
    %v850 = vpop.permute.xlu0 %849
    %s852 = sor.u32 256, 24
    %853 = vbcast.lane.b32.xlu0 %v839, %s852
    %v854 = vpop.permute.xlu0 %853
    %s856 = sor.u32 256, 32
    %857 = vbcast.lane.b32.xlu0 %v839, %s856
    %v858 = vpop.permute.xlu0 %857
    %s860 = sor.u32 256, 40
    %861 = vbcast.lane.b32.xlu0 %v839, %s860
    %v862 = vpop.permute.xlu0 %861
    %s864 = sor.u32 256, 48
    %865 = vbcast.lane.b32.xlu0 %v839, %s864
    %v866 = vpop.permute.xlu0 %865
    %s868 = sor.u32 256, 56
    %869 = vbcast.lane.b32.xlu0 %v839, %s868
    %v870 = vpop.permute.xlu0 %869
    %s872 = sor.u32 256, 64
    %873 = vbcast.lane.b32.xlu0 %v839, %s872
    %v874 = vpop.permute.xlu0 %873
    %s876 = sor.u32 256, 72
    %877 = vbcast.lane.b32.xlu0 %v839, %s876
    %v878 = vpop.permute.xlu0 %877
    %s880 = sor.u32 256, 80
    %881 = vbcast.lane.b32.xlu0 %v839, %s880
    %v882 = vpop.permute.xlu0 %881
    %s884 = sor.u32 256, 88
    %885 = vbcast.lane.b32.xlu0 %v839, %s884
    %v886 = vpop.permute.xlu0 %885
    %s888 = sor.u32 256, 96
    %889 = vbcast.lane.b32.xlu0 %v839, %s888
    %v890 = vpop.permute.xlu0 %889
    %s892 = sor.u32 256, 104
    %893 = vbcast.lane.b32.xlu0 %v839, %s892
    %v894 = vpop.permute.xlu0 %893
    %s896 = sor.u32 256, 112
    %897 = vbcast.lane.b32.xlu0 %v839, %s896
    %v898 = vpop.permute.xlu0 %897
    %s900 = sor.u32 256, 120
    %901 = vbcast.lane.b32.xlu0 %v839, %s900
    %v902 = vpop.permute.xlu0 %901
    %v903 = vlaneseq
    %v904 = vshrl.u32 %v903, 7
    %v905 = vsub.s32 5, %v904
    %v906 = vrot.slane %v31, %v905
    %908 = vbcast.lane.b32.xlu0 %v906, 256
    %v909 = vpop.permute.xlu0 %908
    %s911 = sor.u32 256, 8
    %912 = vbcast.lane.b32.xlu0 %v906, %s911
    %v913 = vpop.permute.xlu0 %912
    %s915 = sor.u32 256, 16
    %916 = vbcast.lane.b32.xlu0 %v906, %s915
    %v917 = vpop.permute.xlu0 %916
    %s919 = sor.u32 256, 24
    %920 = vbcast.lane.b32.xlu0 %v906, %s919
    %v921 = vpop.permute.xlu0 %920
    %s923 = sor.u32 256, 32
    %924 = vbcast.lane.b32.xlu0 %v906, %s923
    %v925 = vpop.permute.xlu0 %924
    %s927 = sor.u32 256, 40
    %928 = vbcast.lane.b32.xlu0 %v906, %s927
    %v929 = vpop.permute.xlu0 %928
    %s931 = sor.u32 256, 48
    %932 = vbcast.lane.b32.xlu0 %v906, %s931
    %v933 = vpop.permute.xlu0 %932
    %s935 = sor.u32 256, 56
    %936 = vbcast.lane.b32.xlu0 %v906, %s935
    %v937 = vpop.permute.xlu0 %936
    %s939 = sor.u32 256, 64
    %940 = vbcast.lane.b32.xlu0 %v906, %s939
    %v941 = vpop.permute.xlu0 %940
    %s943 = sor.u32 256, 72
    %944 = vbcast.lane.b32.xlu0 %v906, %s943
    %v945 = vpop.permute.xlu0 %944
    %s947 = sor.u32 256, 80
    %948 = vbcast.lane.b32.xlu0 %v906, %s947
    %v949 = vpop.permute.xlu0 %948
    %s951 = sor.u32 256, 88
    %952 = vbcast.lane.b32.xlu0 %v906, %s951
    %v953 = vpop.permute.xlu0 %952
    %s955 = sor.u32 256, 96
    %956 = vbcast.lane.b32.xlu0 %v906, %s955
    %v957 = vpop.permute.xlu0 %956
    %s959 = sor.u32 256, 104
    %960 = vbcast.lane.b32.xlu0 %v906, %s959
    %v961 = vpop.permute.xlu0 %960
    %s963 = sor.u32 256, 112
    %964 = vbcast.lane.b32.xlu0 %v906, %s963
    %v965 = vpop.permute.xlu0 %964
    %s967 = sor.u32 256, 120
    %968 = vbcast.lane.b32.xlu0 %v906, %s967
    %v969 = vpop.permute.xlu0 %968
    %v970 = vlaneseq
    %v971 = vshrl.u32 %v970, 7
    %v972 = vsub.s32 6, %v971
    %v973 = vrot.slane %v31, %v972
    %975 = vbcast.lane.b32.xlu0 %v973, 256
    %v976 = vpop.permute.xlu0 %975
    %s978 = sor.u32 256, 8
    %979 = vbcast.lane.b32.xlu0 %v973, %s978
    %v980 = vpop.permute.xlu0 %979
    %s982 = sor.u32 256, 16
    %983 = vbcast.lane.b32.xlu0 %v973, %s982
    %v984 = vpop.permute.xlu0 %983
    %s986 = sor.u32 256, 24
    %987 = vbcast.lane.b32.xlu0 %v973, %s986
    %v988 = vpop.permute.xlu0 %987
    %s990 = sor.u32 256, 32
    %991 = vbcast.lane.b32.xlu0 %v973, %s990
    %v992 = vpop.permute.xlu0 %991
    %s994 = sor.u32 256, 40
    %995 = vbcast.lane.b32.xlu0 %v973, %s994
    %v996 = vpop.permute.xlu0 %995
    %s998 = sor.u32 256, 48
    %999 = vbcast.lane.b32.xlu0 %v973, %s998
    %v1000 = vpop.permute.xlu0 %999
    %s1002 = sor.u32 256, 56
    %1003 = vbcast.lane.b32.xlu0 %v973, %s1002
    %v1004 = vpop.permute.xlu0 %1003
    %s1006 = sor.u32 256, 64
    %1007 = vbcast.lane.b32.xlu0 %v973, %s1006
    %v1008 = vpop.permute.xlu0 %1007
    %s1010 = sor.u32 256, 72
    %1011 = vbcast.lane.b32.xlu0 %v973, %s1010
    %v1012 = vpop.permute.xlu0 %1011
    %s1014 = sor.u32 256, 80
    %1015 = vbcast.lane.b32.xlu0 %v973, %s1014
    %v1016 = vpop.permute.xlu0 %1015
    %s1018 = sor.u32 256, 88
    %1019 = vbcast.lane.b32.xlu0 %v973, %s1018
    %v1020 = vpop.permute.xlu0 %1019
    %s1022 = sor.u32 256, 96
    %1023 = vbcast.lane.b32.xlu0 %v973, %s1022
    %v1024 = vpop.permute.xlu0 %1023
    %s1026 = sor.u32 256, 104
    %1027 = vbcast.lane.b32.xlu0 %v973, %s1026
    %v1028 = vpop.permute.xlu0 %1027
    %s1030 = sor.u32 256, 112
    %1031 = vbcast.lane.b32.xlu0 %v973, %s1030
    %v1032 = vpop.permute.xlu0 %1031
    %s1034 = sor.u32 256, 120
    %1035 = vbcast.lane.b32.xlu0 %v973, %s1034
    %v1036 = vpop.permute.xlu0 %1035
    %v1037 = vlaneseq
    %v1038 = vshrl.u32 %v1037, 7
    %v1039 = vsub.s32 7, %v1038
    %v1040 = vrot.slane %v31, %v1039
    %1042 = vbcast.lane.b32.xlu0 %v1040, 256
    %v1043 = vpop.permute.xlu0 %1042
    %s1045 = sor.u32 256, 8
    %1046 = vbcast.lane.b32.xlu0 %v1040, %s1045
    %v1047 = vpop.permute.xlu0 %1046
    %s1049 = sor.u32 256, 16
    %1050 = vbcast.lane.b32.xlu0 %v1040, %s1049
    %v1051 = vpop.permute.xlu0 %1050
    %s1053 = sor.u32 256, 24
    %1054 = vbcast.lane.b32.xlu0 %v1040, %s1053
    %v1055 = vpop.permute.xlu0 %1054
    %s1057 = sor.u32 256, 32
    %1058 = vbcast.lane.b32.xlu0 %v1040, %s1057
    %v1059 = vpop.permute.xlu0 %1058
    %s1061 = sor.u32 256, 40
    %1062 = vbcast.lane.b32.xlu0 %v1040, %s1061
    %v1063 = vpop.permute.xlu0 %1062
    %s1065 = sor.u32 256, 48
    %1066 = vbcast.lane.b32.xlu0 %v1040, %s1065
    %v1067 = vpop.permute.xlu0 %1066
    %s1069 = sor.u32 256, 56
    %1070 = vbcast.lane.b32.xlu0 %v1040, %s1069
    %v1071 = vpop.permute.xlu0 %1070
    %s1073 = sor.u32 256, 64
    %1074 = vbcast.lane.b32.xlu0 %v1040, %s1073
    %v1075 = vpop.permute.xlu0 %1074
    %s1077 = sor.u32 256, 72
    %1078 = vbcast.lane.b32.xlu0 %v1040, %s1077
    %v1079 = vpop.permute.xlu0 %1078
    %s1081 = sor.u32 256, 80
    %1082 = vbcast.lane.b32.xlu0 %v1040, %s1081
    %v1083 = vpop.permute.xlu0 %1082
    %s1085 = sor.u32 256, 88
    %1086 = vbcast.lane.b32.xlu0 %v1040, %s1085
    %v1087 = vpop.permute.xlu0 %1086
    %s1089 = sor.u32 256, 96
    %1090 = vbcast.lane.b32.xlu0 %v1040, %s1089
    %v1091 = vpop.permute.xlu0 %1090
    %s1093 = sor.u32 256, 104
    %1094 = vbcast.lane.b32.xlu0 %v1040, %s1093
    %v1095 = vpop.permute.xlu0 %1094
    %s1097 = sor.u32 256, 112
    %1098 = vbcast.lane.b32.xlu0 %v1040, %s1097
    %v1099 = vpop.permute.xlu0 %1098
    %s1101 = sor.u32 256, 120
    %1102 = vbcast.lane.b32.xlu0 %v1040, %s1101
    %v1103 = vpop.permute.xlu0 %1102
    %vm1104 = vcmask 7168
    %v1105 = vsel %vm1104, %v38, %v574
    %v1106 = vsel %vm1104, %v42, %v578
    %v1107 = vsel %vm1104, %v46, %v582
    %v1108 = vsel %vm1104, %v50, %v586
    %v1109 = vsel %vm1104, %v54, %v590
    %v1110 = vsel %vm1104, %v58, %v594
    %v1111 = vsel %vm1104, %v62, %v598
    %v1112 = vsel %vm1104, %v66, %v602
    %v1113 = vsel %vm1104, %v70, %v606
    %v1114 = vsel %vm1104, %v74, %v610
    %v1115 = vsel %vm1104, %v78, %v614
    %v1116 = vsel %vm1104, %v82, %v618
    %v1117 = vsel %vm1104, %v86, %v622
    %v1118 = vsel %vm1104, %v90, %v626
    %v1119 = vsel %vm1104, %v94, %v630
    %v1120 = vsel %vm1104, %v98, %v634
    %v1121 = vsel %vm1104, %v105, %v641
    %v1122 = vsel %vm1104, %v109, %v645
    %v1123 = vsel %vm1104, %v113, %v649
    %v1124 = vsel %vm1104, %v117, %v653
    %v1125 = vsel %vm1104, %v121, %v657
    %v1126 = vsel %vm1104, %v125, %v661
    %v1127 = vsel %vm1104, %v129, %v665
    %v1128 = vsel %vm1104, %v133, %v669
    %v1129 = vsel %vm1104, %v137, %v673
    %v1130 = vsel %vm1104, %v141, %v677
    %v1131 = vsel %vm1104, %v145, %v681
    %v1132 = vsel %vm1104, %v149, %v685
    %v1133 = vsel %vm1104, %v153, %v689
    %v1134 = vsel %vm1104, %v157, %v693
    %v1135 = vsel %vm1104, %v161, %v697
    %v1136 = vsel %vm1104, %v165, %v701
    %v1137 = vsel %vm1104, %v172, %v708
    %v1138 = vsel %vm1104, %v176, %v712
    %v1139 = vsel %vm1104, %v180, %v716
    %v1140 = vsel %vm1104, %v184, %v720
    %v1141 = vsel %vm1104, %v188, %v724
    %v1142 = vsel %vm1104, %v192, %v728
    %v1143 = vsel %vm1104, %v196, %v732
    %v1144 = vsel %vm1104, %v200, %v736
    %v1145 = vsel %vm1104, %v204, %v740
    %v1146 = vsel %vm1104, %v208, %v744
    %v1147 = vsel %vm1104, %v212, %v748
    %v1148 = vsel %vm1104, %v216, %v752
    %v1149 = vsel %vm1104, %v220, %v756
    %v1150 = vsel %vm1104, %v224, %v760
    %v1151 = vsel %vm1104, %v228, %v764
    %v1152 = vsel %vm1104, %v232, %v768
    %v1153 = vsel %vm1104, %v239, %v775
    %v1154 = vsel %vm1104, %v243, %v779
    %v1155 = vsel %vm1104, %v247, %v783
    %v1156 = vsel %vm1104, %v251, %v787
    %v1157 = vsel %vm1104, %v255, %v791
    %v1158 = vsel %vm1104, %v259, %v795
    %v1159 = vsel %vm1104, %v263, %v799
    %v1160 = vsel %vm1104, %v267, %v803
    %v1161 = vsel %vm1104, %v271, %v807
    %v1162 = vsel %vm1104, %v275, %v811
    %v1163 = vsel %vm1104, %v279, %v815
    %v1164 = vsel %vm1104, %v283, %v819
    %v1165 = vsel %vm1104, %v287, %v823
    %v1166 = vsel %vm1104, %v291, %v827
    %v1167 = vsel %vm1104, %v295, %v831
    %v1168 = vsel %vm1104, %v299, %v835
    %v1169 = vsel %vm1104, %v306, %v842
    %v1170 = vsel %vm1104, %v310, %v846
    %v1171 = vsel %vm1104, %v314, %v850
    %v1172 = vsel %vm1104, %v318, %v854
    %v1173 = vsel %vm1104, %v322, %v858
    %v1174 = vsel %vm1104, %v326, %v862
    %v1175 = vsel %vm1104, %v330, %v866
    %v1176 = vsel %vm1104, %v334, %v870
    %v1177 = vsel %vm1104, %v338, %v874
    %v1178 = vsel %vm1104, %v342, %v878
    %v1179 = vsel %vm1104, %v346, %v882
    %v1180 = vsel %vm1104, %v350, %v886
    %v1181 = vsel %vm1104, %v354, %v890
    %v1182 = vsel %vm1104, %v358, %v894
    %v1183 = vsel %vm1104, %v362, %v898
    %v1184 = vsel %vm1104, %v366, %v902
    %v1185 = vsel %vm1104, %v373, %v909
    %v1186 = vsel %vm1104, %v377, %v913
    %v1187 = vsel %vm1104, %v381, %v917
    %v1188 = vsel %vm1104, %v385, %v921
    %v1189 = vsel %vm1104, %v389, %v925
    %v1190 = vsel %vm1104, %v393, %v929
    %v1191 = vsel %vm1104, %v397, %v933
    %v1192 = vsel %vm1104, %v401, %v937
    %v1193 = vsel %vm1104, %v405, %v941
    %v1194 = vsel %vm1104, %v409, %v945
    %v1195 = vsel %vm1104, %v413, %v949
    %v1196 = vsel %vm1104, %v417, %v953
    %v1197 = vsel %vm1104, %v421, %v957
    %v1198 = vsel %vm1104, %v425, %v961
    %v1199 = vsel %vm1104, %v429, %v965
    %v1200 = vsel %vm1104, %v433, %v969
    %v1201 = vsel %vm1104, %v440, %v976
    %v1202 = vsel %vm1104, %v444, %v980
    %v1203 = vsel %vm1104, %v448, %v984
    %v1204 = vsel %vm1104, %v452, %v988
    %v1205 = vsel %vm1104, %v456, %v992
    %v1206 = vsel %vm1104, %v460, %v996
    %v1207 = vsel %vm1104, %v464, %v1000
    %v1208 = vsel %vm1104, %v468, %v1004
    %v1209 = vsel %vm1104, %v472, %v1008
    %v1210 = vsel %vm1104, %v476, %v1012
    %v1211 = vsel %vm1104, %v480, %v1016
    %v1212 = vsel %vm1104, %v484, %v1020
    %v1213 = vsel %vm1104, %v488, %v1024
    %v1214 = vsel %vm1104, %v492, %v1028
    %v1215 = vsel %vm1104, %v496, %v1032
    %v1216 = vsel %vm1104, %v500, %v1036
    %v1217 = vsel %vm1104, %v507, %v1043
    %v1218 = vsel %vm1104, %v511, %v1047
    %v1219 = vsel %vm1104, %v515, %v1051
    %v1220 = vsel %vm1104, %v519, %v1055
    %v1221 = vsel %vm1104, %v523, %v1059
    %v1222 = vsel %vm1104, %v527, %v1063
    %v1223 = vsel %vm1104, %v531, %v1067
    %v1224 = vsel %vm1104, %v535, %v1071
    %v1225 = vsel %vm1104, %v539, %v1075
    %v1226 = vsel %vm1104, %v543, %v1079
    %v1227 = vsel %vm1104, %v547, %v1083
    %v1228 = vsel %vm1104, %v551, %v1087
    %v1229 = vsel %vm1104, %v555, %v1091
    %v1230 = vsel %vm1104, %v559, %v1095
    %v1231 = vsel %vm1104, %v563, %v1099
    %v1232 = vsel %vm1104, %v567, %v1103
    %v1233 = vcombine.low %v1105, %v1137
    %v1234 = vcombine.high %v1105, %v1137
    %v1236 = vunpack.c.l.s4 1983009808
    %v1237 = vunpack.c.0.s8 %v1236
    %v1238 = vlaneseq
    %v1239 = vshrl.u32 %v1238, 7
    %v1240 = vsub.s32 %v1237, %v1239
    %v1241 = vrot.slane %v1233, %v1240
    %v1243 = vunpack.c.l.s4 1983009808
    %v1244 = vunpack.c.0.s8 %v1243
    %v1245 = vlaneseq
    %v1246 = vshrl.u32 %v1245, 7
    %v1247 = vsub.s32 %v1244, %v1246
    %v1248 = vrot.slane %v1234, %v1247
    %v1249 = vcombine.low %v1121, %v1153
    %v1250 = vcombine.high %v1121, %v1153
    %v1252 = vunpack.c.l.s4 1983009808
    %v1253 = vunpack.c.0.s8 %v1252
    %v1254 = vlaneseq
    %v1255 = vshrl.u32 %v1254, 7
    %v1256 = vsub.s32 %v1253, %v1255
    %v1257 = vrot.slane %v1249, %v1256
    %v1259 = vunpack.c.l.s4 1983009808
    %v1260 = vunpack.c.0.s8 %v1259
    %v1261 = vlaneseq
    %v1262 = vshrl.u32 %v1261, 7
    %v1263 = vsub.s32 %v1260, %v1262
    %v1264 = vrot.slane %v1250, %v1263
    %v1265 = vcombine.low %v1169, %v1201
    %v1266 = vcombine.high %v1169, %v1201
    %v1268 = vunpack.c.l.s4 1983009808
    %v1269 = vunpack.c.0.s8 %v1268
    %v1270 = vlaneseq
    %v1271 = vshrl.u32 %v1270, 7
    %v1272 = vsub.s32 %v1269, %v1271
    %v1273 = vrot.slane %v1265, %v1272
    %v1275 = vunpack.c.l.s4 1983009808
    %v1276 = vunpack.c.0.s8 %v1275
    %v1277 = vlaneseq
    %v1278 = vshrl.u32 %v1277, 7
    %v1279 = vsub.s32 %v1276, %v1278
    %v1280 = vrot.slane %v1266, %v1279
    %v1281 = vcombine.low %v1185, %v1217
    %v1282 = vcombine.high %v1185, %v1217
    %v1284 = vunpack.c.l.s4 1983009808
    %v1285 = vunpack.c.0.s8 %v1284
    %v1286 = vlaneseq
    %v1287 = vshrl.u32 %v1286, 7
    %v1288 = vsub.s32 %v1285, %v1287
    %v1289 = vrot.slane %v1281, %v1288
    %v1291 = vunpack.c.l.s4 1983009808
    %v1292 = vunpack.c.0.s8 %v1291
    %v1293 = vlaneseq
    %v1294 = vshrl.u32 %v1293, 7
    %v1295 = vsub.s32 %v1292, %v1294
    %v1296 = vrot.slane %v1282, %v1295
    %v1297 = vcombine.low %v1241, %v1257
    %v1298 = vcombine.high %v1241, %v1257
    %v1300 = vunpack.c.l.s4 1934713408
    %v1301 = vunpack.c.0.s8 %v1300
    %v1302 = vlaneseq
    %v1303 = vshrl.u32 %v1302, 7
    %v1304 = vsub.s32 %v1301, %v1303
    %v1305 = vrot.slane %v1297, %v1304
    %v1307 = vunpack.c.l.s4 1934713408
    %v1308 = vunpack.c.0.s8 %v1307
    %v1309 = vlaneseq
    %v1310 = vshrl.u32 %v1309, 7
    %v1311 = vsub.s32 %v1308, %v1310
    %v1312 = vrot.slane %v1298, %v1311
    %v1313 = vcombine.low %v1248, %v1264
    %v1314 = vcombine.high %v1248, %v1264
    %v1316 = vunpack.c.l.s4 1934713408
    %v1317 = vunpack.c.0.s8 %v1316
    %v1318 = vlaneseq
    %v1319 = vshrl.u32 %v1318, 7
    %v1320 = vsub.s32 %v1317, %v1319
    %v1321 = vrot.slane %v1313, %v1320
    %v1323 = vunpack.c.l.s4 1934713408
    %v1324 = vunpack.c.0.s8 %v1323
    %v1325 = vlaneseq
    %v1326 = vshrl.u32 %v1325, 7
    %v1327 = vsub.s32 %v1324, %v1326
    %v1328 = vrot.slane %v1314, %v1327
    %v1329 = vcombine.low %v1273, %v1289
    %v1330 = vcombine.high %v1273, %v1289
    %v1332 = vunpack.c.l.s4 1934713408
    %v1333 = vunpack.c.0.s8 %v1332
    %v1334 = vlaneseq
    %v1335 = vshrl.u32 %v1334, 7
    %v1336 = vsub.s32 %v1333, %v1335
    %v1337 = vrot.slane %v1329, %v1336
    %v1339 = vunpack.c.l.s4 1934713408
    %v1340 = vunpack.c.0.s8 %v1339
    %v1341 = vlaneseq
    %v1342 = vshrl.u32 %v1341, 7
    %v1343 = vsub.s32 %v1340, %v1342
    %v1344 = vrot.slane %v1330, %v1343
    %v1345 = vcombine.low %v1280, %v1296
    %v1346 = vcombine.high %v1280, %v1296
    %v1348 = vunpack.c.l.s4 1934713408
    %v1349 = vunpack.c.0.s8 %v1348
    %v1350 = vlaneseq
    %v1351 = vshrl.u32 %v1350, 7
    %v1352 = vsub.s32 %v1349, %v1351
    %v1353 = vrot.slane %v1345, %v1352
    %v1355 = vunpack.c.l.s4 1934713408
    %v1356 = vunpack.c.0.s8 %v1355
    %v1357 = vlaneseq
    %v1358 = vshrl.u32 %v1357, 7
    %v1359 = vsub.s32 %v1356, %v1358
    %v1360 = vrot.slane %v1346, %v1359
    %v1361 = vcombine.low %v1305, %v1337
    %v1362 = vcombine.high %v1305, %v1337
    %v1363 = vcombine.low %v1312, %v1344
    %v1364 = vcombine.high %v1312, %v1344
    %v1365 = vcombine.low %v1321, %v1353
    %v1366 = vcombine.high %v1321, %v1353
    %v1367 = vcombine.low %v1328, %v1360
    %v1368 = vcombine.high %v1328, %v1360
    %v1369 = vcombine.low %v1106, %v1138
    %v1370 = vcombine.high %v1106, %v1138
    %v1372 = vunpack.c.l.s4 1983009808
    %v1373 = vunpack.c.0.s8 %v1372
    %v1374 = vlaneseq
    %v1375 = vshrl.u32 %v1374, 7
    %v1376 = vsub.s32 %v1373, %v1375
    %v1377 = vrot.slane %v1369, %v1376
    %v1379 = vunpack.c.l.s4 1983009808
    %v1380 = vunpack.c.0.s8 %v1379
    %v1381 = vlaneseq
    %v1382 = vshrl.u32 %v1381, 7
    %v1383 = vsub.s32 %v1380, %v1382
    %v1384 = vrot.slane %v1370, %v1383
    %v1385 = vcombine.low %v1122, %v1154
    %v1386 = vcombine.high %v1122, %v1154
    %v1388 = vunpack.c.l.s4 1983009808
    %v1389 = vunpack.c.0.s8 %v1388
    %v1390 = vlaneseq
    %v1391 = vshrl.u32 %v1390, 7
    %v1392 = vsub.s32 %v1389, %v1391
    %v1393 = vrot.slane %v1385, %v1392
    %v1395 = vunpack.c.l.s4 1983009808
    %v1396 = vunpack.c.0.s8 %v1395
    %v1397 = vlaneseq
    %v1398 = vshrl.u32 %v1397, 7
    %v1399 = vsub.s32 %v1396, %v1398
    %v1400 = vrot.slane %v1386, %v1399
    %v1401 = vcombine.low %v1170, %v1202
    %v1402 = vcombine.high %v1170, %v1202
    %v1404 = vunpack.c.l.s4 1983009808
    %v1405 = vunpack.c.0.s8 %v1404
    %v1406 = vlaneseq
    %v1407 = vshrl.u32 %v1406, 7
    %v1408 = vsub.s32 %v1405, %v1407
    %v1409 = vrot.slane %v1401, %v1408
    %v1411 = vunpack.c.l.s4 1983009808
    %v1412 = vunpack.c.0.s8 %v1411
    %v1413 = vlaneseq
    %v1414 = vshrl.u32 %v1413, 7
    %v1415 = vsub.s32 %v1412, %v1414
    %v1416 = vrot.slane %v1402, %v1415
    %v1417 = vcombine.low %v1186, %v1218
    %v1418 = vcombine.high %v1186, %v1218
    %v1420 = vunpack.c.l.s4 1983009808
    %v1421 = vunpack.c.0.s8 %v1420
    %v1422 = vlaneseq
    %v1423 = vshrl.u32 %v1422, 7
    %v1424 = vsub.s32 %v1421, %v1423
    %v1425 = vrot.slane %v1417, %v1424
    %v1427 = vunpack.c.l.s4 1983009808
    %v1428 = vunpack.c.0.s8 %v1427
    %v1429 = vlaneseq
    %v1430 = vshrl.u32 %v1429, 7
    %v1431 = vsub.s32 %v1428, %v1430
    %v1432 = vrot.slane %v1418, %v1431
    %v1433 = vcombine.low %v1377, %v1393
    %v1434 = vcombine.high %v1377, %v1393
    %v1436 = vunpack.c.l.s4 1934713408
    %v1437 = vunpack.c.0.s8 %v1436
    %v1438 = vlaneseq
    %v1439 = vshrl.u32 %v1438, 7
    %v1440 = vsub.s32 %v1437, %v1439
    %v1441 = vrot.slane %v1433, %v1440
    %v1443 = vunpack.c.l.s4 1934713408
    %v1444 = vunpack.c.0.s8 %v1443
    %v1445 = vlaneseq
    %v1446 = vshrl.u32 %v1445, 7
    %v1447 = vsub.s32 %v1444, %v1446
    %v1448 = vrot.slane %v1434, %v1447
    %v1449 = vcombine.low %v1384, %v1400
    %v1450 = vcombine.high %v1384, %v1400
    %v1452 = vunpack.c.l.s4 1934713408
    %v1453 = vunpack.c.0.s8 %v1452
    %v1454 = vlaneseq
    %v1455 = vshrl.u32 %v1454, 7
    %v1456 = vsub.s32 %v1453, %v1455
    %v1457 = vrot.slane %v1449, %v1456
    %v1459 = vunpack.c.l.s4 1934713408
    %v1460 = vunpack.c.0.s8 %v1459
    %v1461 = vlaneseq
    %v1462 = vshrl.u32 %v1461, 7
    %v1463 = vsub.s32 %v1460, %v1462
    %v1464 = vrot.slane %v1450, %v1463
    %v1465 = vcombine.low %v1409, %v1425
    %v1466 = vcombine.high %v1409, %v1425
    %v1468 = vunpack.c.l.s4 1934713408
    %v1469 = vunpack.c.0.s8 %v1468
    %v1470 = vlaneseq
    %v1471 = vshrl.u32 %v1470, 7
    %v1472 = vsub.s32 %v1469, %v1471
    %v1473 = vrot.slane %v1465, %v1472
    %v1475 = vunpack.c.l.s4 1934713408
    %v1476 = vunpack.c.0.s8 %v1475
    %v1477 = vlaneseq
    %v1478 = vshrl.u32 %v1477, 7
    %v1479 = vsub.s32 %v1476, %v1478
    %v1480 = vrot.slane %v1466, %v1479
    %v1481 = vcombine.low %v1416, %v1432
    %v1482 = vcombine.high %v1416, %v1432
    %v1484 = vunpack.c.l.s4 1934713408
    %v1485 = vunpack.c.0.s8 %v1484
    %v1486 = vlaneseq
    %v1487 = vshrl.u32 %v1486, 7
    %v1488 = vsub.s32 %v1485, %v1487
    %v1489 = vrot.slane %v1481, %v1488
    %v1491 = vunpack.c.l.s4 1934713408
    %v1492 = vunpack.c.0.s8 %v1491
    %v1493 = vlaneseq
    %v1494 = vshrl.u32 %v1493, 7
    %v1495 = vsub.s32 %v1492, %v1494
    %v1496 = vrot.slane %v1482, %v1495
    %v1497 = vcombine.low %v1441, %v1473
    %v1498 = vcombine.high %v1441, %v1473
    %v1499 = vcombine.low %v1448, %v1480
    %v1500 = vcombine.high %v1448, %v1480
    %v1501 = vcombine.low %v1457, %v1489
    %v1502 = vcombine.high %v1457, %v1489
    %v1503 = vcombine.low %v1464, %v1496
    %v1504 = vcombine.high %v1464, %v1496
    %v1505 = vcombine.low %v1107, %v1139
    %v1506 = vcombine.high %v1107, %v1139
    %v1508 = vunpack.c.l.s4 1983009808
    %v1509 = vunpack.c.0.s8 %v1508
    %v1510 = vlaneseq
    %v1511 = vshrl.u32 %v1510, 7
    %v1512 = vsub.s32 %v1509, %v1511
    %v1513 = vrot.slane %v1505, %v1512
    %v1515 = vunpack.c.l.s4 1983009808
    %v1516 = vunpack.c.0.s8 %v1515
    %v1517 = vlaneseq
    %v1518 = vshrl.u32 %v1517, 7
    %v1519 = vsub.s32 %v1516, %v1518
    %v1520 = vrot.slane %v1506, %v1519
    %v1521 = vcombine.low %v1123, %v1155
    %v1522 = vcombine.high %v1123, %v1155
    %v1524 = vunpack.c.l.s4 1983009808
    %v1525 = vunpack.c.0.s8 %v1524
    %v1526 = vlaneseq
    %v1527 = vshrl.u32 %v1526, 7
    %v1528 = vsub.s32 %v1525, %v1527
    %v1529 = vrot.slane %v1521, %v1528
    %v1531 = vunpack.c.l.s4 1983009808
    %v1532 = vunpack.c.0.s8 %v1531
    %v1533 = vlaneseq
    %v1534 = vshrl.u32 %v1533, 7
    %v1535 = vsub.s32 %v1532, %v1534
    %v1536 = vrot.slane %v1522, %v1535
    %v1537 = vcombine.low %v1171, %v1203
    %v1538 = vcombine.high %v1171, %v1203
    %v1540 = vunpack.c.l.s4 1983009808
    %v1541 = vunpack.c.0.s8 %v1540
    %v1542 = vlaneseq
    %v1543 = vshrl.u32 %v1542, 7
    %v1544 = vsub.s32 %v1541, %v1543
    %v1545 = vrot.slane %v1537, %v1544
    %v1547 = vunpack.c.l.s4 1983009808
    %v1548 = vunpack.c.0.s8 %v1547
    %v1549 = vlaneseq
    %v1550 = vshrl.u32 %v1549, 7
    %v1551 = vsub.s32 %v1548, %v1550
    %v1552 = vrot.slane %v1538, %v1551
    %v1553 = vcombine.low %v1187, %v1219
    %v1554 = vcombine.high %v1187, %v1219
    %v1556 = vunpack.c.l.s4 1983009808
    %v1557 = vunpack.c.0.s8 %v1556
    %v1558 = vlaneseq
    %v1559 = vshrl.u32 %v1558, 7
    %v1560 = vsub.s32 %v1557, %v1559
    %v1561 = vrot.slane %v1553, %v1560
    %v1563 = vunpack.c.l.s4 1983009808
    %v1564 = vunpack.c.0.s8 %v1563
    %v1565 = vlaneseq
    %v1566 = vshrl.u32 %v1565, 7
    %v1567 = vsub.s32 %v1564, %v1566
    %v1568 = vrot.slane %v1554, %v1567
    %v1569 = vcombine.low %v1513, %v1529
    %v1570 = vcombine.high %v1513, %v1529
    %v1572 = vunpack.c.l.s4 1934713408
    %v1573 = vunpack.c.0.s8 %v1572
    %v1574 = vlaneseq
    %v1575 = vshrl.u32 %v1574, 7
    %v1576 = vsub.s32 %v1573, %v1575
    %v1577 = vrot.slane %v1569, %v1576
    %v1579 = vunpack.c.l.s4 1934713408
    %v1580 = vunpack.c.0.s8 %v1579
    %v1581 = vlaneseq
    %v1582 = vshrl.u32 %v1581, 7
    %v1583 = vsub.s32 %v1580, %v1582
    %v1584 = vrot.slane %v1570, %v1583
    %v1585 = vcombine.low %v1520, %v1536
    %v1586 = vcombine.high %v1520, %v1536
    %v1588 = vunpack.c.l.s4 1934713408
    %v1589 = vunpack.c.0.s8 %v1588
    %v1590 = vlaneseq
    %v1591 = vshrl.u32 %v1590, 7
    %v1592 = vsub.s32 %v1589, %v1591
    %v1593 = vrot.slane %v1585, %v1592
    %v1595 = vunpack.c.l.s4 1934713408
    %v1596 = vunpack.c.0.s8 %v1595
    %v1597 = vlaneseq
    %v1598 = vshrl.u32 %v1597, 7
    %v1599 = vsub.s32 %v1596, %v1598
    %v1600 = vrot.slane %v1586, %v1599
    %v1601 = vcombine.low %v1545, %v1561
    %v1602 = vcombine.high %v1545, %v1561
    %v1604 = vunpack.c.l.s4 1934713408
    %v1605 = vunpack.c.0.s8 %v1604
    %v1606 = vlaneseq
    %v1607 = vshrl.u32 %v1606, 7
    %v1608 = vsub.s32 %v1605, %v1607
    %v1609 = vrot.slane %v1601, %v1608
    %v1611 = vunpack.c.l.s4 1934713408
    %v1612 = vunpack.c.0.s8 %v1611
    %v1613 = vlaneseq
    %v1614 = vshrl.u32 %v1613, 7
    %v1615 = vsub.s32 %v1612, %v1614
    %v1616 = vrot.slane %v1602, %v1615
    %v1617 = vcombine.low %v1552, %v1568
    %v1618 = vcombine.high %v1552, %v1568
    %v1620 = vunpack.c.l.s4 1934713408
    %v1621 = vunpack.c.0.s8 %v1620
    %v1622 = vlaneseq
    %v1623 = vshrl.u32 %v1622, 7
    %v1624 = vsub.s32 %v1621, %v1623
    %v1625 = vrot.slane %v1617, %v1624
    %v1627 = vunpack.c.l.s4 1934713408
    %v1628 = vunpack.c.0.s8 %v1627
    %v1629 = vlaneseq
    %v1630 = vshrl.u32 %v1629, 7
    %v1631 = vsub.s32 %v1628, %v1630
    %v1632 = vrot.slane %v1618, %v1631
    %v1633 = vcombine.low %v1577, %v1609
    %v1634 = vcombine.high %v1577, %v1609
    %v1635 = vcombine.low %v1584, %v1616
    %v1636 = vcombine.high %v1584, %v1616
    %v1637 = vcombine.low %v1593, %v1625
    %v1638 = vcombine.high %v1593, %v1625
    %v1639 = vcombine.low %v1600, %v1632
    %v1640 = vcombine.high %v1600, %v1632
    %v1641 = vcombine.low %v1108, %v1140
    %v1642 = vcombine.high %v1108, %v1140
    %v1644 = vunpack.c.l.s4 1983009808
    %v1645 = vunpack.c.0.s8 %v1644
    %v1646 = vlaneseq
    %v1647 = vshrl.u32 %v1646, 7
    %v1648 = vsub.s32 %v1645, %v1647
    %v1649 = vrot.slane %v1641, %v1648
    %v1651 = vunpack.c.l.s4 1983009808
    %v1652 = vunpack.c.0.s8 %v1651
    %v1653 = vlaneseq
    %v1654 = vshrl.u32 %v1653, 7
    %v1655 = vsub.s32 %v1652, %v1654
    %v1656 = vrot.slane %v1642, %v1655
    %v1657 = vcombine.low %v1124, %v1156
    %v1658 = vcombine.high %v1124, %v1156
    %v1660 = vunpack.c.l.s4 1983009808
    %v1661 = vunpack.c.0.s8 %v1660
    %v1662 = vlaneseq
    %v1663 = vshrl.u32 %v1662, 7
    %v1664 = vsub.s32 %v1661, %v1663
    %v1665 = vrot.slane %v1657, %v1664
    %v1667 = vunpack.c.l.s4 1983009808
    %v1668 = vunpack.c.0.s8 %v1667
    %v1669 = vlaneseq
    %v1670 = vshrl.u32 %v1669, 7
    %v1671 = vsub.s32 %v1668, %v1670
    %v1672 = vrot.slane %v1658, %v1671
    %v1673 = vcombine.low %v1172, %v1204
    %v1674 = vcombine.high %v1172, %v1204
    %v1676 = vunpack.c.l.s4 1983009808
    %v1677 = vunpack.c.0.s8 %v1676
    %v1678 = vlaneseq
    %v1679 = vshrl.u32 %v1678, 7
    %v1680 = vsub.s32 %v1677, %v1679
    %v1681 = vrot.slane %v1673, %v1680
    %v1683 = vunpack.c.l.s4 1983009808
    %v1684 = vunpack.c.0.s8 %v1683
    %v1685 = vlaneseq
    %v1686 = vshrl.u32 %v1685, 7
    %v1687 = vsub.s32 %v1684, %v1686
    %v1688 = vrot.slane %v1674, %v1687
    %v1689 = vcombine.low %v1188, %v1220
    %v1690 = vcombine.high %v1188, %v1220
    %v1692 = vunpack.c.l.s4 1983009808
    %v1693 = vunpack.c.0.s8 %v1692
    %v1694 = vlaneseq
    %v1695 = vshrl.u32 %v1694, 7
    %v1696 = vsub.s32 %v1693, %v1695
    %v1697 = vrot.slane %v1689, %v1696
    %v1699 = vunpack.c.l.s4 1983009808
    %v1700 = vunpack.c.0.s8 %v1699
    %v1701 = vlaneseq
    %v1702 = vshrl.u32 %v1701, 7
    %v1703 = vsub.s32 %v1700, %v1702
    %v1704 = vrot.slane %v1690, %v1703
    %v1705 = vcombine.low %v1649, %v1665
    %v1706 = vcombine.high %v1649, %v1665
    %v1708 = vunpack.c.l.s4 1934713408
    %v1709 = vunpack.c.0.s8 %v1708
    %v1710 = vlaneseq
    %v1711 = vshrl.u32 %v1710, 7
    %v1712 = vsub.s32 %v1709, %v1711
    %v1713 = vrot.slane %v1705, %v1712
    %v1715 = vunpack.c.l.s4 1934713408
    %v1716 = vunpack.c.0.s8 %v1715
    %v1717 = vlaneseq
    %v1718 = vshrl.u32 %v1717, 7
    %v1719 = vsub.s32 %v1716, %v1718
    %v1720 = vrot.slane %v1706, %v1719
    %v1721 = vcombine.low %v1656, %v1672
    %v1722 = vcombine.high %v1656, %v1672
    %v1724 = vunpack.c.l.s4 1934713408
    %v1725 = vunpack.c.0.s8 %v1724
    %v1726 = vlaneseq
    %v1727 = vshrl.u32 %v1726, 7
    %v1728 = vsub.s32 %v1725, %v1727
    %v1729 = vrot.slane %v1721, %v1728
    %v1731 = vunpack.c.l.s4 1934713408
    %v1732 = vunpack.c.0.s8 %v1731
    %v1733 = vlaneseq
    %v1734 = vshrl.u32 %v1733, 7
    %v1735 = vsub.s32 %v1732, %v1734
    %v1736 = vrot.slane %v1722, %v1735
    %v1737 = vcombine.low %v1681, %v1697
    %v1738 = vcombine.high %v1681, %v1697
    %v1740 = vunpack.c.l.s4 1934713408
    %v1741 = vunpack.c.0.s8 %v1740
    %v1742 = vlaneseq
    %v1743 = vshrl.u32 %v1742, 7
    %v1744 = vsub.s32 %v1741, %v1743
    %v1745 = vrot.slane %v1737, %v1744
    %v1747 = vunpack.c.l.s4 1934713408
    %v1748 = vunpack.c.0.s8 %v1747
    %v1749 = vlaneseq
    %v1750 = vshrl.u32 %v1749, 7
    %v1751 = vsub.s32 %v1748, %v1750
    %v1752 = vrot.slane %v1738, %v1751
    %v1753 = vcombine.low %v1688, %v1704
    %v1754 = vcombine.high %v1688, %v1704
    %v1756 = vunpack.c.l.s4 1934713408
    %v1757 = vunpack.c.0.s8 %v1756
    %v1758 = vlaneseq
    %v1759 = vshrl.u32 %v1758, 7
    %v1760 = vsub.s32 %v1757, %v1759
    %v1761 = vrot.slane %v1753, %v1760
    %v1763 = vunpack.c.l.s4 1934713408
    %v1764 = vunpack.c.0.s8 %v1763
    %v1765 = vlaneseq
    %v1766 = vshrl.u32 %v1765, 7
    %v1767 = vsub.s32 %v1764, %v1766
    %v1768 = vrot.slane %v1754, %v1767
    %v1769 = vcombine.low %v1713, %v1745
    %v1770 = vcombine.high %v1713, %v1745
    %v1771 = vcombine.low %v1720, %v1752
    %v1772 = vcombine.high %v1720, %v1752
    %v1773 = vcombine.low %v1729, %v1761
    %v1774 = vcombine.high %v1729, %v1761
    %v1775 = vcombine.low %v1736, %v1768
    %v1776 = vcombine.high %v1736, %v1768
    %v1777 = vcombine.low %v1109, %v1141
    %v1778 = vcombine.high %v1109, %v1141
    %v1780 = vunpack.c.l.s4 1983009808
    %v1781 = vunpack.c.0.s8 %v1780
    %v1782 = vlaneseq
    %v1783 = vshrl.u32 %v1782, 7
    %v1784 = vsub.s32 %v1781, %v1783
    %v1785 = vrot.slane %v1777, %v1784
    %v1787 = vunpack.c.l.s4 1983009808
    %v1788 = vunpack.c.0.s8 %v1787
    %v1789 = vlaneseq
    %v1790 = vshrl.u32 %v1789, 7
    %v1791 = vsub.s32 %v1788, %v1790
    %v1792 = vrot.slane %v1778, %v1791
    %v1793 = vcombine.low %v1125, %v1157
    %v1794 = vcombine.high %v1125, %v1157
    %v1796 = vunpack.c.l.s4 1983009808
    %v1797 = vunpack.c.0.s8 %v1796
    %v1798 = vlaneseq
    %v1799 = vshrl.u32 %v1798, 7
    %v1800 = vsub.s32 %v1797, %v1799
    %v1801 = vrot.slane %v1793, %v1800
    %v1803 = vunpack.c.l.s4 1983009808
    %v1804 = vunpack.c.0.s8 %v1803
    %v1805 = vlaneseq
    %v1806 = vshrl.u32 %v1805, 7
    %v1807 = vsub.s32 %v1804, %v1806
    %v1808 = vrot.slane %v1794, %v1807
    %v1809 = vcombine.low %v1173, %v1205
    %v1810 = vcombine.high %v1173, %v1205
    %v1812 = vunpack.c.l.s4 1983009808
    %v1813 = vunpack.c.0.s8 %v1812
    %v1814 = vlaneseq
    %v1815 = vshrl.u32 %v1814, 7
    %v1816 = vsub.s32 %v1813, %v1815
    %v1817 = vrot.slane %v1809, %v1816
    %v1819 = vunpack.c.l.s4 1983009808
    %v1820 = vunpack.c.0.s8 %v1819
    %v1821 = vlaneseq
    %v1822 = vshrl.u32 %v1821, 7
    %v1823 = vsub.s32 %v1820, %v1822
    %v1824 = vrot.slane %v1810, %v1823
    %v1825 = vcombine.low %v1189, %v1221
    %v1826 = vcombine.high %v1189, %v1221
    %v1828 = vunpack.c.l.s4 1983009808
    %v1829 = vunpack.c.0.s8 %v1828
    %v1830 = vlaneseq
    %v1831 = vshrl.u32 %v1830, 7
    %v1832 = vsub.s32 %v1829, %v1831
    %v1833 = vrot.slane %v1825, %v1832
    %v1835 = vunpack.c.l.s4 1983009808
    %v1836 = vunpack.c.0.s8 %v1835
    %v1837 = vlaneseq
    %v1838 = vshrl.u32 %v1837, 7
    %v1839 = vsub.s32 %v1836, %v1838
    %v1840 = vrot.slane %v1826, %v1839
    %v1841 = vcombine.low %v1785, %v1801
    %v1842 = vcombine.high %v1785, %v1801
    %v1844 = vunpack.c.l.s4 1934713408
    %v1845 = vunpack.c.0.s8 %v1844
    %v1846 = vlaneseq
    %v1847 = vshrl.u32 %v1846, 7
    %v1848 = vsub.s32 %v1845, %v1847
    %v1849 = vrot.slane %v1841, %v1848
    %v1851 = vunpack.c.l.s4 1934713408
    %v1852 = vunpack.c.0.s8 %v1851
    %v1853 = vlaneseq
    %v1854 = vshrl.u32 %v1853, 7
    %v1855 = vsub.s32 %v1852, %v1854
    %v1856 = vrot.slane %v1842, %v1855
    %v1857 = vcombine.low %v1792, %v1808
    %v1858 = vcombine.high %v1792, %v1808
    %v1860 = vunpack.c.l.s4 1934713408
    %v1861 = vunpack.c.0.s8 %v1860
    %v1862 = vlaneseq
    %v1863 = vshrl.u32 %v1862, 7
    %v1864 = vsub.s32 %v1861, %v1863
    %v1865 = vrot.slane %v1857, %v1864
    %v1867 = vunpack.c.l.s4 1934713408
    %v1868 = vunpack.c.0.s8 %v1867
    %v1869 = vlaneseq
    %v1870 = vshrl.u32 %v1869, 7
    %v1871 = vsub.s32 %v1868, %v1870
    %v1872 = vrot.slane %v1858, %v1871
    %v1873 = vcombine.low %v1817, %v1833
    %v1874 = vcombine.high %v1817, %v1833
    %v1876 = vunpack.c.l.s4 1934713408
    %v1877 = vunpack.c.0.s8 %v1876
    %v1878 = vlaneseq
    %v1879 = vshrl.u32 %v1878, 7
    %v1880 = vsub.s32 %v1877, %v1879
    %v1881 = vrot.slane %v1873, %v1880
    %v1883 = vunpack.c.l.s4 1934713408
    %v1884 = vunpack.c.0.s8 %v1883
    %v1885 = vlaneseq
    %v1886 = vshrl.u32 %v1885, 7
    %v1887 = vsub.s32 %v1884, %v1886
    %v1888 = vrot.slane %v1874, %v1887
    %v1889 = vcombine.low %v1824, %v1840
    %v1890 = vcombine.high %v1824, %v1840
    %v1892 = vunpack.c.l.s4 1934713408
    %v1893 = vunpack.c.0.s8 %v1892
    %v1894 = vlaneseq
    %v1895 = vshrl.u32 %v1894, 7
    %v1896 = vsub.s32 %v1893, %v1895
    %v1897 = vrot.slane %v1889, %v1896
    %v1899 = vunpack.c.l.s4 1934713408
    %v1900 = vunpack.c.0.s8 %v1899
    %v1901 = vlaneseq
    %v1902 = vshrl.u32 %v1901, 7
    %v1903 = vsub.s32 %v1900, %v1902
    %v1904 = vrot.slane %v1890, %v1903
    %v1905 = vcombine.low %v1849, %v1881
    %v1906 = vcombine.high %v1849, %v1881
    %v1907 = vcombine.low %v1856, %v1888
    %v1908 = vcombine.high %v1856, %v1888
    %v1909 = vcombine.low %v1865, %v1897
    %v1910 = vcombine.high %v1865, %v1897
    %v1911 = vcombine.low %v1872, %v1904
    %v1912 = vcombine.high %v1872, %v1904
    %v1913 = vcombine.low %v1110, %v1142
    %v1914 = vcombine.high %v1110, %v1142
    %v1916 = vunpack.c.l.s4 1983009808
    %v1917 = vunpack.c.0.s8 %v1916
    %v1918 = vlaneseq
    %v1919 = vshrl.u32 %v1918, 7
    %v1920 = vsub.s32 %v1917, %v1919
    %v1921 = vrot.slane %v1913, %v1920
    %v1923 = vunpack.c.l.s4 1983009808
    %v1924 = vunpack.c.0.s8 %v1923
    %v1925 = vlaneseq
    %v1926 = vshrl.u32 %v1925, 7
    %v1927 = vsub.s32 %v1924, %v1926
    %v1928 = vrot.slane %v1914, %v1927
    %v1929 = vcombine.low %v1126, %v1158
    %v1930 = vcombine.high %v1126, %v1158
    %v1932 = vunpack.c.l.s4 1983009808
    %v1933 = vunpack.c.0.s8 %v1932
    %v1934 = vlaneseq
    %v1935 = vshrl.u32 %v1934, 7
    %v1936 = vsub.s32 %v1933, %v1935
    %v1937 = vrot.slane %v1929, %v1936
    %v1939 = vunpack.c.l.s4 1983009808
    %v1940 = vunpack.c.0.s8 %v1939
    %v1941 = vlaneseq
    %v1942 = vshrl.u32 %v1941, 7
    %v1943 = vsub.s32 %v1940, %v1942
    %v1944 = vrot.slane %v1930, %v1943
    %v1945 = vcombine.low %v1174, %v1206
    %v1946 = vcombine.high %v1174, %v1206
    %v1948 = vunpack.c.l.s4 1983009808
    %v1949 = vunpack.c.0.s8 %v1948
    %v1950 = vlaneseq
    %v1951 = vshrl.u32 %v1950, 7
    %v1952 = vsub.s32 %v1949, %v1951
    %v1953 = vrot.slane %v1945, %v1952
    %v1955 = vunpack.c.l.s4 1983009808
    %v1956 = vunpack.c.0.s8 %v1955
    %v1957 = vlaneseq
    %v1958 = vshrl.u32 %v1957, 7
    %v1959 = vsub.s32 %v1956, %v1958
    %v1960 = vrot.slane %v1946, %v1959
    %v1961 = vcombine.low %v1190, %v1222
    %v1962 = vcombine.high %v1190, %v1222
    %v1964 = vunpack.c.l.s4 1983009808
    %v1965 = vunpack.c.0.s8 %v1964
    %v1966 = vlaneseq
    %v1967 = vshrl.u32 %v1966, 7
    %v1968 = vsub.s32 %v1965, %v1967
    %v1969 = vrot.slane %v1961, %v1968
    %v1971 = vunpack.c.l.s4 1983009808
    %v1972 = vunpack.c.0.s8 %v1971
    %v1973 = vlaneseq
    %v1974 = vshrl.u32 %v1973, 7
    %v1975 = vsub.s32 %v1972, %v1974
    %v1976 = vrot.slane %v1962, %v1975
    %v1977 = vcombine.low %v1921, %v1937
    %v1978 = vcombine.high %v1921, %v1937
    %v1980 = vunpack.c.l.s4 1934713408
    %v1981 = vunpack.c.0.s8 %v1980
    %v1982 = vlaneseq
    %v1983 = vshrl.u32 %v1982, 7
    %v1984 = vsub.s32 %v1981, %v1983
    %v1985 = vrot.slane %v1977, %v1984
    %v1987 = vunpack.c.l.s4 1934713408
    %v1988 = vunpack.c.0.s8 %v1987
    %v1989 = vlaneseq
    %v1990 = vshrl.u32 %v1989, 7
    %v1991 = vsub.s32 %v1988, %v1990
    %v1992 = vrot.slane %v1978, %v1991
    %v1993 = vcombine.low %v1928, %v1944
    %v1994 = vcombine.high %v1928, %v1944
    %v1996 = vunpack.c.l.s4 1934713408
    %v1997 = vunpack.c.0.s8 %v1996
    %v1998 = vlaneseq
    %v1999 = vshrl.u32 %v1998, 7
    %v2000 = vsub.s32 %v1997, %v1999
    %v2001 = vrot.slane %v1993, %v2000
    %v2003 = vunpack.c.l.s4 1934713408
    %v2004 = vunpack.c.0.s8 %v2003
    %v2005 = vlaneseq
    %v2006 = vshrl.u32 %v2005, 7
    %v2007 = vsub.s32 %v2004, %v2006
    %v2008 = vrot.slane %v1994, %v2007
    %v2009 = vcombine.low %v1953, %v1969
    %v2010 = vcombine.high %v1953, %v1969
    %v2012 = vunpack.c.l.s4 1934713408
    %v2013 = vunpack.c.0.s8 %v2012
    %v2014 = vlaneseq
    %v2015 = vshrl.u32 %v2014, 7
    %v2016 = vsub.s32 %v2013, %v2015
    %v2017 = vrot.slane %v2009, %v2016
    %v2019 = vunpack.c.l.s4 1934713408
    %v2020 = vunpack.c.0.s8 %v2019
    %v2021 = vlaneseq
    %v2022 = vshrl.u32 %v2021, 7
    %v2023 = vsub.s32 %v2020, %v2022
    %v2024 = vrot.slane %v2010, %v2023
    %v2025 = vcombine.low %v1960, %v1976
    %v2026 = vcombine.high %v1960, %v1976
    %v2028 = vunpack.c.l.s4 1934713408
    %v2029 = vunpack.c.0.s8 %v2028
    %v2030 = vlaneseq
    %v2031 = vshrl.u32 %v2030, 7
    %v2032 = vsub.s32 %v2029, %v2031
    %v2033 = vrot.slane %v2025, %v2032
    %v2035 = vunpack.c.l.s4 1934713408
    %v2036 = vunpack.c.0.s8 %v2035
    %v2037 = vlaneseq
    %v2038 = vshrl.u32 %v2037, 7
    %v2039 = vsub.s32 %v2036, %v2038
    %v2040 = vrot.slane %v2026, %v2039
    %v2041 = vcombine.low %v1985, %v2017
    %v2042 = vcombine.high %v1985, %v2017
    %v2043 = vcombine.low %v1992, %v2024
    %v2044 = vcombine.high %v1992, %v2024
    %v2045 = vcombine.low %v2001, %v2033
    %v2046 = vcombine.high %v2001, %v2033
    %v2047 = vcombine.low %v2008, %v2040
    %v2048 = vcombine.high %v2008, %v2040
    %v2049 = vcombine.low %v1111, %v1143
    %v2050 = vcombine.high %v1111, %v1143
    %v2052 = vunpack.c.l.s4 1983009808
    %v2053 = vunpack.c.0.s8 %v2052
    %v2054 = vlaneseq
    %v2055 = vshrl.u32 %v2054, 7
    %v2056 = vsub.s32 %v2053, %v2055
    %v2057 = vrot.slane %v2049, %v2056
    %v2059 = vunpack.c.l.s4 1983009808
    %v2060 = vunpack.c.0.s8 %v2059
    %v2061 = vlaneseq
    %v2062 = vshrl.u32 %v2061, 7
    %v2063 = vsub.s32 %v2060, %v2062
    %v2064 = vrot.slane %v2050, %v2063
    %v2065 = vcombine.low %v1127, %v1159
    %v2066 = vcombine.high %v1127, %v1159
    %v2068 = vunpack.c.l.s4 1983009808
    %v2069 = vunpack.c.0.s8 %v2068
    %v2070 = vlaneseq
    %v2071 = vshrl.u32 %v2070, 7
    %v2072 = vsub.s32 %v2069, %v2071
    %v2073 = vrot.slane %v2065, %v2072
    %v2075 = vunpack.c.l.s4 1983009808
    %v2076 = vunpack.c.0.s8 %v2075
    %v2077 = vlaneseq
    %v2078 = vshrl.u32 %v2077, 7
    %v2079 = vsub.s32 %v2076, %v2078
    %v2080 = vrot.slane %v2066, %v2079
    %v2081 = vcombine.low %v1175, %v1207
    %v2082 = vcombine.high %v1175, %v1207
    %v2084 = vunpack.c.l.s4 1983009808
    %v2085 = vunpack.c.0.s8 %v2084
    %v2086 = vlaneseq
    %v2087 = vshrl.u32 %v2086, 7
    %v2088 = vsub.s32 %v2085, %v2087
    %v2089 = vrot.slane %v2081, %v2088
    %v2091 = vunpack.c.l.s4 1983009808
    %v2092 = vunpack.c.0.s8 %v2091
    %v2093 = vlaneseq
    %v2094 = vshrl.u32 %v2093, 7
    %v2095 = vsub.s32 %v2092, %v2094
    %v2096 = vrot.slane %v2082, %v2095
    %v2097 = vcombine.low %v1191, %v1223
    %v2098 = vcombine.high %v1191, %v1223
    %v2100 = vunpack.c.l.s4 1983009808
    %v2101 = vunpack.c.0.s8 %v2100
    %v2102 = vlaneseq
    %v2103 = vshrl.u32 %v2102, 7
    %v2104 = vsub.s32 %v2101, %v2103
    %v2105 = vrot.slane %v2097, %v2104
    %v2107 = vunpack.c.l.s4 1983009808
    %v2108 = vunpack.c.0.s8 %v2107
    %v2109 = vlaneseq
    %v2110 = vshrl.u32 %v2109, 7
    %v2111 = vsub.s32 %v2108, %v2110
    %v2112 = vrot.slane %v2098, %v2111
    %v2113 = vcombine.low %v2057, %v2073
    %v2114 = vcombine.high %v2057, %v2073
    %v2116 = vunpack.c.l.s4 1934713408
    %v2117 = vunpack.c.0.s8 %v2116
    %v2118 = vlaneseq
    %v2119 = vshrl.u32 %v2118, 7
    %v2120 = vsub.s32 %v2117, %v2119
    %v2121 = vrot.slane %v2113, %v2120
    %v2123 = vunpack.c.l.s4 1934713408
    %v2124 = vunpack.c.0.s8 %v2123
    %v2125 = vlaneseq
    %v2126 = vshrl.u32 %v2125, 7
    %v2127 = vsub.s32 %v2124, %v2126
    %v2128 = vrot.slane %v2114, %v2127
    %v2129 = vcombine.low %v2064, %v2080
    %v2130 = vcombine.high %v2064, %v2080
    %v2132 = vunpack.c.l.s4 1934713408
    %v2133 = vunpack.c.0.s8 %v2132
    %v2134 = vlaneseq
    %v2135 = vshrl.u32 %v2134, 7
    %v2136 = vsub.s32 %v2133, %v2135
    %v2137 = vrot.slane %v2129, %v2136
    %v2139 = vunpack.c.l.s4 1934713408
    %v2140 = vunpack.c.0.s8 %v2139
    %v2141 = vlaneseq
    %v2142 = vshrl.u32 %v2141, 7
    %v2143 = vsub.s32 %v2140, %v2142
    %v2144 = vrot.slane %v2130, %v2143
    %v2145 = vcombine.low %v2089, %v2105
    %v2146 = vcombine.high %v2089, %v2105
    %v2148 = vunpack.c.l.s4 1934713408
    %v2149 = vunpack.c.0.s8 %v2148
    %v2150 = vlaneseq
    %v2151 = vshrl.u32 %v2150, 7
    %v2152 = vsub.s32 %v2149, %v2151
    %v2153 = vrot.slane %v2145, %v2152
    %v2155 = vunpack.c.l.s4 1934713408
    %v2156 = vunpack.c.0.s8 %v2155
    %v2157 = vlaneseq
    %v2158 = vshrl.u32 %v2157, 7
    %v2159 = vsub.s32 %v2156, %v2158
    %v2160 = vrot.slane %v2146, %v2159
    %v2161 = vcombine.low %v2096, %v2112
    %v2162 = vcombine.high %v2096, %v2112
    %v2164 = vunpack.c.l.s4 1934713408
    %v2165 = vunpack.c.0.s8 %v2164
    %v2166 = vlaneseq
    %v2167 = vshrl.u32 %v2166, 7
    %v2168 = vsub.s32 %v2165, %v2167
    %v2169 = vrot.slane %v2161, %v2168
    %v2171 = vunpack.c.l.s4 1934713408
    %v2172 = vunpack.c.0.s8 %v2171
    %v2173 = vlaneseq
    %v2174 = vshrl.u32 %v2173, 7
    %v2175 = vsub.s32 %v2172, %v2174
    %v2176 = vrot.slane %v2162, %v2175
    %v2177 = vcombine.low %v2121, %v2153
    %v2178 = vcombine.high %v2121, %v2153
    %v2179 = vcombine.low %v2128, %v2160
    %v2180 = vcombine.high %v2128, %v2160
    %v2181 = vcombine.low %v2137, %v2169
    %v2182 = vcombine.high %v2137, %v2169
    %v2183 = vcombine.low %v2144, %v2176
    %v2184 = vcombine.high %v2144, %v2176
    %v2185 = vcombine.low %v1112, %v1144
    %v2186 = vcombine.high %v1112, %v1144
    %v2188 = vunpack.c.l.s4 1983009808
    %v2189 = vunpack.c.0.s8 %v2188
    %v2190 = vlaneseq
    %v2191 = vshrl.u32 %v2190, 7
    %v2192 = vsub.s32 %v2189, %v2191
    %v2193 = vrot.slane %v2185, %v2192
    %v2195 = vunpack.c.l.s4 1983009808
    %v2196 = vunpack.c.0.s8 %v2195
    %v2197 = vlaneseq
    %v2198 = vshrl.u32 %v2197, 7
    %v2199 = vsub.s32 %v2196, %v2198
    %v2200 = vrot.slane %v2186, %v2199
    %v2201 = vcombine.low %v1128, %v1160
    %v2202 = vcombine.high %v1128, %v1160
    %v2204 = vunpack.c.l.s4 1983009808
    %v2205 = vunpack.c.0.s8 %v2204
    %v2206 = vlaneseq
    %v2207 = vshrl.u32 %v2206, 7
    %v2208 = vsub.s32 %v2205, %v2207
    %v2209 = vrot.slane %v2201, %v2208
    %v2211 = vunpack.c.l.s4 1983009808
    %v2212 = vunpack.c.0.s8 %v2211
    %v2213 = vlaneseq
    %v2214 = vshrl.u32 %v2213, 7
    %v2215 = vsub.s32 %v2212, %v2214
    %v2216 = vrot.slane %v2202, %v2215
    %v2217 = vcombine.low %v1176, %v1208
    %v2218 = vcombine.high %v1176, %v1208
    %v2220 = vunpack.c.l.s4 1983009808
    %v2221 = vunpack.c.0.s8 %v2220
    %v2222 = vlaneseq
    %v2223 = vshrl.u32 %v2222, 7
    %v2224 = vsub.s32 %v2221, %v2223
    %v2225 = vrot.slane %v2217, %v2224
    %v2227 = vunpack.c.l.s4 1983009808
    %v2228 = vunpack.c.0.s8 %v2227
    %v2229 = vlaneseq
    %v2230 = vshrl.u32 %v2229, 7
    %v2231 = vsub.s32 %v2228, %v2230
    %v2232 = vrot.slane %v2218, %v2231
    %v2233 = vcombine.low %v1192, %v1224
    %v2234 = vcombine.high %v1192, %v1224
    %v2236 = vunpack.c.l.s4 1983009808
    %v2237 = vunpack.c.0.s8 %v2236
    %v2238 = vlaneseq
    %v2239 = vshrl.u32 %v2238, 7
    %v2240 = vsub.s32 %v2237, %v2239
    %v2241 = vrot.slane %v2233, %v2240
    %v2243 = vunpack.c.l.s4 1983009808
    %v2244 = vunpack.c.0.s8 %v2243
    %v2245 = vlaneseq
    %v2246 = vshrl.u32 %v2245, 7
    %v2247 = vsub.s32 %v2244, %v2246
    %v2248 = vrot.slane %v2234, %v2247
    %v2249 = vcombine.low %v2193, %v2209
    %v2250 = vcombine.high %v2193, %v2209
    %v2252 = vunpack.c.l.s4 1934713408
    %v2253 = vunpack.c.0.s8 %v2252
    %v2254 = vlaneseq
    %v2255 = vshrl.u32 %v2254, 7
    %v2256 = vsub.s32 %v2253, %v2255
    %v2257 = vrot.slane %v2249, %v2256
    %v2259 = vunpack.c.l.s4 1934713408
    %v2260 = vunpack.c.0.s8 %v2259
    %v2261 = vlaneseq
    %v2262 = vshrl.u32 %v2261, 7
    %v2263 = vsub.s32 %v2260, %v2262
    %v2264 = vrot.slane %v2250, %v2263
    %v2265 = vcombine.low %v2200, %v2216
    %v2266 = vcombine.high %v2200, %v2216
    %v2268 = vunpack.c.l.s4 1934713408
    %v2269 = vunpack.c.0.s8 %v2268
    %v2270 = vlaneseq
    %v2271 = vshrl.u32 %v2270, 7
    %v2272 = vsub.s32 %v2269, %v2271
    %v2273 = vrot.slane %v2265, %v2272
    %v2275 = vunpack.c.l.s4 1934713408
    %v2276 = vunpack.c.0.s8 %v2275
    %v2277 = vlaneseq
    %v2278 = vshrl.u32 %v2277, 7
    %v2279 = vsub.s32 %v2276, %v2278
    %v2280 = vrot.slane %v2266, %v2279
    %v2281 = vcombine.low %v2225, %v2241
    %v2282 = vcombine.high %v2225, %v2241
    %v2284 = vunpack.c.l.s4 1934713408
    %v2285 = vunpack.c.0.s8 %v2284
    %v2286 = vlaneseq
    %v2287 = vshrl.u32 %v2286, 7
    %v2288 = vsub.s32 %v2285, %v2287
    %v2289 = vrot.slane %v2281, %v2288
    %v2291 = vunpack.c.l.s4 1934713408
    %v2292 = vunpack.c.0.s8 %v2291
    %v2293 = vlaneseq
    %v2294 = vshrl.u32 %v2293, 7
    %v2295 = vsub.s32 %v2292, %v2294
    %v2296 = vrot.slane %v2282, %v2295
    %v2297 = vcombine.low %v2232, %v2248
    %v2298 = vcombine.high %v2232, %v2248
    %v2300 = vunpack.c.l.s4 1934713408
    %v2301 = vunpack.c.0.s8 %v2300
    %v2302 = vlaneseq
    %v2303 = vshrl.u32 %v2302, 7
    %v2304 = vsub.s32 %v2301, %v2303
    %v2305 = vrot.slane %v2297, %v2304
    %v2307 = vunpack.c.l.s4 1934713408
    %v2308 = vunpack.c.0.s8 %v2307
    %v2309 = vlaneseq
    %v2310 = vshrl.u32 %v2309, 7
    %v2311 = vsub.s32 %v2308, %v2310
    %v2312 = vrot.slane %v2298, %v2311
    %v2313 = vcombine.low %v2257, %v2289
    %v2314 = vcombine.high %v2257, %v2289
    %v2315 = vcombine.low %v2264, %v2296
    %v2316 = vcombine.high %v2264, %v2296
    %v2317 = vcombine.low %v2273, %v2305
    %v2318 = vcombine.high %v2273, %v2305
    %v2319 = vcombine.low %v2280, %v2312
    %v2320 = vcombine.high %v2280, %v2312
    %v2321 = vcombine.low %v1113, %v1145
    %v2322 = vcombine.high %v1113, %v1145
    %v2324 = vunpack.c.l.s4 1983009808
    %v2325 = vunpack.c.0.s8 %v2324
    %v2326 = vlaneseq
    %v2327 = vshrl.u32 %v2326, 7
    %v2328 = vsub.s32 %v2325, %v2327
    %v2329 = vrot.slane %v2321, %v2328
    %v2331 = vunpack.c.l.s4 1983009808
    %v2332 = vunpack.c.0.s8 %v2331
    %v2333 = vlaneseq
    %v2334 = vshrl.u32 %v2333, 7
    %v2335 = vsub.s32 %v2332, %v2334
    %v2336 = vrot.slane %v2322, %v2335
    %v2337 = vcombine.low %v1129, %v1161
    %v2338 = vcombine.high %v1129, %v1161
    %v2340 = vunpack.c.l.s4 1983009808
    %v2341 = vunpack.c.0.s8 %v2340
    %v2342 = vlaneseq
    %v2343 = vshrl.u32 %v2342, 7
    %v2344 = vsub.s32 %v2341, %v2343
    %v2345 = vrot.slane %v2337, %v2344
    %v2347 = vunpack.c.l.s4 1983009808
    %v2348 = vunpack.c.0.s8 %v2347
    %v2349 = vlaneseq
    %v2350 = vshrl.u32 %v2349, 7
    %v2351 = vsub.s32 %v2348, %v2350
    %v2352 = vrot.slane %v2338, %v2351
    %v2353 = vcombine.low %v1177, %v1209
    %v2354 = vcombine.high %v1177, %v1209
    %v2356 = vunpack.c.l.s4 1983009808
    %v2357 = vunpack.c.0.s8 %v2356
    %v2358 = vlaneseq
    %v2359 = vshrl.u32 %v2358, 7
    %v2360 = vsub.s32 %v2357, %v2359
    %v2361 = vrot.slane %v2353, %v2360
    %v2363 = vunpack.c.l.s4 1983009808
    %v2364 = vunpack.c.0.s8 %v2363
    %v2365 = vlaneseq
    %v2366 = vshrl.u32 %v2365, 7
    %v2367 = vsub.s32 %v2364, %v2366
    %v2368 = vrot.slane %v2354, %v2367
    %v2369 = vcombine.low %v1193, %v1225
    %v2370 = vcombine.high %v1193, %v1225
    %v2372 = vunpack.c.l.s4 1983009808
    %v2373 = vunpack.c.0.s8 %v2372
    %v2374 = vlaneseq
    %v2375 = vshrl.u32 %v2374, 7
    %v2376 = vsub.s32 %v2373, %v2375
    %v2377 = vrot.slane %v2369, %v2376
    %v2379 = vunpack.c.l.s4 1983009808
    %v2380 = vunpack.c.0.s8 %v2379
    %v2381 = vlaneseq
    %v2382 = vshrl.u32 %v2381, 7
    %v2383 = vsub.s32 %v2380, %v2382
    %v2384 = vrot.slane %v2370, %v2383
    %v2385 = vcombine.low %v2329, %v2345
    %v2386 = vcombine.high %v2329, %v2345
    %v2388 = vunpack.c.l.s4 1934713408
    %v2389 = vunpack.c.0.s8 %v2388
    %v2390 = vlaneseq
    %v2391 = vshrl.u32 %v2390, 7
    %v2392 = vsub.s32 %v2389, %v2391
    %v2393 = vrot.slane %v2385, %v2392
    %v2395 = vunpack.c.l.s4 1934713408
    %v2396 = vunpack.c.0.s8 %v2395
    %v2397 = vlaneseq
    %v2398 = vshrl.u32 %v2397, 7
    %v2399 = vsub.s32 %v2396, %v2398
    %v2400 = vrot.slane %v2386, %v2399
    %v2401 = vcombine.low %v2336, %v2352
    %v2402 = vcombine.high %v2336, %v2352
    %v2404 = vunpack.c.l.s4 1934713408
    %v2405 = vunpack.c.0.s8 %v2404
    %v2406 = vlaneseq
    %v2407 = vshrl.u32 %v2406, 7
    %v2408 = vsub.s32 %v2405, %v2407
    %v2409 = vrot.slane %v2401, %v2408
    %v2411 = vunpack.c.l.s4 1934713408
    %v2412 = vunpack.c.0.s8 %v2411
    %v2413 = vlaneseq
    %v2414 = vshrl.u32 %v2413, 7
    %v2415 = vsub.s32 %v2412, %v2414
    %v2416 = vrot.slane %v2402, %v2415
    %v2417 = vcombine.low %v2361, %v2377
    %v2418 = vcombine.high %v2361, %v2377
    %v2420 = vunpack.c.l.s4 1934713408
    %v2421 = vunpack.c.0.s8 %v2420
    %v2422 = vlaneseq
    %v2423 = vshrl.u32 %v2422, 7
    %v2424 = vsub.s32 %v2421, %v2423
    %v2425 = vrot.slane %v2417, %v2424
    %v2427 = vunpack.c.l.s4 1934713408
    %v2428 = vunpack.c.0.s8 %v2427
    %v2429 = vlaneseq
    %v2430 = vshrl.u32 %v2429, 7
    %v2431 = vsub.s32 %v2428, %v2430
    %v2432 = vrot.slane %v2418, %v2431
    %v2433 = vcombine.low %v2368, %v2384
    %v2434 = vcombine.high %v2368, %v2384
    %v2436 = vunpack.c.l.s4 1934713408
    %v2437 = vunpack.c.0.s8 %v2436
    %v2438 = vlaneseq
    %v2439 = vshrl.u32 %v2438, 7
    %v2440 = vsub.s32 %v2437, %v2439
    %v2441 = vrot.slane %v2433, %v2440
    %v2443 = vunpack.c.l.s4 1934713408
    %v2444 = vunpack.c.0.s8 %v2443
    %v2445 = vlaneseq
    %v2446 = vshrl.u32 %v2445, 7
    %v2447 = vsub.s32 %v2444, %v2446
    %v2448 = vrot.slane %v2434, %v2447
    %v2449 = vcombine.low %v2393, %v2425
    %v2450 = vcombine.high %v2393, %v2425
    %v2451 = vcombine.low %v2400, %v2432
    %v2452 = vcombine.high %v2400, %v2432
    %v2453 = vcombine.low %v2409, %v2441
    %v2454 = vcombine.high %v2409, %v2441
    %v2455 = vcombine.low %v2416, %v2448
    %v2456 = vcombine.high %v2416, %v2448
    %v2457 = vcombine.low %v1114, %v1146
    %v2458 = vcombine.high %v1114, %v1146
    %v2460 = vunpack.c.l.s4 1983009808
    %v2461 = vunpack.c.0.s8 %v2460
    %v2462 = vlaneseq
    %v2463 = vshrl.u32 %v2462, 7
    %v2464 = vsub.s32 %v2461, %v2463
    %v2465 = vrot.slane %v2457, %v2464
    %v2467 = vunpack.c.l.s4 1983009808
    %v2468 = vunpack.c.0.s8 %v2467
    %v2469 = vlaneseq
    %v2470 = vshrl.u32 %v2469, 7
    %v2471 = vsub.s32 %v2468, %v2470
    %v2472 = vrot.slane %v2458, %v2471
    %v2473 = vcombine.low %v1130, %v1162
    %v2474 = vcombine.high %v1130, %v1162
    %v2476 = vunpack.c.l.s4 1983009808
    %v2477 = vunpack.c.0.s8 %v2476
    %v2478 = vlaneseq
    %v2479 = vshrl.u32 %v2478, 7
    %v2480 = vsub.s32 %v2477, %v2479
    %v2481 = vrot.slane %v2473, %v2480
    %v2483 = vunpack.c.l.s4 1983009808
    %v2484 = vunpack.c.0.s8 %v2483
    %v2485 = vlaneseq
    %v2486 = vshrl.u32 %v2485, 7
    %v2487 = vsub.s32 %v2484, %v2486
    %v2488 = vrot.slane %v2474, %v2487
    %v2489 = vcombine.low %v1178, %v1210
    %v2490 = vcombine.high %v1178, %v1210
    %v2492 = vunpack.c.l.s4 1983009808
    %v2493 = vunpack.c.0.s8 %v2492
    %v2494 = vlaneseq
    %v2495 = vshrl.u32 %v2494, 7
    %v2496 = vsub.s32 %v2493, %v2495
    %v2497 = vrot.slane %v2489, %v2496
    %v2499 = vunpack.c.l.s4 1983009808
    %v2500 = vunpack.c.0.s8 %v2499
    %v2501 = vlaneseq
    %v2502 = vshrl.u32 %v2501, 7
    %v2503 = vsub.s32 %v2500, %v2502
    %v2504 = vrot.slane %v2490, %v2503
    %v2505 = vcombine.low %v1194, %v1226
    %v2506 = vcombine.high %v1194, %v1226
    %v2508 = vunpack.c.l.s4 1983009808
    %v2509 = vunpack.c.0.s8 %v2508
    %v2510 = vlaneseq
    %v2511 = vshrl.u32 %v2510, 7
    %v2512 = vsub.s32 %v2509, %v2511
    %v2513 = vrot.slane %v2505, %v2512
    %v2515 = vunpack.c.l.s4 1983009808
    %v2516 = vunpack.c.0.s8 %v2515
    %v2517 = vlaneseq
    %v2518 = vshrl.u32 %v2517, 7
    %v2519 = vsub.s32 %v2516, %v2518
    %v2520 = vrot.slane %v2506, %v2519
    %v2521 = vcombine.low %v2465, %v2481
    %v2522 = vcombine.high %v2465, %v2481
    %v2524 = vunpack.c.l.s4 1934713408
    %v2525 = vunpack.c.0.s8 %v2524
    %v2526 = vlaneseq
    %v2527 = vshrl.u32 %v2526, 7
    %v2528 = vsub.s32 %v2525, %v2527
    %v2529 = vrot.slane %v2521, %v2528
    %v2531 = vunpack.c.l.s4 1934713408
    %v2532 = vunpack.c.0.s8 %v2531
    %v2533 = vlaneseq
    %v2534 = vshrl.u32 %v2533, 7
    %v2535 = vsub.s32 %v2532, %v2534
    %v2536 = vrot.slane %v2522, %v2535
    %v2537 = vcombine.low %v2472, %v2488
    %v2538 = vcombine.high %v2472, %v2488
    %v2540 = vunpack.c.l.s4 1934713408
    %v2541 = vunpack.c.0.s8 %v2540
    %v2542 = vlaneseq
    %v2543 = vshrl.u32 %v2542, 7
    %v2544 = vsub.s32 %v2541, %v2543
    %v2545 = vrot.slane %v2537, %v2544
    %v2547 = vunpack.c.l.s4 1934713408
    %v2548 = vunpack.c.0.s8 %v2547
    %v2549 = vlaneseq
    %v2550 = vshrl.u32 %v2549, 7
    %v2551 = vsub.s32 %v2548, %v2550
    %v2552 = vrot.slane %v2538, %v2551
    %v2553 = vcombine.low %v2497, %v2513
    %v2554 = vcombine.high %v2497, %v2513
    %v2556 = vunpack.c.l.s4 1934713408
    %v2557 = vunpack.c.0.s8 %v2556
    %v2558 = vlaneseq
    %v2559 = vshrl.u32 %v2558, 7
    %v2560 = vsub.s32 %v2557, %v2559
    %v2561 = vrot.slane %v2553, %v2560
    %v2563 = vunpack.c.l.s4 1934713408
    %v2564 = vunpack.c.0.s8 %v2563
    %v2565 = vlaneseq
    %v2566 = vshrl.u32 %v2565, 7
    %v2567 = vsub.s32 %v2564, %v2566
    %v2568 = vrot.slane %v2554, %v2567
    %v2569 = vcombine.low %v2504, %v2520
    %v2570 = vcombine.high %v2504, %v2520
    %v2572 = vunpack.c.l.s4 1934713408
    %v2573 = vunpack.c.0.s8 %v2572
    %v2574 = vlaneseq
    %v2575 = vshrl.u32 %v2574, 7
    %v2576 = vsub.s32 %v2573, %v2575
    %v2577 = vrot.slane %v2569, %v2576
    %v2579 = vunpack.c.l.s4 1934713408
    %v2580 = vunpack.c.0.s8 %v2579
    %v2581 = vlaneseq
    %v2582 = vshrl.u32 %v2581, 7
    %v2583 = vsub.s32 %v2580, %v2582
    %v2584 = vrot.slane %v2570, %v2583
    %v2585 = vcombine.low %v2529, %v2561
    %v2586 = vcombine.high %v2529, %v2561
    %v2587 = vcombine.low %v2536, %v2568
    %v2588 = vcombine.high %v2536, %v2568
    %v2589 = vcombine.low %v2545, %v2577
    %v2590 = vcombine.high %v2545, %v2577
    %v2591 = vcombine.low %v2552, %v2584
    %v2592 = vcombine.high %v2552, %v2584
    %v2593 = vcombine.low %v1115, %v1147
    %v2594 = vcombine.high %v1115, %v1147
    %v2596 = vunpack.c.l.s4 1983009808
    %v2597 = vunpack.c.0.s8 %v2596
    %v2598 = vlaneseq
    %v2599 = vshrl.u32 %v2598, 7
    %v2600 = vsub.s32 %v2597, %v2599
    %v2601 = vrot.slane %v2593, %v2600
    %v2603 = vunpack.c.l.s4 1983009808
    %v2604 = vunpack.c.0.s8 %v2603
    %v2605 = vlaneseq
    %v2606 = vshrl.u32 %v2605, 7
    %v2607 = vsub.s32 %v2604, %v2606
    %v2608 = vrot.slane %v2594, %v2607
    %v2609 = vcombine.low %v1131, %v1163
    %v2610 = vcombine.high %v1131, %v1163
    %v2612 = vunpack.c.l.s4 1983009808
    %v2613 = vunpack.c.0.s8 %v2612
    %v2614 = vlaneseq
    %v2615 = vshrl.u32 %v2614, 7
    %v2616 = vsub.s32 %v2613, %v2615
    %v2617 = vrot.slane %v2609, %v2616
    %v2619 = vunpack.c.l.s4 1983009808
    %v2620 = vunpack.c.0.s8 %v2619
    %v2621 = vlaneseq
    %v2622 = vshrl.u32 %v2621, 7
    %v2623 = vsub.s32 %v2620, %v2622
    %v2624 = vrot.slane %v2610, %v2623
    %v2625 = vcombine.low %v1179, %v1211
    %v2626 = vcombine.high %v1179, %v1211
    %v2628 = vunpack.c.l.s4 1983009808
    %v2629 = vunpack.c.0.s8 %v2628
    %v2630 = vlaneseq
    %v2631 = vshrl.u32 %v2630, 7
    %v2632 = vsub.s32 %v2629, %v2631
    %v2633 = vrot.slane %v2625, %v2632
    %v2635 = vunpack.c.l.s4 1983009808
    %v2636 = vunpack.c.0.s8 %v2635
    %v2637 = vlaneseq
    %v2638 = vshrl.u32 %v2637, 7
    %v2639 = vsub.s32 %v2636, %v2638
    %v2640 = vrot.slane %v2626, %v2639
    %v2641 = vcombine.low %v1195, %v1227
    %v2642 = vcombine.high %v1195, %v1227
    %v2644 = vunpack.c.l.s4 1983009808
    %v2645 = vunpack.c.0.s8 %v2644
    %v2646 = vlaneseq
    %v2647 = vshrl.u32 %v2646, 7
    %v2648 = vsub.s32 %v2645, %v2647
    %v2649 = vrot.slane %v2641, %v2648
    %v2651 = vunpack.c.l.s4 1983009808
    %v2652 = vunpack.c.0.s8 %v2651
    %v2653 = vlaneseq
    %v2654 = vshrl.u32 %v2653, 7
    %v2655 = vsub.s32 %v2652, %v2654
    %v2656 = vrot.slane %v2642, %v2655
    %v2657 = vcombine.low %v2601, %v2617
    %v2658 = vcombine.high %v2601, %v2617
    %v2660 = vunpack.c.l.s4 1934713408
    %v2661 = vunpack.c.0.s8 %v2660
    %v2662 = vlaneseq
    %v2663 = vshrl.u32 %v2662, 7
    %v2664 = vsub.s32 %v2661, %v2663
    %v2665 = vrot.slane %v2657, %v2664
    %v2667 = vunpack.c.l.s4 1934713408
    %v2668 = vunpack.c.0.s8 %v2667
    %v2669 = vlaneseq
    %v2670 = vshrl.u32 %v2669, 7
    %v2671 = vsub.s32 %v2668, %v2670
    %v2672 = vrot.slane %v2658, %v2671
    %v2673 = vcombine.low %v2608, %v2624
    %v2674 = vcombine.high %v2608, %v2624
    %v2676 = vunpack.c.l.s4 1934713408
    %v2677 = vunpack.c.0.s8 %v2676
    %v2678 = vlaneseq
    %v2679 = vshrl.u32 %v2678, 7
    %v2680 = vsub.s32 %v2677, %v2679
    %v2681 = vrot.slane %v2673, %v2680
    %v2683 = vunpack.c.l.s4 1934713408
    %v2684 = vunpack.c.0.s8 %v2683
    %v2685 = vlaneseq
    %v2686 = vshrl.u32 %v2685, 7
    %v2687 = vsub.s32 %v2684, %v2686
    %v2688 = vrot.slane %v2674, %v2687
    %v2689 = vcombine.low %v2633, %v2649
    %v2690 = vcombine.high %v2633, %v2649
    %v2692 = vunpack.c.l.s4 1934713408
    %v2693 = vunpack.c.0.s8 %v2692
    %v2694 = vlaneseq
    %v2695 = vshrl.u32 %v2694, 7
    %v2696 = vsub.s32 %v2693, %v2695
    %v2697 = vrot.slane %v2689, %v2696
    %v2699 = vunpack.c.l.s4 1934713408
    %v2700 = vunpack.c.0.s8 %v2699
    %v2701 = vlaneseq
    %v2702 = vshrl.u32 %v2701, 7
    %v2703 = vsub.s32 %v2700, %v2702
    %v2704 = vrot.slane %v2690, %v2703
    %v2705 = vcombine.low %v2640, %v2656
    %v2706 = vcombine.high %v2640, %v2656
    %v2708 = vunpack.c.l.s4 1934713408
    %v2709 = vunpack.c.0.s8 %v2708
    %v2710 = vlaneseq
    %v2711 = vshrl.u32 %v2710, 7
    %v2712 = vsub.s32 %v2709, %v2711
    %v2713 = vrot.slane %v2705, %v2712
    %v2715 = vunpack.c.l.s4 1934713408
    %v2716 = vunpack.c.0.s8 %v2715
    %v2717 = vlaneseq
    %v2718 = vshrl.u32 %v2717, 7
    %v2719 = vsub.s32 %v2716, %v2718
    %v2720 = vrot.slane %v2706, %v2719
    %v2721 = vcombine.low %v2665, %v2697
    %v2722 = vcombine.high %v2665, %v2697
    %v2723 = vcombine.low %v2672, %v2704
    %v2724 = vcombine.high %v2672, %v2704
    %v2725 = vcombine.low %v2681, %v2713
    %v2726 = vcombine.high %v2681, %v2713
    %v2727 = vcombine.low %v2688, %v2720
    %v2728 = vcombine.high %v2688, %v2720
    %v2729 = vcombine.low %v1116, %v1148
    %v2730 = vcombine.high %v1116, %v1148
    %v2732 = vunpack.c.l.s4 1983009808
    %v2733 = vunpack.c.0.s8 %v2732
    %v2734 = vlaneseq
    %v2735 = vshrl.u32 %v2734, 7
    %v2736 = vsub.s32 %v2733, %v2735
    %v2737 = vrot.slane %v2729, %v2736
    %v2739 = vunpack.c.l.s4 1983009808
    %v2740 = vunpack.c.0.s8 %v2739
    %v2741 = vlaneseq
    %v2742 = vshrl.u32 %v2741, 7
    %v2743 = vsub.s32 %v2740, %v2742
    %v2744 = vrot.slane %v2730, %v2743
    %v2745 = vcombine.low %v1132, %v1164
    %v2746 = vcombine.high %v1132, %v1164
    %v2748 = vunpack.c.l.s4 1983009808
    %v2749 = vunpack.c.0.s8 %v2748
    %v2750 = vlaneseq
    %v2751 = vshrl.u32 %v2750, 7
    %v2752 = vsub.s32 %v2749, %v2751
    %v2753 = vrot.slane %v2745, %v2752
    %v2755 = vunpack.c.l.s4 1983009808
    %v2756 = vunpack.c.0.s8 %v2755
    %v2757 = vlaneseq
    %v2758 = vshrl.u32 %v2757, 7
    %v2759 = vsub.s32 %v2756, %v2758
    %v2760 = vrot.slane %v2746, %v2759
    %v2761 = vcombine.low %v1180, %v1212
    %v2762 = vcombine.high %v1180, %v1212
    %v2764 = vunpack.c.l.s4 1983009808
    %v2765 = vunpack.c.0.s8 %v2764
    %v2766 = vlaneseq
    %v2767 = vshrl.u32 %v2766, 7
    %v2768 = vsub.s32 %v2765, %v2767
    %v2769 = vrot.slane %v2761, %v2768
    %v2771 = vunpack.c.l.s4 1983009808
    %v2772 = vunpack.c.0.s8 %v2771
    %v2773 = vlaneseq
    %v2774 = vshrl.u32 %v2773, 7
    %v2775 = vsub.s32 %v2772, %v2774
    %v2776 = vrot.slane %v2762, %v2775
    %v2777 = vcombine.low %v1196, %v1228
    %v2778 = vcombine.high %v1196, %v1228
    %v2780 = vunpack.c.l.s4 1983009808
    %v2781 = vunpack.c.0.s8 %v2780
    %v2782 = vlaneseq
    %v2783 = vshrl.u32 %v2782, 7
    %v2784 = vsub.s32 %v2781, %v2783
    %v2785 = vrot.slane %v2777, %v2784
    %v2787 = vunpack.c.l.s4 1983009808
    %v2788 = vunpack.c.0.s8 %v2787
    %v2789 = vlaneseq
    %v2790 = vshrl.u32 %v2789, 7
    %v2791 = vsub.s32 %v2788, %v2790
    %v2792 = vrot.slane %v2778, %v2791
    %v2793 = vcombine.low %v2737, %v2753
    %v2794 = vcombine.high %v2737, %v2753
    %v2796 = vunpack.c.l.s4 1934713408
    %v2797 = vunpack.c.0.s8 %v2796
    %v2798 = vlaneseq
    %v2799 = vshrl.u32 %v2798, 7
    %v2800 = vsub.s32 %v2797, %v2799
    %v2801 = vrot.slane %v2793, %v2800
    %v2803 = vunpack.c.l.s4 1934713408
    %v2804 = vunpack.c.0.s8 %v2803
    %v2805 = vlaneseq
    %v2806 = vshrl.u32 %v2805, 7
    %v2807 = vsub.s32 %v2804, %v2806
    %v2808 = vrot.slane %v2794, %v2807
    %v2809 = vcombine.low %v2744, %v2760
    %v2810 = vcombine.high %v2744, %v2760
    %v2812 = vunpack.c.l.s4 1934713408
    %v2813 = vunpack.c.0.s8 %v2812
    %v2814 = vlaneseq
    %v2815 = vshrl.u32 %v2814, 7
    %v2816 = vsub.s32 %v2813, %v2815
    %v2817 = vrot.slane %v2809, %v2816
    %v2819 = vunpack.c.l.s4 1934713408
    %v2820 = vunpack.c.0.s8 %v2819
    %v2821 = vlaneseq
    %v2822 = vshrl.u32 %v2821, 7
    %v2823 = vsub.s32 %v2820, %v2822
    %v2824 = vrot.slane %v2810, %v2823
    %v2825 = vcombine.low %v2769, %v2785
    %v2826 = vcombine.high %v2769, %v2785
    %v2828 = vunpack.c.l.s4 1934713408
    %v2829 = vunpack.c.0.s8 %v2828
    %v2830 = vlaneseq
    %v2831 = vshrl.u32 %v2830, 7
    %v2832 = vsub.s32 %v2829, %v2831
    %v2833 = vrot.slane %v2825, %v2832
    %v2835 = vunpack.c.l.s4 1934713408
    %v2836 = vunpack.c.0.s8 %v2835
    %v2837 = vlaneseq
    %v2838 = vshrl.u32 %v2837, 7
    %v2839 = vsub.s32 %v2836, %v2838
    %v2840 = vrot.slane %v2826, %v2839
    %v2841 = vcombine.low %v2776, %v2792
    %v2842 = vcombine.high %v2776, %v2792
    %v2844 = vunpack.c.l.s4 1934713408
    %v2845 = vunpack.c.0.s8 %v2844
    %v2846 = vlaneseq
    %v2847 = vshrl.u32 %v2846, 7
    %v2848 = vsub.s32 %v2845, %v2847
    %v2849 = vrot.slane %v2841, %v2848
    %v2851 = vunpack.c.l.s4 1934713408
    %v2852 = vunpack.c.0.s8 %v2851
    %v2853 = vlaneseq
    %v2854 = vshrl.u32 %v2853, 7
    %v2855 = vsub.s32 %v2852, %v2854
    %v2856 = vrot.slane %v2842, %v2855
    %v2857 = vcombine.low %v2801, %v2833
    %v2858 = vcombine.high %v2801, %v2833
    %v2859 = vcombine.low %v2808, %v2840
    %v2860 = vcombine.high %v2808, %v2840
    %v2861 = vcombine.low %v2817, %v2849
    %v2862 = vcombine.high %v2817, %v2849
    %v2863 = vcombine.low %v2824, %v2856
    %v2864 = vcombine.high %v2824, %v2856
    %v2865 = vcombine.low %v1117, %v1149
    %v2866 = vcombine.high %v1117, %v1149
    %v2868 = vunpack.c.l.s4 1983009808
    %v2869 = vunpack.c.0.s8 %v2868
    %v2870 = vlaneseq
    %v2871 = vshrl.u32 %v2870, 7
    %v2872 = vsub.s32 %v2869, %v2871
    %v2873 = vrot.slane %v2865, %v2872
    %v2875 = vunpack.c.l.s4 1983009808
    %v2876 = vunpack.c.0.s8 %v2875
    %v2877 = vlaneseq
    %v2878 = vshrl.u32 %v2877, 7
    %v2879 = vsub.s32 %v2876, %v2878
    %v2880 = vrot.slane %v2866, %v2879
    %v2881 = vcombine.low %v1133, %v1165
    %v2882 = vcombine.high %v1133, %v1165
    %v2884 = vunpack.c.l.s4 1983009808
    %v2885 = vunpack.c.0.s8 %v2884
    %v2886 = vlaneseq
    %v2887 = vshrl.u32 %v2886, 7
    %v2888 = vsub.s32 %v2885, %v2887
    %v2889 = vrot.slane %v2881, %v2888
    %v2891 = vunpack.c.l.s4 1983009808
    %v2892 = vunpack.c.0.s8 %v2891
    %v2893 = vlaneseq
    %v2894 = vshrl.u32 %v2893, 7
    %v2895 = vsub.s32 %v2892, %v2894
    %v2896 = vrot.slane %v2882, %v2895
    %v2897 = vcombine.low %v1181, %v1213
    %v2898 = vcombine.high %v1181, %v1213
    %v2900 = vunpack.c.l.s4 1983009808
    %v2901 = vunpack.c.0.s8 %v2900
    %v2902 = vlaneseq
    %v2903 = vshrl.u32 %v2902, 7
    %v2904 = vsub.s32 %v2901, %v2903
    %v2905 = vrot.slane %v2897, %v2904
    %v2907 = vunpack.c.l.s4 1983009808
    %v2908 = vunpack.c.0.s8 %v2907
    %v2909 = vlaneseq
    %v2910 = vshrl.u32 %v2909, 7
    %v2911 = vsub.s32 %v2908, %v2910
    %v2912 = vrot.slane %v2898, %v2911
    %v2913 = vcombine.low %v1197, %v1229
    %v2914 = vcombine.high %v1197, %v1229
    %v2916 = vunpack.c.l.s4 1983009808
    %v2917 = vunpack.c.0.s8 %v2916
    %v2918 = vlaneseq
    %v2919 = vshrl.u32 %v2918, 7
    %v2920 = vsub.s32 %v2917, %v2919
    %v2921 = vrot.slane %v2913, %v2920
    %v2923 = vunpack.c.l.s4 1983009808
    %v2924 = vunpack.c.0.s8 %v2923
    %v2925 = vlaneseq
    %v2926 = vshrl.u32 %v2925, 7
    %v2927 = vsub.s32 %v2924, %v2926
    %v2928 = vrot.slane %v2914, %v2927
    %v2929 = vcombine.low %v2873, %v2889
    %v2930 = vcombine.high %v2873, %v2889
    %v2932 = vunpack.c.l.s4 1934713408
    %v2933 = vunpack.c.0.s8 %v2932
    %v2934 = vlaneseq
    %v2935 = vshrl.u32 %v2934, 7
    %v2936 = vsub.s32 %v2933, %v2935
    %v2937 = vrot.slane %v2929, %v2936
    %v2939 = vunpack.c.l.s4 1934713408
    %v2940 = vunpack.c.0.s8 %v2939
    %v2941 = vlaneseq
    %v2942 = vshrl.u32 %v2941, 7
    %v2943 = vsub.s32 %v2940, %v2942
    %v2944 = vrot.slane %v2930, %v2943
    %v2945 = vcombine.low %v2880, %v2896
    %v2946 = vcombine.high %v2880, %v2896
    %v2948 = vunpack.c.l.s4 1934713408
    %v2949 = vunpack.c.0.s8 %v2948
    %v2950 = vlaneseq
    %v2951 = vshrl.u32 %v2950, 7
    %v2952 = vsub.s32 %v2949, %v2951
    %v2953 = vrot.slane %v2945, %v2952
    %v2955 = vunpack.c.l.s4 1934713408
    %v2956 = vunpack.c.0.s8 %v2955
    %v2957 = vlaneseq
    %v2958 = vshrl.u32 %v2957, 7
    %v2959 = vsub.s32 %v2956, %v2958
    %v2960 = vrot.slane %v2946, %v2959
    %v2961 = vcombine.low %v2905, %v2921
    %v2962 = vcombine.high %v2905, %v2921
    %v2964 = vunpack.c.l.s4 1934713408
    %v2965 = vunpack.c.0.s8 %v2964
    %v2966 = vlaneseq
    %v2967 = vshrl.u32 %v2966, 7
    %v2968 = vsub.s32 %v2965, %v2967
    %v2969 = vrot.slane %v2961, %v2968
    %v2971 = vunpack.c.l.s4 1934713408
    %v2972 = vunpack.c.0.s8 %v2971
    %v2973 = vlaneseq
    %v2974 = vshrl.u32 %v2973, 7
    %v2975 = vsub.s32 %v2972, %v2974
    %v2976 = vrot.slane %v2962, %v2975
    %v2977 = vcombine.low %v2912, %v2928
    %v2978 = vcombine.high %v2912, %v2928
    %v2980 = vunpack.c.l.s4 1934713408
    %v2981 = vunpack.c.0.s8 %v2980
    %v2982 = vlaneseq
    %v2983 = vshrl.u32 %v2982, 7
    %v2984 = vsub.s32 %v2981, %v2983
    %v2985 = vrot.slane %v2977, %v2984
    %v2987 = vunpack.c.l.s4 1934713408
    %v2988 = vunpack.c.0.s8 %v2987
    %v2989 = vlaneseq
    %v2990 = vshrl.u32 %v2989, 7
    %v2991 = vsub.s32 %v2988, %v2990
    %v2992 = vrot.slane %v2978, %v2991
    %v2993 = vcombine.low %v2937, %v2969
    %v2994 = vcombine.high %v2937, %v2969
    %v2995 = vcombine.low %v2944, %v2976
    %v2996 = vcombine.high %v2944, %v2976
    %v2997 = vcombine.low %v2953, %v2985
    %v2998 = vcombine.high %v2953, %v2985
    %v2999 = vcombine.low %v2960, %v2992
    %v3000 = vcombine.high %v2960, %v2992
    %v3001 = vcombine.low %v1118, %v1150
    %v3002 = vcombine.high %v1118, %v1150
    %v3004 = vunpack.c.l.s4 1983009808
    %v3005 = vunpack.c.0.s8 %v3004
    %v3006 = vlaneseq
    %v3007 = vshrl.u32 %v3006, 7
    %v3008 = vsub.s32 %v3005, %v3007
    %v3009 = vrot.slane %v3001, %v3008
    %v3011 = vunpack.c.l.s4 1983009808
    %v3012 = vunpack.c.0.s8 %v3011
    %v3013 = vlaneseq
    %v3014 = vshrl.u32 %v3013, 7
    %v3015 = vsub.s32 %v3012, %v3014
    %v3016 = vrot.slane %v3002, %v3015
    %v3017 = vcombine.low %v1134, %v1166
    %v3018 = vcombine.high %v1134, %v1166
    %v3020 = vunpack.c.l.s4 1983009808
    %v3021 = vunpack.c.0.s8 %v3020
    %v3022 = vlaneseq
    %v3023 = vshrl.u32 %v3022, 7
    %v3024 = vsub.s32 %v3021, %v3023
    %v3025 = vrot.slane %v3017, %v3024
    %v3027 = vunpack.c.l.s4 1983009808
    %v3028 = vunpack.c.0.s8 %v3027
    %v3029 = vlaneseq
    %v3030 = vshrl.u32 %v3029, 7
    %v3031 = vsub.s32 %v3028, %v3030
    %v3032 = vrot.slane %v3018, %v3031
    %v3033 = vcombine.low %v1182, %v1214
    %v3034 = vcombine.high %v1182, %v1214
    %v3036 = vunpack.c.l.s4 1983009808
    %v3037 = vunpack.c.0.s8 %v3036
    %v3038 = vlaneseq
    %v3039 = vshrl.u32 %v3038, 7
    %v3040 = vsub.s32 %v3037, %v3039
    %v3041 = vrot.slane %v3033, %v3040
    %v3043 = vunpack.c.l.s4 1983009808
    %v3044 = vunpack.c.0.s8 %v3043
    %v3045 = vlaneseq
    %v3046 = vshrl.u32 %v3045, 7
    %v3047 = vsub.s32 %v3044, %v3046
    %v3048 = vrot.slane %v3034, %v3047
    %v3049 = vcombine.low %v1198, %v1230
    %v3050 = vcombine.high %v1198, %v1230
    %v3052 = vunpack.c.l.s4 1983009808
    %v3053 = vunpack.c.0.s8 %v3052
    %v3054 = vlaneseq
    %v3055 = vshrl.u32 %v3054, 7
    %v3056 = vsub.s32 %v3053, %v3055
    %v3057 = vrot.slane %v3049, %v3056
    %v3059 = vunpack.c.l.s4 1983009808
    %v3060 = vunpack.c.0.s8 %v3059
    %v3061 = vlaneseq
    %v3062 = vshrl.u32 %v3061, 7
    %v3063 = vsub.s32 %v3060, %v3062
    %v3064 = vrot.slane %v3050, %v3063
    %v3065 = vcombine.low %v3009, %v3025
    %v3066 = vcombine.high %v3009, %v3025
    %v3068 = vunpack.c.l.s4 1934713408
    %v3069 = vunpack.c.0.s8 %v3068
    %v3070 = vlaneseq
    %v3071 = vshrl.u32 %v3070, 7
    %v3072 = vsub.s32 %v3069, %v3071
    %v3073 = vrot.slane %v3065, %v3072
    %v3075 = vunpack.c.l.s4 1934713408
    %v3076 = vunpack.c.0.s8 %v3075
    %v3077 = vlaneseq
    %v3078 = vshrl.u32 %v3077, 7
    %v3079 = vsub.s32 %v3076, %v3078
    %v3080 = vrot.slane %v3066, %v3079
    %v3081 = vcombine.low %v3016, %v3032
    %v3082 = vcombine.high %v3016, %v3032
    %v3084 = vunpack.c.l.s4 1934713408
    %v3085 = vunpack.c.0.s8 %v3084
    %v3086 = vlaneseq
    %v3087 = vshrl.u32 %v3086, 7
    %v3088 = vsub.s32 %v3085, %v3087
    %v3089 = vrot.slane %v3081, %v3088
    %v3091 = vunpack.c.l.s4 1934713408
    %v3092 = vunpack.c.0.s8 %v3091
    %v3093 = vlaneseq
    %v3094 = vshrl.u32 %v3093, 7
    %v3095 = vsub.s32 %v3092, %v3094
    %v3096 = vrot.slane %v3082, %v3095
    %v3097 = vcombine.low %v3041, %v3057
    %v3098 = vcombine.high %v3041, %v3057
    %v3100 = vunpack.c.l.s4 1934713408
    %v3101 = vunpack.c.0.s8 %v3100
    %v3102 = vlaneseq
    %v3103 = vshrl.u32 %v3102, 7
    %v3104 = vsub.s32 %v3101, %v3103
    %v3105 = vrot.slane %v3097, %v3104
    %v3107 = vunpack.c.l.s4 1934713408
    %v3108 = vunpack.c.0.s8 %v3107
    %v3109 = vlaneseq
    %v3110 = vshrl.u32 %v3109, 7
    %v3111 = vsub.s32 %v3108, %v3110
    %v3112 = vrot.slane %v3098, %v3111
    %v3113 = vcombine.low %v3048, %v3064
    %v3114 = vcombine.high %v3048, %v3064
    %v3116 = vunpack.c.l.s4 1934713408
    %v3117 = vunpack.c.0.s8 %v3116
    %v3118 = vlaneseq
    %v3119 = vshrl.u32 %v3118, 7
    %v3120 = vsub.s32 %v3117, %v3119
    %v3121 = vrot.slane %v3113, %v3120
    %v3123 = vunpack.c.l.s4 1934713408
    %v3124 = vunpack.c.0.s8 %v3123
    %v3125 = vlaneseq
    %v3126 = vshrl.u32 %v3125, 7
    %v3127 = vsub.s32 %v3124, %v3126
    %v3128 = vrot.slane %v3114, %v3127
    %v3129 = vcombine.low %v3073, %v3105
    %v3130 = vcombine.high %v3073, %v3105
    %v3131 = vcombine.low %v3080, %v3112
    %v3132 = vcombine.high %v3080, %v3112
    %v3133 = vcombine.low %v3089, %v3121
    %v3134 = vcombine.high %v3089, %v3121
    %v3135 = vcombine.low %v3096, %v3128
    %v3136 = vcombine.high %v3096, %v3128
    %v3137 = vcombine.low %v1119, %v1151
    %v3138 = vcombine.high %v1119, %v1151
    %v3140 = vunpack.c.l.s4 1983009808
    %v3141 = vunpack.c.0.s8 %v3140
    %v3142 = vlaneseq
    %v3143 = vshrl.u32 %v3142, 7
    %v3144 = vsub.s32 %v3141, %v3143
    %v3145 = vrot.slane %v3137, %v3144
    %v3147 = vunpack.c.l.s4 1983009808
    %v3148 = vunpack.c.0.s8 %v3147
    %v3149 = vlaneseq
    %v3150 = vshrl.u32 %v3149, 7
    %v3151 = vsub.s32 %v3148, %v3150
    %v3152 = vrot.slane %v3138, %v3151
    %v3153 = vcombine.low %v1135, %v1167
    %v3154 = vcombine.high %v1135, %v1167
    %v3156 = vunpack.c.l.s4 1983009808
    %v3157 = vunpack.c.0.s8 %v3156
    %v3158 = vlaneseq
    %v3159 = vshrl.u32 %v3158, 7
    %v3160 = vsub.s32 %v3157, %v3159
    %v3161 = vrot.slane %v3153, %v3160
    %v3163 = vunpack.c.l.s4 1983009808
    %v3164 = vunpack.c.0.s8 %v3163
    %v3165 = vlaneseq
    %v3166 = vshrl.u32 %v3165, 7
    %v3167 = vsub.s32 %v3164, %v3166
    %v3168 = vrot.slane %v3154, %v3167
    %v3169 = vcombine.low %v1183, %v1215
    %v3170 = vcombine.high %v1183, %v1215
    %v3172 = vunpack.c.l.s4 1983009808
    %v3173 = vunpack.c.0.s8 %v3172
    %v3174 = vlaneseq
    %v3175 = vshrl.u32 %v3174, 7
    %v3176 = vsub.s32 %v3173, %v3175
    %v3177 = vrot.slane %v3169, %v3176
    %v3179 = vunpack.c.l.s4 1983009808
    %v3180 = vunpack.c.0.s8 %v3179
    %v3181 = vlaneseq
    %v3182 = vshrl.u32 %v3181, 7
    %v3183 = vsub.s32 %v3180, %v3182
    %v3184 = vrot.slane %v3170, %v3183
    %v3185 = vcombine.low %v1199, %v1231
    %v3186 = vcombine.high %v1199, %v1231
    %v3188 = vunpack.c.l.s4 1983009808
    %v3189 = vunpack.c.0.s8 %v3188
    %v3190 = vlaneseq
    %v3191 = vshrl.u32 %v3190, 7
    %v3192 = vsub.s32 %v3189, %v3191
    %v3193 = vrot.slane %v3185, %v3192
    %v3195 = vunpack.c.l.s4 1983009808
    %v3196 = vunpack.c.0.s8 %v3195
    %v3197 = vlaneseq
    %v3198 = vshrl.u32 %v3197, 7
    %v3199 = vsub.s32 %v3196, %v3198
    %v3200 = vrot.slane %v3186, %v3199
    %v3201 = vcombine.low %v3145, %v3161
    %v3202 = vcombine.high %v3145, %v3161
    %v3204 = vunpack.c.l.s4 1934713408
    %v3205 = vunpack.c.0.s8 %v3204
    %v3206 = vlaneseq
    %v3207 = vshrl.u32 %v3206, 7
    %v3208 = vsub.s32 %v3205, %v3207
    %v3209 = vrot.slane %v3201, %v3208
    %v3211 = vunpack.c.l.s4 1934713408
    %v3212 = vunpack.c.0.s8 %v3211
    %v3213 = vlaneseq
    %v3214 = vshrl.u32 %v3213, 7
    %v3215 = vsub.s32 %v3212, %v3214
    %v3216 = vrot.slane %v3202, %v3215
    %v3217 = vcombine.low %v3152, %v3168
    %v3218 = vcombine.high %v3152, %v3168
    %v3220 = vunpack.c.l.s4 1934713408
    %v3221 = vunpack.c.0.s8 %v3220
    %v3222 = vlaneseq
    %v3223 = vshrl.u32 %v3222, 7
    %v3224 = vsub.s32 %v3221, %v3223
    %v3225 = vrot.slane %v3217, %v3224
    %v3227 = vunpack.c.l.s4 1934713408
    %v3228 = vunpack.c.0.s8 %v3227
    %v3229 = vlaneseq
    %v3230 = vshrl.u32 %v3229, 7
    %v3231 = vsub.s32 %v3228, %v3230
    %v3232 = vrot.slane %v3218, %v3231
    %v3233 = vcombine.low %v3177, %v3193
    %v3234 = vcombine.high %v3177, %v3193
    %v3236 = vunpack.c.l.s4 1934713408
    %v3237 = vunpack.c.0.s8 %v3236
    %v3238 = vlaneseq
    %v3239 = vshrl.u32 %v3238, 7
    %v3240 = vsub.s32 %v3237, %v3239
    %v3241 = vrot.slane %v3233, %v3240
    %v3243 = vunpack.c.l.s4 1934713408
    %v3244 = vunpack.c.0.s8 %v3243
    %v3245 = vlaneseq
    %v3246 = vshrl.u32 %v3245, 7
    %v3247 = vsub.s32 %v3244, %v3246
    %v3248 = vrot.slane %v3234, %v3247
    %v3249 = vcombine.low %v3184, %v3200
    %v3250 = vcombine.high %v3184, %v3200
    %v3252 = vunpack.c.l.s4 1934713408
    %v3253 = vunpack.c.0.s8 %v3252
    %v3254 = vlaneseq
    %v3255 = vshrl.u32 %v3254, 7
    %v3256 = vsub.s32 %v3253, %v3255
    %v3257 = vrot.slane %v3249, %v3256
    %v3259 = vunpack.c.l.s4 1934713408
    %v3260 = vunpack.c.0.s8 %v3259
    %v3261 = vlaneseq
    %v3262 = vshrl.u32 %v3261, 7
    %v3263 = vsub.s32 %v3260, %v3262
    %v3264 = vrot.slane %v3250, %v3263
    %v3265 = vcombine.low %v3209, %v3241
    %v3266 = vcombine.high %v3209, %v3241
    %v3267 = vcombine.low %v3216, %v3248
    %v3268 = vcombine.high %v3216, %v3248
    %v3269 = vcombine.low %v3225, %v3257
    %v3270 = vcombine.high %v3225, %v3257
    %v3271 = vcombine.low %v3232, %v3264
    %v3272 = vcombine.high %v3232, %v3264
    %v3273 = vcombine.low %v1120, %v1152
    %v3274 = vcombine.high %v1120, %v1152
    %v3276 = vunpack.c.l.s4 1983009808
    %v3277 = vunpack.c.0.s8 %v3276
    %v3278 = vlaneseq
    %v3279 = vshrl.u32 %v3278, 7
    %v3280 = vsub.s32 %v3277, %v3279
    %v3281 = vrot.slane %v3273, %v3280
    %v3283 = vunpack.c.l.s4 1983009808
    %v3284 = vunpack.c.0.s8 %v3283
    %v3285 = vlaneseq
    %v3286 = vshrl.u32 %v3285, 7
    %v3287 = vsub.s32 %v3284, %v3286
    %v3288 = vrot.slane %v3274, %v3287
    %v3289 = vcombine.low %v1136, %v1168
    %v3290 = vcombine.high %v1136, %v1168
    %v3292 = vunpack.c.l.s4 1983009808
    %v3293 = vunpack.c.0.s8 %v3292
    %v3294 = vlaneseq
    %v3295 = vshrl.u32 %v3294, 7
    %v3296 = vsub.s32 %v3293, %v3295
    %v3297 = vrot.slane %v3289, %v3296
    %v3299 = vunpack.c.l.s4 1983009808
    %v3300 = vunpack.c.0.s8 %v3299
    %v3301 = vlaneseq
    %v3302 = vshrl.u32 %v3301, 7
    %v3303 = vsub.s32 %v3300, %v3302
    %v3304 = vrot.slane %v3290, %v3303
    %v3305 = vcombine.low %v1184, %v1216
    %v3306 = vcombine.high %v1184, %v1216
    %v3308 = vunpack.c.l.s4 1983009808
    %v3309 = vunpack.c.0.s8 %v3308
    %v3310 = vlaneseq
    %v3311 = vshrl.u32 %v3310, 7
    %v3312 = vsub.s32 %v3309, %v3311
    %v3313 = vrot.slane %v3305, %v3312
    %v3315 = vunpack.c.l.s4 1983009808
    %v3316 = vunpack.c.0.s8 %v3315
    %v3317 = vlaneseq
    %v3318 = vshrl.u32 %v3317, 7
    %v3319 = vsub.s32 %v3316, %v3318
    %v3320 = vrot.slane %v3306, %v3319
    %v3321 = vcombine.low %v1200, %v1232
    %v3322 = vcombine.high %v1200, %v1232
    %v3324 = vunpack.c.l.s4 1983009808
    %v3325 = vunpack.c.0.s8 %v3324
    %v3326 = vlaneseq
    %v3327 = vshrl.u32 %v3326, 7
    %v3328 = vsub.s32 %v3325, %v3327
    %v3329 = vrot.slane %v3321, %v3328
    %v3331 = vunpack.c.l.s4 1983009808
    %v3332 = vunpack.c.0.s8 %v3331
    %v3333 = vlaneseq
    %v3334 = vshrl.u32 %v3333, 7
    %v3335 = vsub.s32 %v3332, %v3334
    %v3336 = vrot.slane %v3322, %v3335
    %v3337 = vcombine.low %v3281, %v3297
    %v3338 = vcombine.high %v3281, %v3297
    %v3340 = vunpack.c.l.s4 1934713408
    %v3341 = vunpack.c.0.s8 %v3340
    %v3342 = vlaneseq
    %v3343 = vshrl.u32 %v3342, 7
    %v3344 = vsub.s32 %v3341, %v3343
    %v3345 = vrot.slane %v3337, %v3344
    %v3347 = vunpack.c.l.s4 1934713408
    %v3348 = vunpack.c.0.s8 %v3347
    %v3349 = vlaneseq
    %v3350 = vshrl.u32 %v3349, 7
    %v3351 = vsub.s32 %v3348, %v3350
    %v3352 = vrot.slane %v3338, %v3351
    %v3353 = vcombine.low %v3288, %v3304
    %v3354 = vcombine.high %v3288, %v3304
    %v3356 = vunpack.c.l.s4 1934713408
    %v3357 = vunpack.c.0.s8 %v3356
    %v3358 = vlaneseq
    %v3359 = vshrl.u32 %v3358, 7
    %v3360 = vsub.s32 %v3357, %v3359
    %v3361 = vrot.slane %v3353, %v3360
    %v3363 = vunpack.c.l.s4 1934713408
    %v3364 = vunpack.c.0.s8 %v3363
    %v3365 = vlaneseq
    %v3366 = vshrl.u32 %v3365, 7
    %v3367 = vsub.s32 %v3364, %v3366
    %v3368 = vrot.slane %v3354, %v3367
    %v3369 = vcombine.low %v3313, %v3329
    %v3370 = vcombine.high %v3313, %v3329
    %v3372 = vunpack.c.l.s4 1934713408
    %v3373 = vunpack.c.0.s8 %v3372
    %v3374 = vlaneseq
    %v3375 = vshrl.u32 %v3374, 7
    %v3376 = vsub.s32 %v3373, %v3375
    %v3377 = vrot.slane %v3369, %v3376
    %v3379 = vunpack.c.l.s4 1934713408
    %v3380 = vunpack.c.0.s8 %v3379
    %v3381 = vlaneseq
    %v3382 = vshrl.u32 %v3381, 7
    %v3383 = vsub.s32 %v3380, %v3382
    %v3384 = vrot.slane %v3370, %v3383
    %v3385 = vcombine.low %v3320, %v3336
    %v3386 = vcombine.high %v3320, %v3336
    %v3388 = vunpack.c.l.s4 1934713408
    %v3389 = vunpack.c.0.s8 %v3388
    %v3390 = vlaneseq
    %v3391 = vshrl.u32 %v3390, 7
    %v3392 = vsub.s32 %v3389, %v3391
    %v3393 = vrot.slane %v3385, %v3392
    %v3395 = vunpack.c.l.s4 1934713408
    %v3396 = vunpack.c.0.s8 %v3395
    %v3397 = vlaneseq
    %v3398 = vshrl.u32 %v3397, 7
    %v3399 = vsub.s32 %v3396, %v3398
    %v3400 = vrot.slane %v3386, %v3399
    %v3401 = vcombine.low %v3345, %v3377
    %v3402 = vcombine.high %v3345, %v3377
    %v3403 = vcombine.low %v3352, %v3384
    %v3404 = vcombine.high %v3352, %v3384
    %v3405 = vcombine.low %v3361, %v3393
    %v3406 = vcombine.high %v3361, %v3393
    %v3407 = vcombine.low %v3368, %v3400
    %v3408 = vcombine.high %v3368, %v3400
    %3410 = vrot.lane.b32.xlu0 %v1362, 2
    %v3411 = vpop.permute.xlu0 %3410
    %3414 = vrot.lane.b32.xlu0 %v1363, 4
    %v3415 = vpop.permute.xlu0 %3414
    %3418 = vrot.lane.b32.xlu0 %v1364, 6
    %v3419 = vpop.permute.xlu0 %3418
    %3422 = vrot.lane.b32.xlu0 %v1365, 8
    %v3423 = vpop.permute.xlu0 %3422
    %3426 = vrot.lane.b32.xlu0 %v1366, 10
    %v3427 = vpop.permute.xlu0 %3426
    %3430 = vrot.lane.b32.xlu0 %v1367, 12
    %v3431 = vpop.permute.xlu0 %3430
    %3434 = vrot.lane.b32.xlu0 %v1368, 14
    %v3435 = vpop.permute.xlu0 %3434
    %3438 = vrot.lane.b32.xlu0 %v1497, 16
    %v3439 = vpop.permute.xlu0 %3438
    %3442 = vrot.lane.b32.xlu0 %v1498, 18
    %v3443 = vpop.permute.xlu0 %3442
    %3446 = vrot.lane.b32.xlu0 %v1499, 20
    %v3447 = vpop.permute.xlu0 %3446
    %3450 = vrot.lane.b32.xlu0 %v1500, 22
    %v3451 = vpop.permute.xlu0 %3450
    %3454 = vrot.lane.b32.xlu0 %v1501, 24
    %v3455 = vpop.permute.xlu0 %3454
    %3458 = vrot.lane.b32.xlu0 %v1502, 26
    %v3459 = vpop.permute.xlu0 %3458
    %3462 = vrot.lane.b32.xlu0 %v1503, 28
    %v3463 = vpop.permute.xlu0 %3462
    %3466 = vrot.lane.b32.xlu0 %v1504, 30
    %v3467 = vpop.permute.xlu0 %3466
    %3470 = vrot.lane.b32.xlu0 %v1633, 32
    %v3471 = vpop.permute.xlu0 %3470
    %3474 = vrot.lane.b32.xlu0 %v1634, 34
    %v3475 = vpop.permute.xlu0 %3474
    %3478 = vrot.lane.b32.xlu0 %v1635, 36
    %v3479 = vpop.permute.xlu0 %3478
    %3482 = vrot.lane.b32.xlu0 %v1636, 38
    %v3483 = vpop.permute.xlu0 %3482
    %3486 = vrot.lane.b32.xlu0 %v1637, 40
    %v3487 = vpop.permute.xlu0 %3486
    %3490 = vrot.lane.b32.xlu0 %v1638, 42
    %v3491 = vpop.permute.xlu0 %3490
    %3494 = vrot.lane.b32.xlu0 %v1639, 44
    %v3495 = vpop.permute.xlu0 %3494
    %3498 = vrot.lane.b32.xlu0 %v1640, 46
    %v3499 = vpop.permute.xlu0 %3498
    %3502 = vrot.lane.b32.xlu0 %v1769, 48
    %v3503 = vpop.permute.xlu0 %3502
    %3506 = vrot.lane.b32.xlu0 %v1770, 50
    %v3507 = vpop.permute.xlu0 %3506
    %3510 = vrot.lane.b32.xlu0 %v1771, 52
    %v3511 = vpop.permute.xlu0 %3510
    %3514 = vrot.lane.b32.xlu0 %v1772, 54
    %v3515 = vpop.permute.xlu0 %3514
    %3518 = vrot.lane.b32.xlu0 %v1773, 56
    %v3519 = vpop.permute.xlu0 %3518
    %3522 = vrot.lane.b32.xlu0 %v1774, 58
    %v3523 = vpop.permute.xlu0 %3522
    %3526 = vrot.lane.b32.xlu0 %v1775, 60
    %v3527 = vpop.permute.xlu0 %3526
    %3530 = vrot.lane.b32.xlu0 %v1776, 62
    %v3531 = vpop.permute.xlu0 %3530
    %3534 = vrot.lane.b32.xlu0 %v1905, 64
    %v3535 = vpop.permute.xlu0 %3534
    %3538 = vrot.lane.b32.xlu0 %v1906, 66
    %v3539 = vpop.permute.xlu0 %3538
    %3542 = vrot.lane.b32.xlu0 %v1907, 68
    %v3543 = vpop.permute.xlu0 %3542
    %3546 = vrot.lane.b32.xlu0 %v1908, 70
    %v3547 = vpop.permute.xlu0 %3546
    %3550 = vrot.lane.b32.xlu0 %v1909, 72
    %v3551 = vpop.permute.xlu0 %3550
    %3554 = vrot.lane.b32.xlu0 %v1910, 74
    %v3555 = vpop.permute.xlu0 %3554
    %3558 = vrot.lane.b32.xlu0 %v1911, 76
    %v3559 = vpop.permute.xlu0 %3558
    %3562 = vrot.lane.b32.xlu0 %v1912, 78
    %v3563 = vpop.permute.xlu0 %3562
    %3566 = vrot.lane.b32.xlu0 %v2041, 80
    %v3567 = vpop.permute.xlu0 %3566
    %3570 = vrot.lane.b32.xlu0 %v2042, 82
    %v3571 = vpop.permute.xlu0 %3570
    %3574 = vrot.lane.b32.xlu0 %v2043, 84
    %v3575 = vpop.permute.xlu0 %3574
    %3578 = vrot.lane.b32.xlu0 %v2044, 86
    %v3579 = vpop.permute.xlu0 %3578
    %3582 = vrot.lane.b32.xlu0 %v2045, 88
    %v3583 = vpop.permute.xlu0 %3582
    %3586 = vrot.lane.b32.xlu0 %v2046, 90
    %v3587 = vpop.permute.xlu0 %3586
    %3590 = vrot.lane.b32.xlu0 %v2047, 92
    %v3591 = vpop.permute.xlu0 %3590
    %3594 = vrot.lane.b32.xlu0 %v2048, 94
    %v3595 = vpop.permute.xlu0 %3594
    %3598 = vrot.lane.b32.xlu0 %v2177, 96
    %v3599 = vpop.permute.xlu0 %3598
    %3602 = vrot.lane.b32.xlu0 %v2178, 98
    %v3603 = vpop.permute.xlu0 %3602
    %3606 = vrot.lane.b32.xlu0 %v2179, 100
    %v3607 = vpop.permute.xlu0 %3606
    %3610 = vrot.lane.b32.xlu0 %v2180, 102
    %v3611 = vpop.permute.xlu0 %3610
    %3614 = vrot.lane.b32.xlu0 %v2181, 104
    %v3615 = vpop.permute.xlu0 %3614
    %3618 = vrot.lane.b32.xlu0 %v2182, 106
    %v3619 = vpop.permute.xlu0 %3618
    %3622 = vrot.lane.b32.xlu0 %v2183, 108
    %v3623 = vpop.permute.xlu0 %3622
    %3626 = vrot.lane.b32.xlu0 %v2184, 110
    %v3627 = vpop.permute.xlu0 %3626
    %3630 = vrot.lane.b32.xlu0 %v2313, 112
    %v3631 = vpop.permute.xlu0 %3630
    %3634 = vrot.lane.b32.xlu0 %v2314, 114
    %v3635 = vpop.permute.xlu0 %3634
    %3638 = vrot.lane.b32.xlu0 %v2315, 116
    %v3639 = vpop.permute.xlu0 %3638
    %3642 = vrot.lane.b32.xlu0 %v2316, 118
    %v3643 = vpop.permute.xlu0 %3642
    %3646 = vrot.lane.b32.xlu0 %v2317, 120
    %v3647 = vpop.permute.xlu0 %3646
    %3650 = vrot.lane.b32.xlu0 %v2318, 122
    %v3651 = vpop.permute.xlu0 %3650
    %3654 = vrot.lane.b32.xlu0 %v2319, 124
    %v3655 = vpop.permute.xlu0 %3654
    %3658 = vrot.lane.b32.xlu0 %v2320, 126
    %v3659 = vpop.permute.xlu0 %3658
    %3662 = vrot.lane.b32.xlu0 %v2450, 2
    %v3663 = vpop.permute.xlu0 %3662
    %3666 = vrot.lane.b32.xlu0 %v2451, 4
    %v3667 = vpop.permute.xlu0 %3666
    %3670 = vrot.lane.b32.xlu0 %v2452, 6
    %v3671 = vpop.permute.xlu0 %3670
    %3674 = vrot.lane.b32.xlu0 %v2453, 8
    %v3675 = vpop.permute.xlu0 %3674
    %3678 = vrot.lane.b32.xlu0 %v2454, 10
    %v3679 = vpop.permute.xlu0 %3678
    %3682 = vrot.lane.b32.xlu0 %v2455, 12
    %v3683 = vpop.permute.xlu0 %3682
    %3686 = vrot.lane.b32.xlu0 %v2456, 14
    %v3687 = vpop.permute.xlu0 %3686
    %3690 = vrot.lane.b32.xlu0 %v2585, 16
    %v3691 = vpop.permute.xlu0 %3690
    %3694 = vrot.lane.b32.xlu0 %v2586, 18
    %v3695 = vpop.permute.xlu0 %3694
    %3698 = vrot.lane.b32.xlu0 %v2587, 20
    %v3699 = vpop.permute.xlu0 %3698
    %3702 = vrot.lane.b32.xlu0 %v2588, 22
    %v3703 = vpop.permute.xlu0 %3702
    %3706 = vrot.lane.b32.xlu0 %v2589, 24
    %v3707 = vpop.permute.xlu0 %3706
    %3710 = vrot.lane.b32.xlu0 %v2590, 26
    %v3711 = vpop.permute.xlu0 %3710
    %3714 = vrot.lane.b32.xlu0 %v2591, 28
    %v3715 = vpop.permute.xlu0 %3714
    %3718 = vrot.lane.b32.xlu0 %v2592, 30
    %v3719 = vpop.permute.xlu0 %3718
    %3722 = vrot.lane.b32.xlu0 %v2721, 32
    %v3723 = vpop.permute.xlu0 %3722
    %3726 = vrot.lane.b32.xlu0 %v2722, 34
    %v3727 = vpop.permute.xlu0 %3726
    %3730 = vrot.lane.b32.xlu0 %v2723, 36
    %v3731 = vpop.permute.xlu0 %3730
    %3734 = vrot.lane.b32.xlu0 %v2724, 38
    %v3735 = vpop.permute.xlu0 %3734
    %3738 = vrot.lane.b32.xlu0 %v2725, 40
    %v3739 = vpop.permute.xlu0 %3738
    %3742 = vrot.lane.b32.xlu0 %v2726, 42
    %v3743 = vpop.permute.xlu0 %3742
    %3746 = vrot.lane.b32.xlu0 %v2727, 44
    %v3747 = vpop.permute.xlu0 %3746
    %3750 = vrot.lane.b32.xlu0 %v2728, 46
    %v3751 = vpop.permute.xlu0 %3750
    %3754 = vrot.lane.b32.xlu0 %v2857, 48
    %v3755 = vpop.permute.xlu0 %3754
    %3758 = vrot.lane.b32.xlu0 %v2858, 50
    %v3759 = vpop.permute.xlu0 %3758
    %3762 = vrot.lane.b32.xlu0 %v2859, 52
    %v3763 = vpop.permute.xlu0 %3762
    %3766 = vrot.lane.b32.xlu0 %v2860, 54
    %v3767 = vpop.permute.xlu0 %3766
    %3770 = vrot.lane.b32.xlu0 %v2861, 56
    %v3771 = vpop.permute.xlu0 %3770
    %3774 = vrot.lane.b32.xlu0 %v2862, 58
    %v3775 = vpop.permute.xlu0 %3774
    %3778 = vrot.lane.b32.xlu0 %v2863, 60
    %v3779 = vpop.permute.xlu0 %3778
    %3782 = vrot.lane.b32.xlu0 %v2864, 62
    %v3783 = vpop.permute.xlu0 %3782
    %3786 = vrot.lane.b32.xlu0 %v2993, 64
    %v3787 = vpop.permute.xlu0 %3786
    %3790 = vrot.lane.b32.xlu0 %v2994, 66
    %v3791 = vpop.permute.xlu0 %3790
    %3794 = vrot.lane.b32.xlu0 %v2995, 68
    %v3795 = vpop.permute.xlu0 %3794
    %3798 = vrot.lane.b32.xlu0 %v2996, 70
    %v3799 = vpop.permute.xlu0 %3798
    %3802 = vrot.lane.b32.xlu0 %v2997, 72
    %v3803 = vpop.permute.xlu0 %3802
    %3806 = vrot.lane.b32.xlu0 %v2998, 74
    %v3807 = vpop.permute.xlu0 %3806
    %3810 = vrot.lane.b32.xlu0 %v2999, 76
    %v3811 = vpop.permute.xlu0 %3810
    %3814 = vrot.lane.b32.xlu0 %v3000, 78
    %v3815 = vpop.permute.xlu0 %3814
    %3818 = vrot.lane.b32.xlu0 %v3129, 80
    %v3819 = vpop.permute.xlu0 %3818
    %3822 = vrot.lane.b32.xlu0 %v3130, 82
    %v3823 = vpop.permute.xlu0 %3822
    %3826 = vrot.lane.b32.xlu0 %v3131, 84
    %v3827 = vpop.permute.xlu0 %3826
    %3830 = vrot.lane.b32.xlu0 %v3132, 86
    %v3831 = vpop.permute.xlu0 %3830
    %3834 = vrot.lane.b32.xlu0 %v3133, 88
    %v3835 = vpop.permute.xlu0 %3834
    %3838 = vrot.lane.b32.xlu0 %v3134, 90
    %v3839 = vpop.permute.xlu0 %3838
    %3842 = vrot.lane.b32.xlu0 %v3135, 92
    %v3843 = vpop.permute.xlu0 %3842
    %3846 = vrot.lane.b32.xlu0 %v3136, 94
    %v3847 = vpop.permute.xlu0 %3846
    %3850 = vrot.lane.b32.xlu0 %v3265, 96
    %v3851 = vpop.permute.xlu0 %3850
    %3854 = vrot.lane.b32.xlu0 %v3266, 98
    %v3855 = vpop.permute.xlu0 %3854
    %3858 = vrot.lane.b32.xlu0 %v3267, 100
    %v3859 = vpop.permute.xlu0 %3858
    %3862 = vrot.lane.b32.xlu0 %v3268, 102
    %v3863 = vpop.permute.xlu0 %3862
    %3866 = vrot.lane.b32.xlu0 %v3269, 104
    %v3867 = vpop.permute.xlu0 %3866
    %3870 = vrot.lane.b32.xlu0 %v3270, 106
    %v3871 = vpop.permute.xlu0 %3870
    %3874 = vrot.lane.b32.xlu0 %v3271, 108
    %v3875 = vpop.permute.xlu0 %3874
    %3878 = vrot.lane.b32.xlu0 %v3272, 110
    %v3879 = vpop.permute.xlu0 %3878
    %3882 = vrot.lane.b32.xlu0 %v3401, 112
    %v3883 = vpop.permute.xlu0 %3882
    %3886 = vrot.lane.b32.xlu0 %v3402, 114
    %v3887 = vpop.permute.xlu0 %3886
    %3890 = vrot.lane.b32.xlu0 %v3403, 116
    %v3891 = vpop.permute.xlu0 %3890
    %3894 = vrot.lane.b32.xlu0 %v3404, 118
    %v3895 = vpop.permute.xlu0 %3894
    %3898 = vrot.lane.b32.xlu0 %v3405, 120
    %v3899 = vpop.permute.xlu0 %3898
    %3902 = vrot.lane.b32.xlu0 %v3406, 122
    %v3903 = vpop.permute.xlu0 %3902
    %3906 = vrot.lane.b32.xlu0 %v3407, 124
    %v3907 = vpop.permute.xlu0 %3906
    %3910 = vrot.lane.b32.xlu0 %v3408, 126
    %v3911 = vpop.permute.xlu0 %3910
    %vm3913 = vcmask 15360
    %v3914 = vsel %vm3913, %v1361, %v3411
    %vm3915 = vcmask 31744
    %v3916 = vsel %vm3915, %v3914, %v3415
    %vm3917 = vcmask 48128
    %v3918 = vsel %vm3917, %v3916, %v3419
    %vm3919 = vcmask 64512
    %v3920 = vsel %vm3919, %v3918, %v3423
    %vm3921 = vcmask 80896
    %v3922 = vsel %vm3921, %v3920, %v3427
    %vm3923 = vcmask 97280
    %v3924 = vsel %vm3923, %v3922, %v3431
    %vm3925 = vcmask 113664
    %v3926 = vsel %vm3925, %v3924, %v3435
    %vm3927 = vcmask 130048
    %v3928 = vsel %vm3927, %v3926, %v3439
    %vm3929 = vcmask 146432
    %v3930 = vsel %vm3929, %v3928, %v3443
    %vm3931 = vcmask 162816
    %v3932 = vsel %vm3931, %v3930, %v3447
    %vm3933 = vcmask 179200
    %v3934 = vsel %vm3933, %v3932, %v3451
    %vm3935 = vcmask 195584
    %v3936 = vsel %vm3935, %v3934, %v3455
    %vm3937 = vcmask 211968
    %v3938 = vsel %vm3937, %v3936, %v3459
    %vm3939 = vcmask 228352
    %v3940 = vsel %vm3939, %v3938, %v3463
    %vm3941 = vcmask 244736
    %v3942 = vsel %vm3941, %v3940, %v3467
    %vm3943 = vcmask 261120
    %v3944 = vsel %vm3943, %v3942, %v3471
    %vm3945 = vcmask 277504
    %v3946 = vsel %vm3945, %v3944, %v3475
    %vm3947 = vcmask 293888
    %v3948 = vsel %vm3947, %v3946, %v3479
    %vm3949 = vcmask 310272
    %v3950 = vsel %vm3949, %v3948, %v3483
    %vm3951 = vcmask 326656
    %v3952 = vsel %vm3951, %v3950, %v3487
    %vm3953 = vcmask 343040
    %v3954 = vsel %vm3953, %v3952, %v3491
    %vm3955 = vcmask 359424
    %v3956 = vsel %vm3955, %v3954, %v3495
    %vm3957 = vcmask 375808
    %v3958 = vsel %vm3957, %v3956, %v3499
    %vm3959 = vcmask 392192
    %v3960 = vsel %vm3959, %v3958, %v3503
    %vm3961 = vcmask 408576
    %v3962 = vsel %vm3961, %v3960, %v3507
    %vm3963 = vcmask 424960
    %v3964 = vsel %vm3963, %v3962, %v3511
    %vm3965 = vcmask 441344
    %v3966 = vsel %vm3965, %v3964, %v3515
    %vm3967 = vcmask 457728
    %v3968 = vsel %vm3967, %v3966, %v3519
    %vm3969 = vcmask 474112
    %v3970 = vsel %vm3969, %v3968, %v3523
    %vm3971 = vcmask 490496
    %v3972 = vsel %vm3971, %v3970, %v3527
    %vm3973 = vcmask 506880
    %v3974 = vsel %vm3973, %v3972, %v3531
    %vm3975 = vcmask 523264
    %v3976 = vsel %vm3975, %v3974, %v3535
    %vm3977 = vcmask 539648
    %v3978 = vsel %vm3977, %v3976, %v3539
    %vm3979 = vcmask 556032
    %v3980 = vsel %vm3979, %v3978, %v3543
    %vm3981 = vcmask 572416
    %v3982 = vsel %vm3981, %v3980, %v3547
    %vm3983 = vcmask 588800
    %v3984 = vsel %vm3983, %v3982, %v3551
    %vm3985 = vcmask 605184
    %v3986 = vsel %vm3985, %v3984, %v3555
    %vm3987 = vcmask 621568
    %v3988 = vsel %vm3987, %v3986, %v3559
    %vm3989 = vcmask 637952
    %v3990 = vsel %vm3989, %v3988, %v3563
    %vm3991 = vcmask 654336
    %v3992 = vsel %vm3991, %v3990, %v3567
    %vm3993 = vcmask 670720
    %v3994 = vsel %vm3993, %v3992, %v3571
    %vm3995 = vcmask 687104
    %v3996 = vsel %vm3995, %v3994, %v3575
    %vm3997 = vcmask 703488
    %v3998 = vsel %vm3997, %v3996, %v3579
    %vm3999 = vcmask 719872
    %v4000 = vsel %vm3999, %v3998, %v3583
    %vm4001 = vcmask 736256
    %v4002 = vsel %vm4001, %v4000, %v3587
    %vm4003 = vcmask 752640
    %v4004 = vsel %vm4003, %v4002, %v3591
    %vm4005 = vcmask 769024
    %v4006 = vsel %vm4005, %v4004, %v3595
    %vm4007 = vcmask 785408
    %v4008 = vsel %vm4007, %v4006, %v3599
    %vm4009 = vcmask 801792
    %v4010 = vsel %vm4009, %v4008, %v3603
    %vm4011 = vcmask 818176
    %v4012 = vsel %vm4011, %v4010, %v3607
    %vm4013 = vcmask 834560
    %v4014 = vsel %vm4013, %v4012, %v3611
    %vm4015 = vcmask 850944
    %v4016 = vsel %vm4015, %v4014, %v3615
    %vm4017 = vcmask 867328
    %v4018 = vsel %vm4017, %v4016, %v3619
    %vm4019 = vcmask 883712
    %v4020 = vsel %vm4019, %v4018, %v3623
    %vm4021 = vcmask 900096
    %v4022 = vsel %vm4021, %v4020, %v3627
    %vm4023 = vcmask 916480
    %v4024 = vsel %vm4023, %v4022, %v3631
    %vm4025 = vcmask 932864
    %v4026 = vsel %vm4025, %v4024, %v3635
    %vm4027 = vcmask 949248
    %v4028 = vsel %vm4027, %v4026, %v3639
    %vm4029 = vcmask 965632
    %v4030 = vsel %vm4029, %v4028, %v3643
    %vm4031 = vcmask 982016
    %v4032 = vsel %vm4031, %v4030, %v3647
    %vm4033 = vcmask 998400
    %v4034 = vsel %vm4033, %v4032, %v3651
    %vm4035 = vcmask 1014784
    %v4036 = vsel %vm4035, %v4034, %v3655
    %vm4037 = vcmask 1031168
    %v4038 = vsel %vm4037, %v4036, %v3659
    %v4039 = vsel %vm3913, %v2449, %v3663
    %v4040 = vsel %vm3915, %v4039, %v3667
    %v4041 = vsel %vm3917, %v4040, %v3671
    %v4042 = vsel %vm3919, %v4041, %v3675
    %v4043 = vsel %vm3921, %v4042, %v3679
    %v4044 = vsel %vm3923, %v4043, %v3683
    %v4045 = vsel %vm3925, %v4044, %v3687
    %v4046 = vsel %vm3927, %v4045, %v3691
    %v4047 = vsel %vm3929, %v4046, %v3695
    %v4048 = vsel %vm3931, %v4047, %v3699
    %v4049 = vsel %vm3933, %v4048, %v3703
    %v4050 = vsel %vm3935, %v4049, %v3707
    %v4051 = vsel %vm3937, %v4050, %v3711
    %v4052 = vsel %vm3939, %v4051, %v3715
    %v4053 = vsel %vm3941, %v4052, %v3719
    %v4054 = vsel %vm3943, %v4053, %v3723
    %v4055 = vsel %vm3945, %v4054, %v3727
    %v4056 = vsel %vm3947, %v4055, %v3731
    %v4057 = vsel %vm3949, %v4056, %v3735
    %v4058 = vsel %vm3951, %v4057, %v3739
    %v4059 = vsel %vm3953, %v4058, %v3743
    %v4060 = vsel %vm3955, %v4059, %v3747
    %v4061 = vsel %vm3957, %v4060, %v3751
    %v4062 = vsel %vm3959, %v4061, %v3755
    %v4063 = vsel %vm3961, %v4062, %v3759
    %v4064 = vsel %vm3963, %v4063, %v3763
    %v4065 = vsel %vm3965, %v4064, %v3767
    %v4066 = vsel %vm3967, %v4065, %v3771
    %v4067 = vsel %vm3969, %v4066, %v3775
    %v4068 = vsel %vm3971, %v4067, %v3779
    %v4069 = vsel %vm3973, %v4068, %v3783
    %v4070 = vsel %vm3975, %v4069, %v3787
    %v4071 = vsel %vm3977, %v4070, %v3791
    %v4072 = vsel %vm3979, %v4071, %v3795
    %v4073 = vsel %vm3981, %v4072, %v3799
    %v4074 = vsel %vm3983, %v4073, %v3803
    %v4075 = vsel %vm3985, %v4074, %v3807
    %v4076 = vsel %vm3987, %v4075, %v3811
    %v4077 = vsel %vm3989, %v4076, %v3815
    %v4078 = vsel %vm3991, %v4077, %v3819
    %v4079 = vsel %vm3993, %v4078, %v3823
    %v4080 = vsel %vm3995, %v4079, %v3827
    %v4081 = vsel %vm3997, %v4080, %v3831
    %v4082 = vsel %vm3999, %v4081, %v3835
    %v4083 = vsel %vm4001, %v4082, %v3839
    %v4084 = vsel %vm4003, %v4083, %v3843
    %v4085 = vsel %vm4005, %v4084, %v3847
    %v4086 = vsel %vm4007, %v4085, %v3851
    %v4087 = vsel %vm4009, %v4086, %v3855
    %v4088 = vsel %vm4011, %v4087, %v3859
    %v4089 = vsel %vm4013, %v4088, %v3863
    %v4090 = vsel %vm4015, %v4089, %v3867
    %v4091 = vsel %vm4017, %v4090, %v3871
    %v4092 = vsel %vm4019, %v4091, %v3875
    %v4093 = vsel %vm4021, %v4092, %v3879
    %v4094 = vsel %vm4023, %v4093, %v3883
    %v4095 = vsel %vm4025, %v4094, %v3887
    %v4096 = vsel %vm4027, %v4095, %v3891
    %v4097 = vsel %vm4029, %v4096, %v3895
    %v4098 = vsel %vm4031, %v4097, %v3899
    %v4099 = vsel %vm4033, %v4098, %v3903
    %v4100 = vsel %vm4035, %v4099, %v3907
    %v4101 = vsel %vm4037, %v4100, %v3911
    %4102 = vst [vmem:[#allocation5] sm:$0xff] %v4038
    %4103 = vst [vmem:[#allocation5 + $0x8] sm:$0xff] %v4101
    // Predicated region
    $region10: #{tpu_custom_call.1} parent=1 // pred_check
      _
    $region11: #{tpu_custom_call.1} parent=1 // pred_check_branch
      %4105 = sbr.rel (0) target = $region13
    $region12: #{tpu_custom_call.1} parent=1 // pred_region
      %s4107 = ssub.s32 256, 256
      %4108 = vsyncadd [#allocation4], %s4107
      %s4110 = sshll.u32 [#allocation5], 4
      %s4111 = int_to_ptr.vmem [resolvable:$true] %s4110
      %4113 = dma.vmem_to_hbm [thread:$0]  %s4111, 256, %s1, [#allocation4]
    $region13: #{tpu_custom_call.1} parent=1 // pred_fallthru
      _
    // Predicated region
    $region14: #{tpu_custom_call.1} parent=1 // pred_check
      _
    $region15: #{tpu_custom_call.1} parent=1 // pred_check_branch
      %4115 = sbr.rel (0) target = $region17
    $region16: #{tpu_custom_call.1} parent=1 // pred_region
      %4116 = dma.done [#allocation4], 256
    $region17: #{tpu_custom_call.1} parent=1 // pred_fallthru
      _
    %4117 = vsyncpa [#allocation3], 1
    %4118 = vsyncpa [#allocation4], 1

// kernel: tpu_custom_call.1
$region0: #{tpu_custom_call.1}
  #allocation0 [shape = 'u32[]', space=smem, size = 0x4, offset = 0x4, fixed_abs, tag = 'smem constant byte address 0x4 - core index']
  #allocation1 [shape = 'u32[144,128]{1,0:T(1,128)}', space=vmem, size = 0x12000, scoped, tag = 'internal scratch']
  %s0 = inlined_call_operand.hbm [shape: f32[128,256], index: 0, kind: input, shape index: {}]
  %s1 = inlined_call_operand.hbm [shape: f32[128,256], index: 1, kind: input, shape index: {}]
  %s2 = inlined_call_operand.hbm [shape: f32[8,128], index: 2, kind: input, shape index: {}]
  %s3 = inlined_call_operand.hbm [shape: f32[8,256], index: 3, kind: output, shape index: {}]
  %s4 = sld [smem:[#allocation0]]
  $region34: #{tpu_custom_call.1} parent=0
    _
  %s6 = ssub.s32 1, %s4
  %s7 = scalar_select 0, %s6, %s4
  $region1: #{tpu_custom_call.1} parent=0
    #allocation2 [shape = 'u8[131072]{0}', space=vmem, size = 0x20000, scoped, tag = 'input window, operand 0, single buffered']
    #allocation3 [shape = 's32[1]{0}', space=sflag, size = 0x4, scoped, tag = 'scoped memory for tpu_custom_call.1']
    #allocation4 [shape = 's32[1]{0}', space=sflag, size = 0x4, scoped, tag = 'scoped memory for tpu_custom_call.1']
    #allocation5 [shape = 'u8[131072]{0}', space=vmem, size = 0x20000, scoped, tag = 'input window, operand 1, single buffered']
    #allocation6 [shape = 's32[1]{0}', space=sflag, size = 0x4, scoped, tag = 'scoped memory for tpu_custom_call.1']
    #allocation7 [shape = 'u8[4096]{0}', space=vmem, size = 0x1000, scoped, tag = 'input window, operand 2, single buffered']
    #allocation8 [shape = 'u8[8192]{0}', space=vmem, size = 0x2000, scoped, tag = 'output window, operand 0, single buffered']
    %8 = vsyncpa [#allocation3], 0
    %9 = vsyncpa [#allocation6], 0
    %10 = vsyncpa [#allocation4], 0
    // Predicated region
    $region2: #{tpu_custom_call.1} parent=1 // pred_check
      _
    $region3: #{tpu_custom_call.1} parent=1 // pred_check_branch
      %12 = sbr.rel (0) target = $region5
    $region4: #{tpu_custom_call.1} parent=1 // pred_region
      %s14 = ssub.s32 4096, 4096
      %15 = vsyncadd [#allocation3], %s14
      %s16 = sshll.u32 [#allocation2], 4
      %s17 = int_to_ptr.vmem [resolvable:$true] %s16
      %22 = dma.hbm_to_vmem [thread:$0]  %s0, 4096, %s17, [#allocation3], 256, 256, 16
    $region5: #{tpu_custom_call.1} parent=1 // pred_fallthru
      _
    // Predicated region
    $region6: #{tpu_custom_call.1} parent=1 // pred_check
      _
    $region7: #{tpu_custom_call.1} parent=1 // pred_check_branch
      %24 = sbr.rel (0) target = $region9
    $region8: #{tpu_custom_call.1} parent=1 // pred_region
      %s26 = ssub.s32 4096, 4096
      %27 = vsyncadd [#allocation6], %s26
      %s28 = sshll.u32 [#allocation5], 4
      %s29 = int_to_ptr.vmem [resolvable:$true] %s28
      %34 = dma.hbm_to_vmem [thread:$0]  %s1, 4096, %s29, [#allocation6], 256, 256, 16
    $region9: #{tpu_custom_call.1} parent=1 // pred_fallthru
      _
    // Predicated region
    $region10: #{tpu_custom_call.1} parent=1 // pred_check
      _
    $region11: #{tpu_custom_call.1} parent=1 // pred_check_branch
      %36 = sbr.rel (0) target = $region13
    $region12: #{tpu_custom_call.1} parent=1 // pred_region
      %s38 = ssub.s32 128, 128
      %39 = vsyncadd [#allocation6], %s38
      %s41 = sshll.u32 [#allocation7], 4
      %s42 = int_to_ptr.vmem [resolvable:$true] %s41
      %44 = dma.hbm_to_vmem [thread:$0]  %s2, 128, %s42, [#allocation6]
    $region13: #{tpu_custom_call.1} parent=1 // pred_fallthru
      _
    // Predicated region
    $region14: #{tpu_custom_call.1} parent=1 // pred_check
      _
    $region15: #{tpu_custom_call.1} parent=1 // pred_check_branch
      %46 = sbr.rel (0) target = $region17
    $region16: #{tpu_custom_call.1} parent=1 // pred_region
      %47 = dma.done [#allocation3], 4096
    $region17: #{tpu_custom_call.1} parent=1 // pred_fallthru
      _
    // Predicated region
    $region18: #{tpu_custom_call.1} parent=1 // pred_check
      _
    $region19: #{tpu_custom_call.1} parent=1 // pred_check_branch
      %49 = sbr.rel (0) target = $region21
    $region20: #{tpu_custom_call.1} parent=1 // pred_region
      %50 = dma.done [#allocation6], 4096
    $region21: #{tpu_custom_call.1} parent=1 // pred_fallthru
      _
    // Predicated region
    $region22: #{tpu_custom_call.1} parent=1 // pred_check
      _
    $region23: #{tpu_custom_call.1} parent=1 // pred_check_branch
      %52 = sbr.rel (0) target = $region25
    $region24: #{tpu_custom_call.1} parent=1 // pred_region
      %53 = dma.done [#allocation6], 128
    $region25: #{tpu_custom_call.1} parent=1 // pred_fallthru
      _
    %v54 = vld [vmem:[#allocation7] sm:$0xff]
    %v55 = vsub.f32 1.0, %v54
    %v56 = vmin.f32 %v54, %v55
    %v57 = vadd.f32 %v56, 1e-10
    %v58 = vlog2.pop %v57
    %v59 = vmul.f32 %v58, 0.6931472
    %v60 = vsub.f32 %v59, -23.02585
    %v61 = vmul.f32 %v60, 0.021714725
    %vm62 = vcmp.gt.f32.partialorder %v54, 0.5
    %v63 = vsub.f32 1.0, %v61
    %v64 = vsel %vm62, %v63, %v61
    %v65 = vld [vmem:[#allocation2] sm:$0xff]
    %v66 = vld [vmem:[#allocation2 + $0x8] sm:$0xff]
    %v67 = vld [vmem:[#allocation2 + $0x10] sm:$0xff]
    %v68 = vld [vmem:[#allocation2 + $0x18] sm:$0xff]
    %v69 = vld [vmem:[#allocation2 + $0x20] sm:$0xff]
    %v70 = vld [vmem:[#allocation2 + $0x28] sm:$0xff]
    %v71 = vld [vmem:[#allocation2 + $0x30] sm:$0xff]
    %v72 = vld [vmem:[#allocation2 + $0x38] sm:$0xff]
    %v73 = vld [vmem:[#allocation2 + $0x40] sm:$0xff]
    %v74 = vld [vmem:[#allocation2 + $0x48] sm:$0xff]
    %v75 = vld [vmem:[#allocation2 + $0x50] sm:$0xff]
    %v76 = vld [vmem:[#allocation2 + $0x58] sm:$0xff]
    %v77 = vld [vmem:[#allocation2 + $0x60] sm:$0xff]
    %v78 = vld [vmem:[#allocation2 + $0x68] sm:$0xff]
    %v79 = vld [vmem:[#allocation2 + $0x70] sm:$0xff]
    %v80 = vld [vmem:[#allocation2 + $0x78] sm:$0xff]
    %v81 = vld [vmem:[#allocation2 + $0x80] sm:$0xff]
    %v82 = vld [vmem:[#allocation2 + $0x88] sm:$0xff]
    %v83 = vld [vmem:[#allocation2 + $0x90] sm:$0xff]
    %v84 = vld [vmem:[#allocation2 + $0x98] sm:$0xff]
    %v85 = vld [vmem:[#allocation2 + $0xa0] sm:$0xff]
    %v86 = vld [vmem:[#allocation2 + $0xa8] sm:$0xff]
    %v87 = vld [vmem:[#allocation2 + $0xb0] sm:$0xff]
    %v88 = vld [vmem:[#allocation2 + $0xb8] sm:$0xff]
    %v89 = vld [vmem:[#allocation2 + $0xc0] sm:$0xff]
    %v90 = vld [vmem:[#allocation2 + $0xc8] sm:$0xff]
    %v91 = vld [vmem:[#allocation2 + $0xd0] sm:$0xff]
    %v92 = vld [vmem:[#allocation2 + $0xd8] sm:$0xff]
    %v93 = vld [vmem:[#allocation2 + $0xe0] sm:$0xff]
    %v94 = vld [vmem:[#allocation2 + $0xe8] sm:$0xff]
    %v95 = vld [vmem:[#allocation2 + $0xf0] sm:$0xff]
    %v96 = vld [vmem:[#allocation2 + $0xf8] sm:$0xff]
    %v97 = vld [vmem:[#allocation5] sm:$0xff]
    %v98 = vld [vmem:[#allocation5 + $0x8] sm:$0xff]
    %v99 = vld [vmem:[#allocation5 + $0x10] sm:$0xff]
    %v100 = vld [vmem:[#allocation5 + $0x18] sm:$0xff]
    %v101 = vld [vmem:[#allocation5 + $0x20] sm:$0xff]
    %v102 = vld [vmem:[#allocation5 + $0x28] sm:$0xff]
    %v103 = vld [vmem:[#allocation5 + $0x30] sm:$0xff]
    %v104 = vld [vmem:[#allocation5 + $0x38] sm:$0xff]
    %v105 = vld [vmem:[#allocation5 + $0x40] sm:$0xff]
    %v106 = vld [vmem:[#allocation5 + $0x48] sm:$0xff]
    %v107 = vld [vmem:[#allocation5 + $0x50] sm:$0xff]
    %v108 = vld [vmem:[#allocation5 + $0x58] sm:$0xff]
    %v109 = vld [vmem:[#allocation5 + $0x60] sm:$0xff]
    %v110 = vld [vmem:[#allocation5 + $0x68] sm:$0xff]
    %v111 = vld [vmem:[#allocation5 + $0x70] sm:$0xff]
    %v112 = vld [vmem:[#allocation5 + $0x78] sm:$0xff]
    %v113 = vld [vmem:[#allocation5 + $0x80] sm:$0xff]
    %v114 = vld [vmem:[#allocation5 + $0x88] sm:$0xff]
    %v115 = vld [vmem:[#allocation5 + $0x90] sm:$0xff]
    %v116 = vld [vmem:[#allocation5 + $0x98] sm:$0xff]
    %v117 = vld [vmem:[#allocation5 + $0xa0] sm:$0xff]
    %v118 = vld [vmem:[#allocation5 + $0xa8] sm:$0xff]
    %v119 = vld [vmem:[#allocation5 + $0xb0] sm:$0xff]
    %v120 = vld [vmem:[#allocation5 + $0xb8] sm:$0xff]
    %v121 = vld [vmem:[#allocation5 + $0xc0] sm:$0xff]
    %v122 = vld [vmem:[#allocation5 + $0xc8] sm:$0xff]
    %v123 = vld [vmem:[#allocation5 + $0xd0] sm:$0xff]
    %v124 = vld [vmem:[#allocation5 + $0xd8] sm:$0xff]
    %v125 = vld [vmem:[#allocation5 + $0xe0] sm:$0xff]
    %v126 = vld [vmem:[#allocation5 + $0xe8] sm:$0xff]
    %v127 = vld [vmem:[#allocation5 + $0xf0] sm:$0xff]
    %v128 = vld [vmem:[#allocation5 + $0xf8] sm:$0xff]
    %v129 = vand.u32 %v98, 4294901760
    %130 = vmatprep.subr.mxu0 %v129
    %v131 = vand.u32 %v97, 4294901760
    %132 = vmatpush1.msra.mxu0 %v131
    %v133 = vand.u32 %v100, 4294901760
    %134 = vmatprep.subr.mxu0 %v133
    %v135 = vand.u32 %v99, 4294901760
    %136 = vmatpush1.msra.mxu0 %v135
    %v137 = vand.u32 %v102, 4294901760
    %138 = vmatprep.subr.mxu0 %v137
    %v139 = vand.u32 %v101, 4294901760
    %140 = vmatpush1.msra.mxu0 %v139
    %v141 = vand.u32 %v104, 4294901760
    %142 = vmatprep.subr.mxu0 %v141
    %v143 = vand.u32 %v103, 4294901760
    %144 = vmatpush1.msra.mxu0 %v143
    %v145 = vand.u32 %v106, 4294901760
    %146 = vmatprep.subr.mxu0 %v145
    %v147 = vand.u32 %v105, 4294901760
    %148 = vmatpush1.msra.mxu0 %v147
    %v149 = vand.u32 %v108, 4294901760
    %150 = vmatprep.subr.mxu0 %v149
    %v151 = vand.u32 %v107, 4294901760
    %152 = vmatpush1.msra.mxu0 %v151
    %v153 = vand.u32 %v110, 4294901760
    %154 = vmatprep.subr.mxu0 %v153
    %v155 = vand.u32 %v109, 4294901760
    %156 = vmatpush1.msra.mxu0 %v155
    %v157 = vand.u32 %v112, 4294901760
    %158 = vmatprep.subr.mxu0 %v157
    %v159 = vand.u32 %v111, 4294901760
    %160 = vmatpush1.msra.mxu0 %v159
    %v161 = vand.u32 %v114, 4294901760
    %162 = vmatprep.subr.mxu0 %v161
    %v163 = vand.u32 %v113, 4294901760
    %164 = vmatpush1.msra.mxu0 %v163
    %v165 = vand.u32 %v116, 4294901760
    %166 = vmatprep.subr.mxu0 %v165
    %v167 = vand.u32 %v115, 4294901760
    %168 = vmatpush1.msra.mxu0 %v167
    %v169 = vand.u32 %v118, 4294901760
    %170 = vmatprep.subr.mxu0 %v169
    %v171 = vand.u32 %v117, 4294901760
    %172 = vmatpush1.msra.mxu0 %v171
    %v173 = vand.u32 %v120, 4294901760
    %174 = vmatprep.subr.mxu0 %v173
    %v175 = vand.u32 %v119, 4294901760
    %176 = vmatpush1.msra.mxu0 %v175
    %v177 = vand.u32 %v122, 4294901760
    %178 = vmatprep.subr.mxu0 %v177
    %v179 = vand.u32 %v121, 4294901760
    %180 = vmatpush1.msra.mxu0 %v179
    %v181 = vand.u32 %v124, 4294901760
    %182 = vmatprep.subr.mxu0 %v181
    %v183 = vand.u32 %v123, 4294901760
    %184 = vmatpush1.msra.mxu0 %v183
    %v185 = vand.u32 %v126, 4294901760
    %186 = vmatprep.subr.mxu0 %v185
    %v187 = vand.u32 %v125, 4294901760
    %188 = vmatpush1.msra.mxu0 %v187
    %v189 = vand.u32 %v128, 4294901760
    %190 = vmatprep.subr.mxu0 %v189
    %v191 = vand.u32 %v127, 4294901760
    %192 = vmatpush1.msra.mxu0 %v191
    %193 = vmatprep.subr.mxu0 0.0
    %194 = vmatpush1.msra.mxu0 0.0
    %195 = vmatprep.subr.mxu0 0.0
    %196 = vmatpush1.msra.mxu0 0.0
    %197 = vmatprep.subr.mxu0 0.0
    %198 = vmatpush1.msra.mxu0 0.0
    %199 = vmatprep.subr.mxu0 0.0
    %200 = vmatpush1.msra.mxu0 0.0
    %201 = vmatprep.subr.mxu0 0.0
    %202 = vmatpush1.msra.mxu0 0.0
    %203 = vmatprep.subr.mxu0 0.0
    %204 = vmatpush1.msra.mxu0 0.0
    %205 = vmatprep.subr.mxu0 0.0
    %206 = vmatpush1.msra.mxu0 0.0
    %207 = vmatprep.subr.mxu0 0.0
    %208 = vmatpush1.msra.mxu0 0.0
    %209 = vmatprep.subr.mxu0 0.0
    %210 = vmatpush1.msra.mxu0 0.0
    %211 = vmatprep.subr.mxu0 0.0
    %212 = vmatpush1.msra.mxu0 0.0
    %213 = vmatprep.subr.mxu0 0.0
    %214 = vmatpush1.msra.mxu0 0.0
    %215 = vmatprep.subr.mxu0 0.0
    %216 = vmatpush1.msra.mxu0 0.0
    %217 = vmatprep.subr.mxu0 0.0
    %218 = vmatpush1.msra.mxu0 0.0
    %219 = vmatprep.subr.mxu0 0.0
    %220 = vmatpush1.msra.mxu0 0.0
    %221 = vmatprep.subr.mxu0 0.0
    %222 = vmatpush1.msra.mxu0 0.0
    %223 = vmatprep.subr.mxu0 0.0
    %224 = vmatpush1.msra.mxu0 0.0
    %225 = vmatprep.mubr.f32.mxu0 0.0
    %v226 = vand.u32 %v64, 4294901760
    %v227 = vsub.f32 %v64, %v226
    %v228 = vand.u32 %v227, 4294901760
    %v229 = vsub.f32 %v227, %v228
    %v230 = vand.u32 %v229, 4294901760
    %231 = vmatmul.mubr.f32.gmra.mrb[0].mxu0 %v230
    %v232 = vpop.f32.mrb[0].mxu0
    %v233 = vadd.f32 0.0, %v232
    %v234 = vpop.f32.mrb[0].mxu0
    %v235 = vadd.f32 0.0, %v234
    %236 = vdwg.mxu0
    %v237 = vand.u32 %v98, 4294901760
    %v238 = vsub.f32 %v98, %v237
    %v239 = vand.u32 %v238, 4294901760
    %v240 = vsub.f32 %v238, %v239
    %v241 = vand.u32 %v240, 4294901760
    %242 = vmatprep.subr.mxu0 %v241
    %v243 = vand.u32 %v97, 4294901760
    %v244 = vsub.f32 %v97, %v243
    %v245 = vand.u32 %v244, 4294901760
    %v246 = vsub.f32 %v244, %v245
    %v247 = vand.u32 %v246, 4294901760
    %248 = vmatpush1.msra.mxu0 %v247
    %v249 = vand.u32 %v100, 4294901760
    %v250 = vsub.f32 %v100, %v249
    %v251 = vand.u32 %v250, 4294901760
    %v252 = vsub.f32 %v250, %v251
    %v253 = vand.u32 %v252, 4294901760
    %254 = vmatprep.subr.mxu0 %v253
    %v255 = vand.u32 %v99, 4294901760
    %v256 = vsub.f32 %v99, %v255
    %v257 = vand.u32 %v256, 4294901760
    %v258 = vsub.f32 %v256, %v257
    %v259 = vand.u32 %v258, 4294901760
    %260 = vmatpush1.msra.mxu0 %v259
    %v261 = vand.u32 %v102, 4294901760
    %v262 = vsub.f32 %v102, %v261
    %v263 = vand.u32 %v262, 4294901760
    %v264 = vsub.f32 %v262, %v263
    %v265 = vand.u32 %v264, 4294901760
    %266 = vmatprep.subr.mxu0 %v265
    %v267 = vand.u32 %v101, 4294901760
    %v268 = vsub.f32 %v101, %v267
    %v269 = vand.u32 %v268, 4294901760
    %v270 = vsub.f32 %v268, %v269
    %v271 = vand.u32 %v270, 4294901760
    %272 = vmatpush1.msra.mxu0 %v271
    %v273 = vand.u32 %v104, 4294901760
    %v274 = vsub.f32 %v104, %v273
    %v275 = vand.u32 %v274, 4294901760
    %v276 = vsub.f32 %v274, %v275
    %v277 = vand.u32 %v276, 4294901760
    %278 = vmatprep.subr.mxu0 %v277
    %v279 = vand.u32 %v103, 4294901760
    %v280 = vsub.f32 %v103, %v279
    %v281 = vand.u32 %v280, 4294901760
    %v282 = vsub.f32 %v280, %v281
    %v283 = vand.u32 %v282, 4294901760
    %284 = vmatpush1.msra.mxu0 %v283
    %v285 = vand.u32 %v106, 4294901760
    %v286 = vsub.f32 %v106, %v285
    %v287 = vand.u32 %v286, 4294901760
    %v288 = vsub.f32 %v286, %v287
    %v289 = vand.u32 %v288, 4294901760
    %290 = vmatprep.subr.mxu0 %v289
    %v291 = vand.u32 %v105, 4294901760
    %v292 = vsub.f32 %v105, %v291
    %v293 = vand.u32 %v292, 4294901760
    %v294 = vsub.f32 %v292, %v293
    %v295 = vand.u32 %v294, 4294901760
    %296 = vmatpush1.msra.mxu0 %v295
    %v297 = vand.u32 %v108, 4294901760
    %v298 = vsub.f32 %v108, %v297
    %v299 = vand.u32 %v298, 4294901760
    %v300 = vsub.f32 %v298, %v299
    %v301 = vand.u32 %v300, 4294901760
    %302 = vmatprep.subr.mxu0 %v301
    %v303 = vand.u32 %v107, 4294901760
    %v304 = vsub.f32 %v107, %v303
    %v305 = vand.u32 %v304, 4294901760
    %v306 = vsub.f32 %v304, %v305
    %v307 = vand.u32 %v306, 4294901760
    %308 = vmatpush1.msra.mxu0 %v307
    %v309 = vand.u32 %v110, 4294901760
    %v310 = vsub.f32 %v110, %v309
    %v311 = vand.u32 %v310, 4294901760
    %v312 = vsub.f32 %v310, %v311
    %v313 = vand.u32 %v312, 4294901760
    %314 = vmatprep.subr.mxu0 %v313
    %v315 = vand.u32 %v109, 4294901760
    %v316 = vsub.f32 %v109, %v315
    %v317 = vand.u32 %v316, 4294901760
    %v318 = vsub.f32 %v316, %v317
    %v319 = vand.u32 %v318, 4294901760
    %320 = vmatpush1.msra.mxu0 %v319
    %v321 = vand.u32 %v112, 4294901760
    %v322 = vsub.f32 %v112, %v321
    %v323 = vand.u32 %v322, 4294901760
    %v324 = vsub.f32 %v322, %v323
    %v325 = vand.u32 %v324, 4294901760
    %326 = vmatprep.subr.mxu0 %v325
    %v327 = vand.u32 %v111, 4294901760
    %v328 = vsub.f32 %v111, %v327
    %v329 = vand.u32 %v328, 4294901760
    %v330 = vsub.f32 %v328, %v329
    %v331 = vand.u32 %v330, 4294901760
    %332 = vmatpush1.msra.mxu0 %v331
    %v333 = vand.u32 %v114, 4294901760
    %v334 = vsub.f32 %v114, %v333
    %v335 = vand.u32 %v334, 4294901760
    %v336 = vsub.f32 %v334, %v335
    %v337 = vand.u32 %v336, 4294901760
    %338 = vmatprep.subr.mxu0 %v337
    %v339 = vand.u32 %v113, 4294901760
    %v340 = vsub.f32 %v113, %v339
    %v341 = vand.u32 %v340, 4294901760
    %v342 = vsub.f32 %v340, %v341
    %v343 = vand.u32 %v342, 4294901760
    %344 = vmatpush1.msra.mxu0 %v343
    %v345 = vand.u32 %v116, 4294901760
    %v346 = vsub.f32 %v116, %v345
    %v347 = vand.u32 %v346, 4294901760
    %v348 = vsub.f32 %v346, %v347
    %v349 = vand.u32 %v348, 4294901760
    %350 = vmatprep.subr.mxu0 %v349
    %v351 = vand.u32 %v115, 4294901760
    %v352 = vsub.f32 %v115, %v351
    %v353 = vand.u32 %v352, 4294901760
    %v354 = vsub.f32 %v352, %v353
    %v355 = vand.u32 %v354, 4294901760
    %356 = vmatpush1.msra.mxu0 %v355
    %v357 = vand.u32 %v118, 4294901760
    %v358 = vsub.f32 %v118, %v357
    %v359 = vand.u32 %v358, 4294901760
    %v360 = vsub.f32 %v358, %v359
    %v361 = vand.u32 %v360, 4294901760
    %362 = vmatprep.subr.mxu0 %v361
    %v363 = vand.u32 %v117, 4294901760
    %v364 = vsub.f32 %v117, %v363
    %v365 = vand.u32 %v364, 4294901760
    %v366 = vsub.f32 %v364, %v365
    %v367 = vand.u32 %v366, 4294901760
    %368 = vmatpush1.msra.mxu0 %v367
    %v369 = vand.u32 %v120, 4294901760
    %v370 = vsub.f32 %v120, %v369
    %v371 = vand.u32 %v370, 4294901760
    %v372 = vsub.f32 %v370, %v371
    %v373 = vand.u32 %v372, 4294901760
    %374 = vmatprep.subr.mxu0 %v373
    %v375 = vand.u32 %v119, 4294901760
    %v376 = vsub.f32 %v119, %v375
    %v377 = vand.u32 %v376, 4294901760
    %v378 = vsub.f32 %v376, %v377
    %v379 = vand.u32 %v378, 4294901760
    %380 = vmatpush1.msra.mxu0 %v379
    %v381 = vand.u32 %v122, 4294901760
    %v382 = vsub.f32 %v122, %v381
    %v383 = vand.u32 %v382, 4294901760
    %v384 = vsub.f32 %v382, %v383
    %v385 = vand.u32 %v384, 4294901760
    %386 = vmatprep.subr.mxu0 %v385
    %v387 = vand.u32 %v121, 4294901760
    %v388 = vsub.f32 %v121, %v387
    %v389 = vand.u32 %v388, 4294901760
    %v390 = vsub.f32 %v388, %v389
    %v391 = vand.u32 %v390, 4294901760
    %392 = vmatpush1.msra.mxu0 %v391
    %v393 = vand.u32 %v124, 4294901760
    %v394 = vsub.f32 %v124, %v393
    %v395 = vand.u32 %v394, 4294901760
    %v396 = vsub.f32 %v394, %v395
    %v397 = vand.u32 %v396, 4294901760
    %398 = vmatprep.subr.mxu0 %v397
    %v399 = vand.u32 %v123, 4294901760
    %v400 = vsub.f32 %v123, %v399
    %v401 = vand.u32 %v400, 4294901760
    %v402 = vsub.f32 %v400, %v401
    %v403 = vand.u32 %v402, 4294901760
    %404 = vmatpush1.msra.mxu0 %v403
    %v405 = vand.u32 %v126, 4294901760
    %v406 = vsub.f32 %v126, %v405
    %v407 = vand.u32 %v406, 4294901760
    %v408 = vsub.f32 %v406, %v407
    %v409 = vand.u32 %v408, 4294901760
    %410 = vmatprep.subr.mxu0 %v409
    %v411 = vand.u32 %v125, 4294901760
    %v412 = vsub.f32 %v125, %v411
    %v413 = vand.u32 %v412, 4294901760
    %v414 = vsub.f32 %v412, %v413
    %v415 = vand.u32 %v414, 4294901760
    %416 = vmatpush1.msra.mxu0 %v415
    %v417 = vand.u32 %v128, 4294901760
    %v418 = vsub.f32 %v128, %v417
    %v419 = vand.u32 %v418, 4294901760
    %v420 = vsub.f32 %v418, %v419
    %v421 = vand.u32 %v420, 4294901760
    %422 = vmatprep.subr.mxu0 %v421
    %v423 = vand.u32 %v127, 4294901760
    %v424 = vsub.f32 %v127, %v423
    %v425 = vand.u32 %v424, 4294901760
    %v426 = vsub.f32 %v424, %v425
    %v427 = vand.u32 %v426, 4294901760
    %428 = vmatpush1.msra.mxu0 %v427
    %429 = vmatprep.subr.mxu0 0.0
    %430 = vmatpush1.msra.mxu0 0.0
    %431 = vmatprep.subr.mxu0 0.0
    %432 = vmatpush1.msra.mxu0 0.0
    %433 = vmatprep.subr.mxu0 0.0
    %434 = vmatpush1.msra.mxu0 0.0
    %435 = vmatprep.subr.mxu0 0.0
    %436 = vmatpush1.msra.mxu0 0.0
    %437 = vmatprep.subr.mxu0 0.0
    %438 = vmatpush1.msra.mxu0 0.0
    %439 = vmatprep.subr.mxu0 0.0
    %440 = vmatpush1.msra.mxu0 0.0
    %441 = vmatprep.subr.mxu0 0.0
    %442 = vmatpush1.msra.mxu0 0.0
    %443 = vmatprep.subr.mxu0 0.0
    %444 = vmatpush1.msra.mxu0 0.0
    %445 = vmatprep.subr.mxu0 0.0
    %446 = vmatpush1.msra.mxu0 0.0
    %447 = vmatprep.subr.mxu0 0.0
    %448 = vmatpush1.msra.mxu0 0.0
    %449 = vmatprep.subr.mxu0 0.0
    %450 = vmatpush1.msra.mxu0 0.0
    %451 = vmatprep.subr.mxu0 0.0
    %452 = vmatpush1.msra.mxu0 0.0
    %453 = vmatprep.subr.mxu0 0.0
    %454 = vmatpush1.msra.mxu0 0.0
    %455 = vmatprep.subr.mxu0 0.0
    %456 = vmatpush1.msra.mxu0 0.0
    %457 = vmatprep.subr.mxu0 0.0
    %458 = vmatpush1.msra.mxu0 0.0
    %459 = vmatprep.subr.mxu0 0.0
    %460 = vmatpush1.msra.mxu0 0.0
    %461 = vmatprep.mubr.f32.mxu0 0.0
    %v462 = vand.u32 %v64, 4294901760
    %463 = vmatmul.mubr.f32.gmra.mrb[0].mxu0 %v462
    %v464 = vpop.f32.mrb[0].mxu0
    %v465 = vadd.f32 %v233, %v464
    %v466 = vpop.f32.mrb[0].mxu0
    %v467 = vadd.f32 %v235, %v466
    %468 = vdwg.mxu0
    %v469 = vand.u32 %v98, 4294901760
    %v470 = vsub.f32 %v98, %v469
    %471 = vmatprep.subr.mxu0 %v470
    %v472 = vand.u32 %v97, 4294901760
    %v473 = vsub.f32 %v97, %v472
    %474 = vmatpush1.msra.mxu0 %v473
    %v475 = vand.u32 %v100, 4294901760
    %v476 = vsub.f32 %v100, %v475
    %477 = vmatprep.subr.mxu0 %v476
    %v478 = vand.u32 %v99, 4294901760
    %v479 = vsub.f32 %v99, %v478
    %480 = vmatpush1.msra.mxu0 %v479
    %v481 = vand.u32 %v102, 4294901760
    %v482 = vsub.f32 %v102, %v481
    %483 = vmatprep.subr.mxu0 %v482
    %v484 = vand.u32 %v101, 4294901760
    %v485 = vsub.f32 %v101, %v484
    %486 = vmatpush1.msra.mxu0 %v485
    %v487 = vand.u32 %v104, 4294901760
    %v488 = vsub.f32 %v104, %v487
    %489 = vmatprep.subr.mxu0 %v488
    %v490 = vand.u32 %v103, 4294901760
    %v491 = vsub.f32 %v103, %v490
    %492 = vmatpush1.msra.mxu0 %v491
    %v493 = vand.u32 %v106, 4294901760
    %v494 = vsub.f32 %v106, %v493
    %495 = vmatprep.subr.mxu0 %v494
    %v496 = vand.u32 %v105, 4294901760
    %v497 = vsub.f32 %v105, %v496
    %498 = vmatpush1.msra.mxu0 %v497
    %v499 = vand.u32 %v108, 4294901760
    %v500 = vsub.f32 %v108, %v499
    %501 = vmatprep.subr.mxu0 %v500
    %v502 = vand.u32 %v107, 4294901760
    %v503 = vsub.f32 %v107, %v502
    %504 = vmatpush1.msra.mxu0 %v503
    %v505 = vand.u32 %v110, 4294901760
    %v506 = vsub.f32 %v110, %v505
    %507 = vmatprep.subr.mxu0 %v506
    %v508 = vand.u32 %v109, 4294901760
    %v509 = vsub.f32 %v109, %v508
    %510 = vmatpush1.msra.mxu0 %v509
    %v511 = vand.u32 %v112, 4294901760
    %v512 = vsub.f32 %v112, %v511
    %513 = vmatprep.subr.mxu0 %v512
    %v514 = vand.u32 %v111, 4294901760
    %v515 = vsub.f32 %v111, %v514
    %516 = vmatpush1.msra.mxu0 %v515
    %v517 = vand.u32 %v114, 4294901760
    %v518 = vsub.f32 %v114, %v517
    %519 = vmatprep.subr.mxu0 %v518
    %v520 = vand.u32 %v113, 4294901760
    %v521 = vsub.f32 %v113, %v520
    %522 = vmatpush1.msra.mxu0 %v521
    %v523 = vand.u32 %v116, 4294901760
    %v524 = vsub.f32 %v116, %v523
    %525 = vmatprep.subr.mxu0 %v524
    %v526 = vand.u32 %v115, 4294901760
    %v527 = vsub.f32 %v115, %v526
    %528 = vmatpush1.msra.mxu0 %v527
    %v529 = vand.u32 %v118, 4294901760
    %v530 = vsub.f32 %v118, %v529
    %531 = vmatprep.subr.mxu0 %v530
    %v532 = vand.u32 %v117, 4294901760
    %v533 = vsub.f32 %v117, %v532
    %534 = vmatpush1.msra.mxu0 %v533
    %v535 = vand.u32 %v120, 4294901760
    %v536 = vsub.f32 %v120, %v535
    %537 = vmatprep.subr.mxu0 %v536
    %v538 = vand.u32 %v119, 4294901760
    %v539 = vsub.f32 %v119, %v538
    %540 = vmatpush1.msra.mxu0 %v539
    %v541 = vand.u32 %v122, 4294901760
    %v542 = vsub.f32 %v122, %v541
    %543 = vmatprep.subr.mxu0 %v542
    %v544 = vand.u32 %v121, 4294901760
    %v545 = vsub.f32 %v121, %v544
    %546 = vmatpush1.msra.mxu0 %v545
    %v547 = vand.u32 %v124, 4294901760
    %v548 = vsub.f32 %v124, %v547
    %549 = vmatprep.subr.mxu0 %v548
    %v550 = vand.u32 %v123, 4294901760
    %v551 = vsub.f32 %v123, %v550
    %552 = vmatpush1.msra.mxu0 %v551
    %v553 = vand.u32 %v126, 4294901760
    %v554 = vsub.f32 %v126, %v553
    %555 = vmatprep.subr.mxu0 %v554
    %v556 = vand.u32 %v125, 4294901760
    %v557 = vsub.f32 %v125, %v556
    %558 = vmatpush1.msra.mxu0 %v557
    %v559 = vand.u32 %v128, 4294901760
    %v560 = vsub.f32 %v128, %v559
    %561 = vmatprep.subr.mxu0 %v560
    %v562 = vand.u32 %v127, 4294901760
    %v563 = vsub.f32 %v127, %v562
    %564 = vmatpush1.msra.mxu0 %v563
    %565 = vmatprep.subr.mxu0 0.0
    %566 = vmatpush1.msra.mxu0 0.0
    %567 = vmatprep.subr.mxu0 0.0
    %568 = vmatpush1.msra.mxu0 0.0
    %569 = vmatprep.subr.mxu0 0.0
    %570 = vmatpush1.msra.mxu0 0.0
    %571 = vmatprep.subr.mxu0 0.0
    %572 = vmatpush1.msra.mxu0 0.0
    %573 = vmatprep.subr.mxu0 0.0
    %574 = vmatpush1.msra.mxu0 0.0
    %575 = vmatprep.subr.mxu0 0.0
    %576 = vmatpush1.msra.mxu0 0.0
    %577 = vmatprep.subr.mxu0 0.0
    %578 = vmatpush1.msra.mxu0 0.0
    %579 = vmatprep.subr.mxu0 0.0
    %580 = vmatpush1.msra.mxu0 0.0
    %581 = vmatprep.subr.mxu0 0.0
    %582 = vmatpush1.msra.mxu0 0.0
    %583 = vmatprep.subr.mxu0 0.0
    %584 = vmatpush1.msra.mxu0 0.0
    %585 = vmatprep.subr.mxu0 0.0
    %586 = vmatpush1.msra.mxu0 0.0
    %587 = vmatprep.subr.mxu0 0.0
    %588 = vmatpush1.msra.mxu0 0.0
    %589 = vmatprep.subr.mxu0 0.0
    %590 = vmatpush1.msra.mxu0 0.0
    %591 = vmatprep.subr.mxu0 0.0
    %592 = vmatpush1.msra.mxu0 0.0
    %593 = vmatprep.subr.mxu0 0.0
    %594 = vmatpush1.msra.mxu0 0.0
    %595 = vmatprep.subr.mxu0 0.0
    %596 = vmatpush1.msra.mxu0 0.0
    %597 = vmatprep.mubr.f32.mxu0 0.0
    %v598 = vand.u32 %v64, 4294901760
    %v599 = vsub.f32 %v64, %v598
    %600 = vmatmul.mubr.f32.gmra.mrb[0].mxu0 %v599
    %v601 = vpop.f32.mrb[0].mxu0
    %v602 = vadd.f32 %v465, %v601
    %v603 = vpop.f32.mrb[0].mxu0
    %v604 = vadd.f32 %v467, %v603
    %605 = vdwg.mxu0
    %v606 = vand.u32 %v98, 4294901760
    %607 = vmatprep.subr.mxu0 %v606
    %v608 = vand.u32 %v97, 4294901760
    %609 = vmatpush1.msra.mxu0 %v608
    %v610 = vand.u32 %v100, 4294901760
    %611 = vmatprep.subr.mxu0 %v610
    %v612 = vand.u32 %v99, 4294901760
    %613 = vmatpush1.msra.mxu0 %v612
    %v614 = vand.u32 %v102, 4294901760
    %615 = vmatprep.subr.mxu0 %v614
    %v616 = vand.u32 %v101, 4294901760
    %617 = vmatpush1.msra.mxu0 %v616
    %v618 = vand.u32 %v104, 4294901760
    %619 = vmatprep.subr.mxu0 %v618
    %v620 = vand.u32 %v103, 4294901760
    %621 = vmatpush1.msra.mxu0 %v620
    %v622 = vand.u32 %v106, 4294901760
    %623 = vmatprep.subr.mxu0 %v622
    %v624 = vand.u32 %v105, 4294901760
    %625 = vmatpush1.msra.mxu0 %v624
    %v626 = vand.u32 %v108, 4294901760
    %627 = vmatprep.subr.mxu0 %v626
    %v628 = vand.u32 %v107, 4294901760
    %629 = vmatpush1.msra.mxu0 %v628
    %v630 = vand.u32 %v110, 4294901760
    %631 = vmatprep.subr.mxu0 %v630
    %v632 = vand.u32 %v109, 4294901760
    %633 = vmatpush1.msra.mxu0 %v632
    %v634 = vand.u32 %v112, 4294901760
    %635 = vmatprep.subr.mxu0 %v634
    %v636 = vand.u32 %v111, 4294901760
    %637 = vmatpush1.msra.mxu0 %v636
    %v638 = vand.u32 %v114, 4294901760
    %639 = vmatprep.subr.mxu0 %v638
    %v640 = vand.u32 %v113, 4294901760
    %641 = vmatpush1.msra.mxu0 %v640
    %v642 = vand.u32 %v116, 4294901760
    %643 = vmatprep.subr.mxu0 %v642
    %v644 = vand.u32 %v115, 4294901760
    %645 = vmatpush1.msra.mxu0 %v644
    %v646 = vand.u32 %v118, 4294901760
    %647 = vmatprep.subr.mxu0 %v646
    %v648 = vand.u32 %v117, 4294901760
    %649 = vmatpush1.msra.mxu0 %v648
    %v650 = vand.u32 %v120, 4294901760
    %651 = vmatprep.subr.mxu0 %v650
    %v652 = vand.u32 %v119, 4294901760
    %653 = vmatpush1.msra.mxu0 %v652
    %v654 = vand.u32 %v122, 4294901760
    %655 = vmatprep.subr.mxu0 %v654
    %v656 = vand.u32 %v121, 4294901760
    %657 = vmatpush1.msra.mxu0 %v656
    %v658 = vand.u32 %v124, 4294901760
    %659 = vmatprep.subr.mxu0 %v658
    %v660 = vand.u32 %v123, 4294901760
    %661 = vmatpush1.msra.mxu0 %v660
    %v662 = vand.u32 %v126, 4294901760
    %663 = vmatprep.subr.mxu0 %v662
    %v664 = vand.u32 %v125, 4294901760
    %665 = vmatpush1.msra.mxu0 %v664
    %v666 = vand.u32 %v128, 4294901760
    %667 = vmatprep.subr.mxu0 %v666
    %v668 = vand.u32 %v127, 4294901760
    %669 = vmatpush1.msra.mxu0 %v668
    %670 = vmatprep.subr.mxu0 0.0
    %671 = vmatpush1.msra.mxu0 0.0
    %672 = vmatprep.subr.mxu0 0.0
    %673 = vmatpush1.msra.mxu0 0.0
    %674 = vmatprep.subr.mxu0 0.0
    %675 = vmatpush1.msra.mxu0 0.0
    %676 = vmatprep.subr.mxu0 0.0
    %677 = vmatpush1.msra.mxu0 0.0
    %678 = vmatprep.subr.mxu0 0.0
    %679 = vmatpush1.msra.mxu0 0.0
    %680 = vmatprep.subr.mxu0 0.0
    %681 = vmatpush1.msra.mxu0 0.0
    %682 = vmatprep.subr.mxu0 0.0
    %683 = vmatpush1.msra.mxu0 0.0
    %684 = vmatprep.subr.mxu0 0.0
    %685 = vmatpush1.msra.mxu0 0.0
    %686 = vmatprep.subr.mxu0 0.0
    %687 = vmatpush1.msra.mxu0 0.0
    %688 = vmatprep.subr.mxu0 0.0
    %689 = vmatpush1.msra.mxu0 0.0
    %690 = vmatprep.subr.mxu0 0.0
    %691 = vmatpush1.msra.mxu0 0.0
    %692 = vmatprep.subr.mxu0 0.0
    %693 = vmatpush1.msra.mxu0 0.0
    %694 = vmatprep.subr.mxu0 0.0
    %695 = vmatpush1.msra.mxu0 0.0
    %696 = vmatprep.subr.mxu0 0.0
    %697 = vmatpush1.msra.mxu0 0.0
    %698 = vmatprep.subr.mxu0 0.0
    %699 = vmatpush1.msra.mxu0 0.0
    %700 = vmatprep.subr.mxu0 0.0
    %701 = vmatpush1.msra.mxu0 0.0
    %702 = vmatprep.mubr.f32.mxu0 0.0
    %v703 = vand.u32 %v64, 4294901760
    %v704 = vsub.f32 %v64, %v703
    %v705 = vand.u32 %v704, 4294901760
    %706 = vmatmul.mubr.f32.gmra.mrb[0].mxu0 %v705
    %v707 = vpop.f32.mrb[0].mxu0
    %v708 = vadd.f32 %v602, %v707
    %v709 = vpop.f32.mrb[0].mxu0
    %v710 = vadd.f32 %v604, %v709
    %711 = vdwg.mxu0
    %v712 = vand.u32 %v98, 4294901760
    %v713 = vsub.f32 %v98, %v712
    %v714 = vand.u32 %v713, 4294901760
    %715 = vmatprep.subr.mxu0 %v714
    %v716 = vand.u32 %v97, 4294901760
    %v717 = vsub.f32 %v97, %v716
    %v718 = vand.u32 %v717, 4294901760
    %719 = vmatpush1.msra.mxu0 %v718
    %v720 = vand.u32 %v100, 4294901760
    %v721 = vsub.f32 %v100, %v720
    %v722 = vand.u32 %v721, 4294901760
    %723 = vmatprep.subr.mxu0 %v722
    %v724 = vand.u32 %v99, 4294901760
    %v725 = vsub.f32 %v99, %v724
    %v726 = vand.u32 %v725, 4294901760
    %727 = vmatpush1.msra.mxu0 %v726
    %v728 = vand.u32 %v102, 4294901760
    %v729 = vsub.f32 %v102, %v728
    %v730 = vand.u32 %v729, 4294901760
    %731 = vmatprep.subr.mxu0 %v730
    %v732 = vand.u32 %v101, 4294901760
    %v733 = vsub.f32 %v101, %v732
    %v734 = vand.u32 %v733, 4294901760
    %735 = vmatpush1.msra.mxu0 %v734
    %v736 = vand.u32 %v104, 4294901760
    %v737 = vsub.f32 %v104, %v736
    %v738 = vand.u32 %v737, 4294901760
    %739 = vmatprep.subr.mxu0 %v738
    %v740 = vand.u32 %v103, 4294901760
    %v741 = vsub.f32 %v103, %v740
    %v742 = vand.u32 %v741, 4294901760
    %743 = vmatpush1.msra.mxu0 %v742
    %v744 = vand.u32 %v106, 4294901760
    %v745 = vsub.f32 %v106, %v744
    %v746 = vand.u32 %v745, 4294901760
    %747 = vmatprep.subr.mxu0 %v746
    %v748 = vand.u32 %v105, 4294901760
    %v749 = vsub.f32 %v105, %v748
    %v750 = vand.u32 %v749, 4294901760
    %751 = vmatpush1.msra.mxu0 %v750
    %v752 = vand.u32 %v108, 4294901760
    %v753 = vsub.f32 %v108, %v752
    %v754 = vand.u32 %v753, 4294901760
    %755 = vmatprep.subr.mxu0 %v754
    %v756 = vand.u32 %v107, 4294901760
    %v757 = vsub.f32 %v107, %v756
    %v758 = vand.u32 %v757, 4294901760
    %759 = vmatpush1.msra.mxu0 %v758
    %v760 = vand.u32 %v110, 4294901760
    %v761 = vsub.f32 %v110, %v760
    %v762 = vand.u32 %v761, 4294901760
    %763 = vmatprep.subr.mxu0 %v762
    %v764 = vand.u32 %v109, 4294901760
    %v765 = vsub.f32 %v109, %v764
    %v766 = vand.u32 %v765, 4294901760
    %767 = vmatpush1.msra.mxu0 %v766
    %v768 = vand.u32 %v112, 4294901760
    %v769 = vsub.f32 %v112, %v768
    %v770 = vand.u32 %v769, 4294901760
    %771 = vmatprep.subr.mxu0 %v770
    %v772 = vand.u32 %v111, 4294901760
    %v773 = vsub.f32 %v111, %v772
    %v774 = vand.u32 %v773, 4294901760
    %775 = vmatpush1.msra.mxu0 %v774
    %v776 = vand.u32 %v114, 4294901760
    %v777 = vsub.f32 %v114, %v776
    %v778 = vand.u32 %v777, 4294901760
    %779 = vmatprep.subr.mxu0 %v778
    %v780 = vand.u32 %v113, 4294901760
    %v781 = vsub.f32 %v113, %v780
    %v782 = vand.u32 %v781, 4294901760
    %783 = vmatpush1.msra.mxu0 %v782
    %v784 = vand.u32 %v116, 4294901760
    %v785 = vsub.f32 %v116, %v784
    %v786 = vand.u32 %v785, 4294901760
    %787 = vmatprep.subr.mxu0 %v786
    %v788 = vand.u32 %v115, 4294901760
    %v789 = vsub.f32 %v115, %v788
    %v790 = vand.u32 %v789, 4294901760
    %791 = vmatpush1.msra.mxu0 %v790
    %v792 = vand.u32 %v118, 4294901760
    %v793 = vsub.f32 %v118, %v792
    %v794 = vand.u32 %v793, 4294901760
    %795 = vmatprep.subr.mxu0 %v794
    %v796 = vand.u32 %v117, 4294901760
    %v797 = vsub.f32 %v117, %v796
    %v798 = vand.u32 %v797, 4294901760
    %799 = vmatpush1.msra.mxu0 %v798
    %v800 = vand.u32 %v120, 4294901760
    %v801 = vsub.f32 %v120, %v800
    %v802 = vand.u32 %v801, 4294901760
    %803 = vmatprep.subr.mxu0 %v802
    %v804 = vand.u32 %v119, 4294901760
    %v805 = vsub.f32 %v119, %v804
    %v806 = vand.u32 %v805, 4294901760
    %807 = vmatpush1.msra.mxu0 %v806
    %v808 = vand.u32 %v122, 4294901760
    %v809 = vsub.f32 %v122, %v808
    %v810 = vand.u32 %v809, 4294901760
    %811 = vmatprep.subr.mxu0 %v810
    %v812 = vand.u32 %v121, 4294901760
    %v813 = vsub.f32 %v121, %v812
    %v814 = vand.u32 %v813, 4294901760
    %815 = vmatpush1.msra.mxu0 %v814
    %v816 = vand.u32 %v124, 4294901760
    %v817 = vsub.f32 %v124, %v816
    %v818 = vand.u32 %v817, 4294901760
    %819 = vmatprep.subr.mxu0 %v818
    %v820 = vand.u32 %v123, 4294901760
    %v821 = vsub.f32 %v123, %v820
    %v822 = vand.u32 %v821, 4294901760
    %823 = vmatpush1.msra.mxu0 %v822
    %v824 = vand.u32 %v126, 4294901760
    %v825 = vsub.f32 %v126, %v824
    %v826 = vand.u32 %v825, 4294901760
    %827 = vmatprep.subr.mxu0 %v826
    %v828 = vand.u32 %v125, 4294901760
    %v829 = vsub.f32 %v125, %v828
    %v830 = vand.u32 %v829, 4294901760
    %831 = vmatpush1.msra.mxu0 %v830
    %v832 = vand.u32 %v128, 4294901760
    %v833 = vsub.f32 %v128, %v832
    %v834 = vand.u32 %v833, 4294901760
    %835 = vmatprep.subr.mxu0 %v834
    %v836 = vand.u32 %v127, 4294901760
    %v837 = vsub.f32 %v127, %v836
    %v838 = vand.u32 %v837, 4294901760
    %839 = vmatpush1.msra.mxu0 %v838
    %840 = vmatprep.subr.mxu0 0.0
    %841 = vmatpush1.msra.mxu0 0.0
    %842 = vmatprep.subr.mxu0 0.0
    %843 = vmatpush1.msra.mxu0 0.0
    %844 = vmatprep.subr.mxu0 0.0
    %845 = vmatpush1.msra.mxu0 0.0
    %846 = vmatprep.subr.mxu0 0.0
    %847 = vmatpush1.msra.mxu0 0.0
    %848 = vmatprep.subr.mxu0 0.0
    %849 = vmatpush1.msra.mxu0 0.0
    %850 = vmatprep.subr.mxu0 0.0
    %851 = vmatpush1.msra.mxu0 0.0
    %852 = vmatprep.subr.mxu0 0.0
    %853 = vmatpush1.msra.mxu0 0.0
    %854 = vmatprep.subr.mxu0 0.0
    %855 = vmatpush1.msra.mxu0 0.0
    %856 = vmatprep.subr.mxu0 0.0
    %857 = vmatpush1.msra.mxu0 0.0
    %858 = vmatprep.subr.mxu0 0.0
    %859 = vmatpush1.msra.mxu0 0.0
    %860 = vmatprep.subr.mxu0 0.0
    %861 = vmatpush1.msra.mxu0 0.0
    %862 = vmatprep.subr.mxu0 0.0
    %863 = vmatpush1.msra.mxu0 0.0
    %864 = vmatprep.subr.mxu0 0.0
    %865 = vmatpush1.msra.mxu0 0.0
    %866 = vmatprep.subr.mxu0 0.0
    %867 = vmatpush1.msra.mxu0 0.0
    %868 = vmatprep.subr.mxu0 0.0
    %869 = vmatpush1.msra.mxu0 0.0
    %870 = vmatprep.subr.mxu0 0.0
    %871 = vmatpush1.msra.mxu0 0.0
    %872 = vmatprep.mubr.f32.mxu0 0.0
    %v873 = vand.u32 %v64, 4294901760
    %874 = vmatmul.mubr.f32.gmra.mrb[0].mxu0 %v873
    %v875 = vpop.f32.mrb[0].mxu0
    %v876 = vadd.f32 %v708, %v875
    %v877 = vpop.f32.mrb[0].mxu0
    %v878 = vadd.f32 %v710, %v877
    %879 = vdwg.mxu0
    %v880 = vand.u32 %v98, 4294901760
    %881 = vmatprep.subr.mxu0 %v880
    %v882 = vand.u32 %v97, 4294901760
    %883 = vmatpush1.msra.mxu0 %v882
    %v884 = vand.u32 %v100, 4294901760
    %885 = vmatprep.subr.mxu0 %v884
    %v886 = vand.u32 %v99, 4294901760
    %887 = vmatpush1.msra.mxu0 %v886
    %v888 = vand.u32 %v102, 4294901760
    %889 = vmatprep.subr.mxu0 %v888
    %v890 = vand.u32 %v101, 4294901760
    %891 = vmatpush1.msra.mxu0 %v890
    %v892 = vand.u32 %v104, 4294901760
    %893 = vmatprep.subr.mxu0 %v892
    %v894 = vand.u32 %v103, 4294901760
    %895 = vmatpush1.msra.mxu0 %v894
    %v896 = vand.u32 %v106, 4294901760
    %897 = vmatprep.subr.mxu0 %v896
    %v898 = vand.u32 %v105, 4294901760
    %899 = vmatpush1.msra.mxu0 %v898
    %v900 = vand.u32 %v108, 4294901760
    %901 = vmatprep.subr.mxu0 %v900
    %v902 = vand.u32 %v107, 4294901760
    %903 = vmatpush1.msra.mxu0 %v902
    %v904 = vand.u32 %v110, 4294901760
    %905 = vmatprep.subr.mxu0 %v904
    %v906 = vand.u32 %v109, 4294901760
    %907 = vmatpush1.msra.mxu0 %v906
    %v908 = vand.u32 %v112, 4294901760
    %909 = vmatprep.subr.mxu0 %v908
    %v910 = vand.u32 %v111, 4294901760
    %911 = vmatpush1.msra.mxu0 %v910
    %v912 = vand.u32 %v114, 4294901760
    %913 = vmatprep.subr.mxu0 %v912
    %v914 = vand.u32 %v113, 4294901760
    %915 = vmatpush1.msra.mxu0 %v914
    %v916 = vand.u32 %v116, 4294901760
    %917 = vmatprep.subr.mxu0 %v916
    %v918 = vand.u32 %v115, 4294901760
    %919 = vmatpush1.msra.mxu0 %v918
    %v920 = vand.u32 %v118, 4294901760
    %921 = vmatprep.subr.mxu0 %v920
    %v922 = vand.u32 %v117, 4294901760
    %923 = vmatpush1.msra.mxu0 %v922
    %v924 = vand.u32 %v120, 4294901760
    %925 = vmatprep.subr.mxu0 %v924
    %v926 = vand.u32 %v119, 4294901760
    %927 = vmatpush1.msra.mxu0 %v926
    %v928 = vand.u32 %v122, 4294901760
    %929 = vmatprep.subr.mxu0 %v928
    %v930 = vand.u32 %v121, 4294901760
    %931 = vmatpush1.msra.mxu0 %v930
    %v932 = vand.u32 %v124, 4294901760
    %933 = vmatprep.subr.mxu0 %v932
    %v934 = vand.u32 %v123, 4294901760
    %935 = vmatpush1.msra.mxu0 %v934
    %v936 = vand.u32 %v126, 4294901760
    %937 = vmatprep.subr.mxu0 %v936
    %v938 = vand.u32 %v125, 4294901760
    %939 = vmatpush1.msra.mxu0 %v938
    %v940 = vand.u32 %v128, 4294901760
    %941 = vmatprep.subr.mxu0 %v940
    %v942 = vand.u32 %v127, 4294901760
    %943 = vmatpush1.msra.mxu0 %v942
    %944 = vmatprep.subr.mxu0 0.0
    %945 = vmatpush1.msra.mxu0 0.0
    %946 = vmatprep.subr.mxu0 0.0
    %947 = vmatpush1.msra.mxu0 0.0
    %948 = vmatprep.subr.mxu0 0.0
    %949 = vmatpush1.msra.mxu0 0.0
    %950 = vmatprep.subr.mxu0 0.0
    %951 = vmatpush1.msra.mxu0 0.0
    %952 = vmatprep.subr.mxu0 0.0
    %953 = vmatpush1.msra.mxu0 0.0
    %954 = vmatprep.subr.mxu0 0.0
    %955 = vmatpush1.msra.mxu0 0.0
    %956 = vmatprep.subr.mxu0 0.0
    %957 = vmatpush1.msra.mxu0 0.0
    %958 = vmatprep.subr.mxu0 0.0
    %959 = vmatpush1.msra.mxu0 0.0
    %960 = vmatprep.subr.mxu0 0.0
    %961 = vmatpush1.msra.mxu0 0.0
    %962 = vmatprep.subr.mxu0 0.0
    %963 = vmatpush1.msra.mxu0 0.0
    %964 = vmatprep.subr.mxu0 0.0
    %965 = vmatpush1.msra.mxu0 0.0
    %966 = vmatprep.subr.mxu0 0.0
    %967 = vmatpush1.msra.mxu0 0.0
    %968 = vmatprep.subr.mxu0 0.0
    %969 = vmatpush1.msra.mxu0 0.0
    %970 = vmatprep.subr.mxu0 0.0
    %971 = vmatpush1.msra.mxu0 0.0
    %972 = vmatprep.subr.mxu0 0.0
    %973 = vmatpush1.msra.mxu0 0.0
    %974 = vmatprep.subr.mxu0 0.0
    %975 = vmatpush1.msra.mxu0 0.0
    %976 = vmatprep.mubr.f32.mxu0 0.0
    %v977 = vand.u32 %v64, 4294901760
    %978 = vmatmul.mubr.f32.gmra.mrb[0].mxu0 %v977
    %v979 = vpop.f32.mrb[0].mxu0
    %v980 = vadd.f32 %v876, %v979
    %v981 = vpop.f32.mrb[0].mxu0
    %v982 = vadd.f32 %v878, %v981
    %983 = vdwg.mxu0
    %v984 = vand.u32 %v66, 4294901760
    %985 = vmatprep.subr.mxu0 %v984
    %v986 = vand.u32 %v65, 4294901760
    %987 = vmatpush1.msra.mxu0 %v986
    %v988 = vand.u32 %v68, 4294901760
    %989 = vmatprep.subr.mxu0 %v988
    %v990 = vand.u32 %v67, 4294901760
    %991 = vmatpush1.msra.mxu0 %v990
    %v992 = vand.u32 %v70, 4294901760
    %993 = vmatprep.subr.mxu0 %v992
    %v994 = vand.u32 %v69, 4294901760
    %995 = vmatpush1.msra.mxu0 %v994
    %v996 = vand.u32 %v72, 4294901760
    %997 = vmatprep.subr.mxu0 %v996
    %v998 = vand.u32 %v71, 4294901760
    %999 = vmatpush1.msra.mxu0 %v998
    %v1000 = vand.u32 %v74, 4294901760
    %1001 = vmatprep.subr.mxu0 %v1000
    %v1002 = vand.u32 %v73, 4294901760
    %1003 = vmatpush1.msra.mxu0 %v1002
    %v1004 = vand.u32 %v76, 4294901760
    %1005 = vmatprep.subr.mxu0 %v1004
    %v1006 = vand.u32 %v75, 4294901760
    %1007 = vmatpush1.msra.mxu0 %v1006
    %v1008 = vand.u32 %v78, 4294901760
    %1009 = vmatprep.subr.mxu0 %v1008
    %v1010 = vand.u32 %v77, 4294901760
    %1011 = vmatpush1.msra.mxu0 %v1010
    %v1012 = vand.u32 %v80, 4294901760
    %1013 = vmatprep.subr.mxu0 %v1012
    %v1014 = vand.u32 %v79, 4294901760
    %1015 = vmatpush1.msra.mxu0 %v1014
    %v1016 = vand.u32 %v82, 4294901760
    %1017 = vmatprep.subr.mxu0 %v1016
    %v1018 = vand.u32 %v81, 4294901760
    %1019 = vmatpush1.msra.mxu0 %v1018
    %v1020 = vand.u32 %v84, 4294901760
    %1021 = vmatprep.subr.mxu0 %v1020
    %v1022 = vand.u32 %v83, 4294901760
    %1023 = vmatpush1.msra.mxu0 %v1022
    %v1024 = vand.u32 %v86, 4294901760
    %1025 = vmatprep.subr.mxu0 %v1024
    %v1026 = vand.u32 %v85, 4294901760
    %1027 = vmatpush1.msra.mxu0 %v1026
    %v1028 = vand.u32 %v88, 4294901760
    %1029 = vmatprep.subr.mxu0 %v1028
    %v1030 = vand.u32 %v87, 4294901760
    %1031 = vmatpush1.msra.mxu0 %v1030
    %v1032 = vand.u32 %v90, 4294901760
    %1033 = vmatprep.subr.mxu0 %v1032
    %v1034 = vand.u32 %v89, 4294901760
    %1035 = vmatpush1.msra.mxu0 %v1034
    %v1036 = vand.u32 %v92, 4294901760
    %1037 = vmatprep.subr.mxu0 %v1036
    %v1038 = vand.u32 %v91, 4294901760
    %1039 = vmatpush1.msra.mxu0 %v1038
    %v1040 = vand.u32 %v94, 4294901760
    %1041 = vmatprep.subr.mxu0 %v1040
    %v1042 = vand.u32 %v93, 4294901760
    %1043 = vmatpush1.msra.mxu0 %v1042
    %v1044 = vand.u32 %v96, 4294901760
    %1045 = vmatprep.subr.mxu0 %v1044
    %v1046 = vand.u32 %v95, 4294901760
    %1047 = vmatpush1.msra.mxu0 %v1046
    %1048 = vmatprep.subr.mxu0 0.0
    %1049 = vmatpush1.msra.mxu0 0.0
    %1050 = vmatprep.subr.mxu0 0.0
    %1051 = vmatpush1.msra.mxu0 0.0
    %1052 = vmatprep.subr.mxu0 0.0
    %1053 = vmatpush1.msra.mxu0 0.0
    %1054 = vmatprep.subr.mxu0 0.0
    %1055 = vmatpush1.msra.mxu0 0.0
    %1056 = vmatprep.subr.mxu0 0.0
    %1057 = vmatpush1.msra.mxu0 0.0
    %1058 = vmatprep.subr.mxu0 0.0
    %1059 = vmatpush1.msra.mxu0 0.0
    %1060 = vmatprep.subr.mxu0 0.0
    %1061 = vmatpush1.msra.mxu0 0.0
    %1062 = vmatprep.subr.mxu0 0.0
    %1063 = vmatpush1.msra.mxu0 0.0
    %1064 = vmatprep.subr.mxu0 0.0
    %1065 = vmatpush1.msra.mxu0 0.0
    %1066 = vmatprep.subr.mxu0 0.0
    %1067 = vmatpush1.msra.mxu0 0.0
    %1068 = vmatprep.subr.mxu0 0.0
    %1069 = vmatpush1.msra.mxu0 0.0
    %1070 = vmatprep.subr.mxu0 0.0
    %1071 = vmatpush1.msra.mxu0 0.0
    %1072 = vmatprep.subr.mxu0 0.0
    %1073 = vmatpush1.msra.mxu0 0.0
    %1074 = vmatprep.subr.mxu0 0.0
    %1075 = vmatpush1.msra.mxu0 0.0
    %1076 = vmatprep.subr.mxu0 0.0
    %1077 = vmatpush1.msra.mxu0 0.0
    %1078 = vmatprep.subr.mxu0 0.0
    %1079 = vmatpush1.msra.mxu0 0.0
    %1080 = vmatprep.mubr.f32.mxu0 0.0
    %v1081 = vand.u32 %v54, 4294901760
    %v1082 = vsub.f32 %v54, %v1081
    %v1083 = vand.u32 %v1082, 4294901760
    %v1084 = vsub.f32 %v1082, %v1083
    %v1085 = vand.u32 %v1084, 4294901760
    %1086 = vmatmul.mubr.f32.gmra.mrb[0].mxu0 %v1085
    %v1087 = vpop.f32.mrb[0].mxu0
    %v1088 = vadd.f32 %v980, %v1087
    %v1089 = vpop.f32.mrb[0].mxu0
    %v1090 = vadd.f32 %v982, %v1089
    %1091 = vdwg.mxu0
    %v1092 = vand.u32 %v66, 4294901760
    %v1093 = vsub.f32 %v66, %v1092
    %v1094 = vand.u32 %v1093, 4294901760
    %v1095 = vsub.f32 %v1093, %v1094
    %v1096 = vand.u32 %v1095, 4294901760
    %1097 = vmatprep.subr.mxu0 %v1096
    %v1098 = vand.u32 %v65, 4294901760
    %v1099 = vsub.f32 %v65, %v1098
    %v1100 = vand.u32 %v1099, 4294901760
    %v1101 = vsub.f32 %v1099, %v1100
    %v1102 = vand.u32 %v1101, 4294901760
    %1103 = vmatpush1.msra.mxu0 %v1102
    %v1104 = vand.u32 %v68, 4294901760
    %v1105 = vsub.f32 %v68, %v1104
    %v1106 = vand.u32 %v1105, 4294901760
    %v1107 = vsub.f32 %v1105, %v1106
    %v1108 = vand.u32 %v1107, 4294901760
    %1109 = vmatprep.subr.mxu0 %v1108
    %v1110 = vand.u32 %v67, 4294901760
    %v1111 = vsub.f32 %v67, %v1110
    %v1112 = vand.u32 %v1111, 4294901760
    %v1113 = vsub.f32 %v1111, %v1112
    %v1114 = vand.u32 %v1113, 4294901760
    %1115 = vmatpush1.msra.mxu0 %v1114
    %v1116 = vand.u32 %v70, 4294901760
    %v1117 = vsub.f32 %v70, %v1116
    %v1118 = vand.u32 %v1117, 4294901760
    %v1119 = vsub.f32 %v1117, %v1118
    %v1120 = vand.u32 %v1119, 4294901760
    %1121 = vmatprep.subr.mxu0 %v1120
    %v1122 = vand.u32 %v69, 4294901760
    %v1123 = vsub.f32 %v69, %v1122
    %v1124 = vand.u32 %v1123, 4294901760
    %v1125 = vsub.f32 %v1123, %v1124
    %v1126 = vand.u32 %v1125, 4294901760
    %1127 = vmatpush1.msra.mxu0 %v1126
    %v1128 = vand.u32 %v72, 4294901760
    %v1129 = vsub.f32 %v72, %v1128
    %v1130 = vand.u32 %v1129, 4294901760
    %v1131 = vsub.f32 %v1129, %v1130
    %v1132 = vand.u32 %v1131, 4294901760
    %1133 = vmatprep.subr.mxu0 %v1132
    %v1134 = vand.u32 %v71, 4294901760
    %v1135 = vsub.f32 %v71, %v1134
    %v1136 = vand.u32 %v1135, 4294901760
    %v1137 = vsub.f32 %v1135, %v1136
    %v1138 = vand.u32 %v1137, 4294901760
    %1139 = vmatpush1.msra.mxu0 %v1138
    %v1140 = vand.u32 %v74, 4294901760
    %v1141 = vsub.f32 %v74, %v1140
    %v1142 = vand.u32 %v1141, 4294901760
    %v1143 = vsub.f32 %v1141, %v1142
    %v1144 = vand.u32 %v1143, 4294901760
    %1145 = vmatprep.subr.mxu0 %v1144
    %v1146 = vand.u32 %v73, 4294901760
    %v1147 = vsub.f32 %v73, %v1146
    %v1148 = vand.u32 %v1147, 4294901760
    %v1149 = vsub.f32 %v1147, %v1148
    %v1150 = vand.u32 %v1149, 4294901760
    %1151 = vmatpush1.msra.mxu0 %v1150
    %v1152 = vand.u32 %v76, 4294901760
    %v1153 = vsub.f32 %v76, %v1152
    %v1154 = vand.u32 %v1153, 4294901760
    %v1155 = vsub.f32 %v1153, %v1154
    %v1156 = vand.u32 %v1155, 4294901760
    %1157 = vmatprep.subr.mxu0 %v1156
    %v1158 = vand.u32 %v75, 4294901760
    %v1159 = vsub.f32 %v75, %v1158
    %v1160 = vand.u32 %v1159, 4294901760
    %v1161 = vsub.f32 %v1159, %v1160
    %v1162 = vand.u32 %v1161, 4294901760
    %1163 = vmatpush1.msra.mxu0 %v1162
    %v1164 = vand.u32 %v78, 4294901760
    %v1165 = vsub.f32 %v78, %v1164
    %v1166 = vand.u32 %v1165, 4294901760
    %v1167 = vsub.f32 %v1165, %v1166
    %v1168 = vand.u32 %v1167, 4294901760
    %1169 = vmatprep.subr.mxu0 %v1168
    %v1170 = vand.u32 %v77, 4294901760
    %v1171 = vsub.f32 %v77, %v1170
    %v1172 = vand.u32 %v1171, 4294901760
    %v1173 = vsub.f32 %v1171, %v1172
    %v1174 = vand.u32 %v1173, 4294901760
    %1175 = vmatpush1.msra.mxu0 %v1174
    %v1176 = vand.u32 %v80, 4294901760
    %v1177 = vsub.f32 %v80, %v1176
    %v1178 = vand.u32 %v1177, 4294901760
    %v1179 = vsub.f32 %v1177, %v1178
    %v1180 = vand.u32 %v1179, 4294901760
    %1181 = vmatprep.subr.mxu0 %v1180
    %v1182 = vand.u32 %v79, 4294901760
    %v1183 = vsub.f32 %v79, %v1182
    %v1184 = vand.u32 %v1183, 4294901760
    %v1185 = vsub.f32 %v1183, %v1184
    %v1186 = vand.u32 %v1185, 4294901760
    %1187 = vmatpush1.msra.mxu0 %v1186
    %v1188 = vand.u32 %v82, 4294901760
    %v1189 = vsub.f32 %v82, %v1188
    %v1190 = vand.u32 %v1189, 4294901760
    %v1191 = vsub.f32 %v1189, %v1190
    %v1192 = vand.u32 %v1191, 4294901760
    %1193 = vmatprep.subr.mxu0 %v1192
    %v1194 = vand.u32 %v81, 4294901760
    %v1195 = vsub.f32 %v81, %v1194
    %v1196 = vand.u32 %v1195, 4294901760
    %v1197 = vsub.f32 %v1195, %v1196
    %v1198 = vand.u32 %v1197, 4294901760
    %1199 = vmatpush1.msra.mxu0 %v1198
    %v1200 = vand.u32 %v84, 4294901760
    %v1201 = vsub.f32 %v84, %v1200
    %v1202 = vand.u32 %v1201, 4294901760
    %v1203 = vsub.f32 %v1201, %v1202
    %v1204 = vand.u32 %v1203, 4294901760
    %1205 = vmatprep.subr.mxu0 %v1204
    %v1206 = vand.u32 %v83, 4294901760
    %v1207 = vsub.f32 %v83, %v1206
    %v1208 = vand.u32 %v1207, 4294901760
    %v1209 = vsub.f32 %v1207, %v1208
    %v1210 = vand.u32 %v1209, 4294901760
    %1211 = vmatpush1.msra.mxu0 %v1210
    %v1212 = vand.u32 %v86, 4294901760
    %v1213 = vsub.f32 %v86, %v1212
    %v1214 = vand.u32 %v1213, 4294901760
    %v1215 = vsub.f32 %v1213, %v1214
    %v1216 = vand.u32 %v1215, 4294901760
    %1217 = vmatprep.subr.mxu0 %v1216
    %v1218 = vand.u32 %v85, 4294901760
    %v1219 = vsub.f32 %v85, %v1218
    %v1220 = vand.u32 %v1219, 4294901760
    %v1221 = vsub.f32 %v1219, %v1220
    %v1222 = vand.u32 %v1221, 4294901760
    %1223 = vmatpush1.msra.mxu0 %v1222
    %v1224 = vand.u32 %v88, 4294901760
    %v1225 = vsub.f32 %v88, %v1224
    %v1226 = vand.u32 %v1225, 4294901760
    %v1227 = vsub.f32 %v1225, %v1226
    %v1228 = vand.u32 %v1227, 4294901760
    %1229 = vmatprep.subr.mxu0 %v1228
    %v1230 = vand.u32 %v87, 4294901760
    %v1231 = vsub.f32 %v87, %v1230
    %v1232 = vand.u32 %v1231, 4294901760
    %v1233 = vsub.f32 %v1231, %v1232
    %v1234 = vand.u32 %v1233, 4294901760
    %1235 = vmatpush1.msra.mxu0 %v1234
    %v1236 = vand.u32 %v90, 4294901760
    %v1237 = vsub.f32 %v90, %v1236
    %v1238 = vand.u32 %v1237, 4294901760
    %v1239 = vsub.f32 %v1237, %v1238
    %v1240 = vand.u32 %v1239, 4294901760
    %1241 = vmatprep.subr.mxu0 %v1240
    %v1242 = vand.u32 %v89, 4294901760
    %v1243 = vsub.f32 %v89, %v1242
    %v1244 = vand.u32 %v1243, 4294901760
    %v1245 = vsub.f32 %v1243, %v1244
    %v1246 = vand.u32 %v1245, 4294901760
    %1247 = vmatpush1.msra.mxu0 %v1246
    %v1248 = vand.u32 %v92, 4294901760
    %v1249 = vsub.f32 %v92, %v1248
    %v1250 = vand.u32 %v1249, 4294901760
    %v1251 = vsub.f32 %v1249, %v1250
    %v1252 = vand.u32 %v1251, 4294901760
    %1253 = vmatprep.subr.mxu0 %v1252
    %v1254 = vand.u32 %v91, 4294901760
    %v1255 = vsub.f32 %v91, %v1254
    %v1256 = vand.u32 %v1255, 4294901760
    %v1257 = vsub.f32 %v1255, %v1256
    %v1258 = vand.u32 %v1257, 4294901760
    %1259 = vmatpush1.msra.mxu0 %v1258
    %v1260 = vand.u32 %v94, 4294901760
    %v1261 = vsub.f32 %v94, %v1260
    %v1262 = vand.u32 %v1261, 4294901760
    %v1263 = vsub.f32 %v1261, %v1262
    %v1264 = vand.u32 %v1263, 4294901760
    %1265 = vmatprep.subr.mxu0 %v1264
    %v1266 = vand.u32 %v93, 4294901760
    %v1267 = vsub.f32 %v93, %v1266
    %v1268 = vand.u32 %v1267, 4294901760
    %v1269 = vsub.f32 %v1267, %v1268
    %v1270 = vand.u32 %v1269, 4294901760
    %1271 = vmatpush1.msra.mxu0 %v1270
    %v1272 = vand.u32 %v96, 4294901760
    %v1273 = vsub.f32 %v96, %v1272
    %v1274 = vand.u32 %v1273, 4294901760
    %v1275 = vsub.f32 %v1273, %v1274
    %v1276 = vand.u32 %v1275, 4294901760
    %1277 = vmatprep.subr.mxu0 %v1276
    %v1278 = vand.u32 %v95, 4294901760
    %v1279 = vsub.f32 %v95, %v1278
    %v1280 = vand.u32 %v1279, 4294901760
    %v1281 = vsub.f32 %v1279, %v1280
    %v1282 = vand.u32 %v1281, 4294901760
    %1283 = vmatpush1.msra.mxu0 %v1282
    %1284 = vmatprep.subr.mxu0 0.0
    %1285 = vmatpush1.msra.mxu0 0.0
    %1286 = vmatprep.subr.mxu0 0.0
    %1287 = vmatpush1.msra.mxu0 0.0
    %1288 = vmatprep.subr.mxu0 0.0
    %1289 = vmatpush1.msra.mxu0 0.0
    %1290 = vmatprep.subr.mxu0 0.0
    %1291 = vmatpush1.msra.mxu0 0.0
    %1292 = vmatprep.subr.mxu0 0.0
    %1293 = vmatpush1.msra.mxu0 0.0
    %1294 = vmatprep.subr.mxu0 0.0
    %1295 = vmatpush1.msra.mxu0 0.0
    %1296 = vmatprep.subr.mxu0 0.0
    %1297 = vmatpush1.msra.mxu0 0.0
    %1298 = vmatprep.subr.mxu0 0.0
    %1299 = vmatpush1.msra.mxu0 0.0
    %1300 = vmatprep.subr.mxu0 0.0
    %1301 = vmatpush1.msra.mxu0 0.0
    %1302 = vmatprep.subr.mxu0 0.0
    %1303 = vmatpush1.msra.mxu0 0.0
    %1304 = vmatprep.subr.mxu0 0.0
    %1305 = vmatpush1.msra.mxu0 0.0
    %1306 = vmatprep.subr.mxu0 0.0
    %1307 = vmatpush1.msra.mxu0 0.0
    %1308 = vmatprep.subr.mxu0 0.0
    %1309 = vmatpush1.msra.mxu0 0.0
    %1310 = vmatprep.subr.mxu0 0.0
    %1311 = vmatpush1.msra.mxu0 0.0
    %1312 = vmatprep.subr.mxu0 0.0
    %1313 = vmatpush1.msra.mxu0 0.0
    %1314 = vmatprep.subr.mxu0 0.0
    %1315 = vmatpush1.msra.mxu0 0.0
    %1316 = vmatprep.mubr.f32.mxu0 0.0
    %v1317 = vand.u32 %v54, 4294901760
    %1318 = vmatmul.mubr.f32.gmra.mrb[0].mxu0 %v1317
    %v1319 = vpop.f32.mrb[0].mxu0
    %v1320 = vadd.f32 %v1088, %v1319
    %v1321 = vpop.f32.mrb[0].mxu0
    %v1322 = vadd.f32 %v1090, %v1321
    %1323 = vdwg.mxu0
    %v1324 = vand.u32 %v66, 4294901760
    %v1325 = vsub.f32 %v66, %v1324
    %1326 = vmatprep.subr.mxu0 %v1325
    %v1327 = vand.u32 %v65, 4294901760
    %v1328 = vsub.f32 %v65, %v1327
    %1329 = vmatpush1.msra.mxu0 %v1328
    %v1330 = vand.u32 %v68, 4294901760
    %v1331 = vsub.f32 %v68, %v1330
    %1332 = vmatprep.subr.mxu0 %v1331
    %v1333 = vand.u32 %v67, 4294901760
    %v1334 = vsub.f32 %v67, %v1333
    %1335 = vmatpush1.msra.mxu0 %v1334
    %v1336 = vand.u32 %v70, 4294901760
    %v1337 = vsub.f32 %v70, %v1336
    %1338 = vmatprep.subr.mxu0 %v1337
    %v1339 = vand.u32 %v69, 4294901760
    %v1340 = vsub.f32 %v69, %v1339
    %1341 = vmatpush1.msra.mxu0 %v1340
    %v1342 = vand.u32 %v72, 4294901760
    %v1343 = vsub.f32 %v72, %v1342
    %1344 = vmatprep.subr.mxu0 %v1343
    %v1345 = vand.u32 %v71, 4294901760
    %v1346 = vsub.f32 %v71, %v1345
    %1347 = vmatpush1.msra.mxu0 %v1346
    %v1348 = vand.u32 %v74, 4294901760
    %v1349 = vsub.f32 %v74, %v1348
    %1350 = vmatprep.subr.mxu0 %v1349
    %v1351 = vand.u32 %v73, 4294901760
    %v1352 = vsub.f32 %v73, %v1351
    %1353 = vmatpush1.msra.mxu0 %v1352
    %v1354 = vand.u32 %v76, 4294901760
    %v1355 = vsub.f32 %v76, %v1354
    %1356 = vmatprep.subr.mxu0 %v1355
    %v1357 = vand.u32 %v75, 4294901760
    %v1358 = vsub.f32 %v75, %v1357
    %1359 = vmatpush1.msra.mxu0 %v1358
    %v1360 = vand.u32 %v78, 4294901760
    %v1361 = vsub.f32 %v78, %v1360
    %1362 = vmatprep.subr.mxu0 %v1361
    %v1363 = vand.u32 %v77, 4294901760
    %v1364 = vsub.f32 %v77, %v1363
    %1365 = vmatpush1.msra.mxu0 %v1364
    %v1366 = vand.u32 %v80, 4294901760
    %v1367 = vsub.f32 %v80, %v1366
    %1368 = vmatprep.subr.mxu0 %v1367
    %v1369 = vand.u32 %v79, 4294901760
    %v1370 = vsub.f32 %v79, %v1369
    %1371 = vmatpush1.msra.mxu0 %v1370
    %v1372 = vand.u32 %v82, 4294901760
    %v1373 = vsub.f32 %v82, %v1372
    %1374 = vmatprep.subr.mxu0 %v1373
    %v1375 = vand.u32 %v81, 4294901760
    %v1376 = vsub.f32 %v81, %v1375
    %1377 = vmatpush1.msra.mxu0 %v1376
    %v1378 = vand.u32 %v84, 4294901760
    %v1379 = vsub.f32 %v84, %v1378
    %1380 = vmatprep.subr.mxu0 %v1379
    %v1381 = vand.u32 %v83, 4294901760
    %v1382 = vsub.f32 %v83, %v1381
    %1383 = vmatpush1.msra.mxu0 %v1382
    %v1384 = vand.u32 %v86, 4294901760
    %v1385 = vsub.f32 %v86, %v1384
    %1386 = vmatprep.subr.mxu0 %v1385
    %v1387 = vand.u32 %v85, 4294901760
    %v1388 = vsub.f32 %v85, %v1387
    %1389 = vmatpush1.msra.mxu0 %v1388
    %v1390 = vand.u32 %v88, 4294901760
    %v1391 = vsub.f32 %v88, %v1390
    %1392 = vmatprep.subr.mxu0 %v1391
    %v1393 = vand.u32 %v87, 4294901760
    %v1394 = vsub.f32 %v87, %v1393
    %1395 = vmatpush1.msra.mxu0 %v1394
    %v1396 = vand.u32 %v90, 4294901760
    %v1397 = vsub.f32 %v90, %v1396
    %1398 = vmatprep.subr.mxu0 %v1397
    %v1399 = vand.u32 %v89, 4294901760
    %v1400 = vsub.f32 %v89, %v1399
    %1401 = vmatpush1.msra.mxu0 %v1400
    %v1402 = vand.u32 %v92, 4294901760
    %v1403 = vsub.f32 %v92, %v1402
    %1404 = vmatprep.subr.mxu0 %v1403
    %v1405 = vand.u32 %v91, 4294901760
    %v1406 = vsub.f32 %v91, %v1405
    %1407 = vmatpush1.msra.mxu0 %v1406
    %v1408 = vand.u32 %v94, 4294901760
    %v1409 = vsub.f32 %v94, %v1408
    %1410 = vmatprep.subr.mxu0 %v1409
    %v1411 = vand.u32 %v93, 4294901760
    %v1412 = vsub.f32 %v93, %v1411
    %1413 = vmatpush1.msra.mxu0 %v1412
    %v1414 = vand.u32 %v96, 4294901760
    %v1415 = vsub.f32 %v96, %v1414
    %1416 = vmatprep.subr.mxu0 %v1415
    %v1417 = vand.u32 %v95, 4294901760
    %v1418 = vsub.f32 %v95, %v1417
    %1419 = vmatpush1.msra.mxu0 %v1418
    %1420 = vmatprep.subr.mxu0 0.0
    %1421 = vmatpush1.msra.mxu0 0.0
    %1422 = vmatprep.subr.mxu0 0.0
    %1423 = vmatpush1.msra.mxu0 0.0
    %1424 = vmatprep.subr.mxu0 0.0
    %1425 = vmatpush1.msra.mxu0 0.0
    %1426 = vmatprep.subr.mxu0 0.0
    %1427 = vmatpush1.msra.mxu0 0.0
    %1428 = vmatprep.subr.mxu0 0.0
    %1429 = vmatpush1.msra.mxu0 0.0
    %1430 = vmatprep.subr.mxu0 0.0
    %1431 = vmatpush1.msra.mxu0 0.0
    %1432 = vmatprep.subr.mxu0 0.0
    %1433 = vmatpush1.msra.mxu0 0.0
    %1434 = vmatprep.subr.mxu0 0.0
    %1435 = vmatpush1.msra.mxu0 0.0
    %1436 = vmatprep.subr.mxu0 0.0
    %1437 = vmatpush1.msra.mxu0 0.0
    %1438 = vmatprep.subr.mxu0 0.0
    %1439 = vmatpush1.msra.mxu0 0.0
    %1440 = vmatprep.subr.mxu0 0.0
    %1441 = vmatpush1.msra.mxu0 0.0
    %1442 = vmatprep.subr.mxu0 0.0
    %1443 = vmatpush1.msra.mxu0 0.0
    %1444 = vmatprep.subr.mxu0 0.0
    %1445 = vmatpush1.msra.mxu0 0.0
    %1446 = vmatprep.subr.mxu0 0.0
    %1447 = vmatpush1.msra.mxu0 0.0
    %1448 = vmatprep.subr.mxu0 0.0
    %1449 = vmatpush1.msra.mxu0 0.0
    %1450 = vmatprep.subr.mxu0 0.0
    %1451 = vmatpush1.msra.mxu0 0.0
    %1452 = vmatprep.mubr.f32.mxu0 0.0
    %v1453 = vand.u32 %v54, 4294901760
    %v1454 = vsub.f32 %v54, %v1453
    %1455 = vmatmul.mubr.f32.gmra.mrb[0].mxu0 %v1454
    %v1456 = vpop.f32.mrb[0].mxu0
    %v1457 = vadd.f32 %v1320, %v1456
    %v1458 = vpop.f32.mrb[0].mxu0
    %v1459 = vadd.f32 %v1322, %v1458
    %1460 = vdwg.mxu0
    %v1461 = vand.u32 %v66, 4294901760
    %1462 = vmatprep.subr.mxu0 %v1461
    %v1463 = vand.u32 %v65, 4294901760
    %1464 = vmatpush1.msra.mxu0 %v1463
    %v1465 = vand.u32 %v68, 4294901760
    %1466 = vmatprep.subr.mxu0 %v1465
    %v1467 = vand.u32 %v67, 4294901760
    %1468 = vmatpush1.msra.mxu0 %v1467
    %v1469 = vand.u32 %v70, 4294901760
    %1470 = vmatprep.subr.mxu0 %v1469
    %v1471 = vand.u32 %v69, 4294901760
    %1472 = vmatpush1.msra.mxu0 %v1471
    %v1473 = vand.u32 %v72, 4294901760
    %1474 = vmatprep.subr.mxu0 %v1473
    %v1475 = vand.u32 %v71, 4294901760
    %1476 = vmatpush1.msra.mxu0 %v1475
    %v1477 = vand.u32 %v74, 4294901760
    %1478 = vmatprep.subr.mxu0 %v1477
    %v1479 = vand.u32 %v73, 4294901760
    %1480 = vmatpush1.msra.mxu0 %v1479
    %v1481 = vand.u32 %v76, 4294901760
    %1482 = vmatprep.subr.mxu0 %v1481
    %v1483 = vand.u32 %v75, 4294901760
    %1484 = vmatpush1.msra.mxu0 %v1483
    %v1485 = vand.u32 %v78, 4294901760
    %1486 = vmatprep.subr.mxu0 %v1485
    %v1487 = vand.u32 %v77, 4294901760
    %1488 = vmatpush1.msra.mxu0 %v1487
    %v1489 = vand.u32 %v80, 4294901760
    %1490 = vmatprep.subr.mxu0 %v1489
    %v1491 = vand.u32 %v79, 4294901760
    %1492 = vmatpush1.msra.mxu0 %v1491
    %v1493 = vand.u32 %v82, 4294901760
    %1494 = vmatprep.subr.mxu0 %v1493
    %v1495 = vand.u32 %v81, 4294901760
    %1496 = vmatpush1.msra.mxu0 %v1495
    %v1497 = vand.u32 %v84, 4294901760
    %1498 = vmatprep.subr.mxu0 %v1497
    %v1499 = vand.u32 %v83, 4294901760
    %1500 = vmatpush1.msra.mxu0 %v1499
    %v1501 = vand.u32 %v86, 4294901760
    %1502 = vmatprep.subr.mxu0 %v1501
    %v1503 = vand.u32 %v85, 4294901760
    %1504 = vmatpush1.msra.mxu0 %v1503
    %v1505 = vand.u32 %v88, 4294901760
    %1506 = vmatprep.subr.mxu0 %v1505
    %v1507 = vand.u32 %v87, 4294901760
    %1508 = vmatpush1.msra.mxu0 %v1507
    %v1509 = vand.u32 %v90, 4294901760
    %1510 = vmatprep.subr.mxu0 %v1509
    %v1511 = vand.u32 %v89, 4294901760
    %1512 = vmatpush1.msra.mxu0 %v1511
    %v1513 = vand.u32 %v92, 4294901760
    %1514 = vmatprep.subr.mxu0 %v1513
    %v1515 = vand.u32 %v91, 4294901760
    %1516 = vmatpush1.msra.mxu0 %v1515
    %v1517 = vand.u32 %v94, 4294901760
    %1518 = vmatprep.subr.mxu0 %v1517
    %v1519 = vand.u32 %v93, 4294901760
    %1520 = vmatpush1.msra.mxu0 %v1519
    %v1521 = vand.u32 %v96, 4294901760
    %1522 = vmatprep.subr.mxu0 %v1521
    %v1523 = vand.u32 %v95, 4294901760
    %1524 = vmatpush1.msra.mxu0 %v1523
    %1525 = vmatprep.subr.mxu0 0.0
    %1526 = vmatpush1.msra.mxu0 0.0
    %1527 = vmatprep.subr.mxu0 0.0
    %1528 = vmatpush1.msra.mxu0 0.0
    %1529 = vmatprep.subr.mxu0 0.0
    %1530 = vmatpush1.msra.mxu0 0.0
    %1531 = vmatprep.subr.mxu0 0.0
    %1532 = vmatpush1.msra.mxu0 0.0
    %1533 = vmatprep.subr.mxu0 0.0
    %1534 = vmatpush1.msra.mxu0 0.0
    %1535 = vmatprep.subr.mxu0 0.0
    %1536 = vmatpush1.msra.mxu0 0.0
    %1537 = vmatprep.subr.mxu0 0.0
    %1538 = vmatpush1.msra.mxu0 0.0
    %1539 = vmatprep.subr.mxu0 0.0
    %1540 = vmatpush1.msra.mxu0 0.0
    %1541 = vmatprep.subr.mxu0 0.0
    %1542 = vmatpush1.msra.mxu0 0.0
    %1543 = vmatprep.subr.mxu0 0.0
    %1544 = vmatpush1.msra.mxu0 0.0
    %1545 = vmatprep.subr.mxu0 0.0
    %1546 = vmatpush1.msra.mxu0 0.0
    %1547 = vmatprep.subr.mxu0 0.0
    %1548 = vmatpush1.msra.mxu0 0.0
    %1549 = vmatprep.subr.mxu0 0.0
    %1550 = vmatpush1.msra.mxu0 0.0
    %1551 = vmatprep.subr.mxu0 0.0
    %1552 = vmatpush1.msra.mxu0 0.0
    %1553 = vmatprep.subr.mxu0 0.0
    %1554 = vmatpush1.msra.mxu0 0.0
    %1555 = vmatprep.subr.mxu0 0.0
    %1556 = vmatpush1.msra.mxu0 0.0
    %1557 = vmatprep.mubr.f32.mxu0 0.0
    %v1558 = vand.u32 %v54, 4294901760
    %v1559 = vsub.f32 %v54, %v1558
    %v1560 = vand.u32 %v1559, 4294901760
    %1561 = vmatmul.mubr.f32.gmra.mrb[0].mxu0 %v1560
    %v1562 = vpop.f32.mrb[0].mxu0
    %v1563 = vadd.f32 %v1457, %v1562
    %v1564 = vpop.f32.mrb[0].mxu0
    %v1565 = vadd.f32 %v1459, %v1564
    %1566 = vdwg.mxu0
    %v1567 = vand.u32 %v66, 4294901760
    %v1568 = vsub.f32 %v66, %v1567
    %v1569 = vand.u32 %v1568, 4294901760
    %1570 = vmatprep.subr.mxu0 %v1569
    %v1571 = vand.u32 %v65, 4294901760
    %v1572 = vsub.f32 %v65, %v1571
    %v1573 = vand.u32 %v1572, 4294901760
    %1574 = vmatpush1.msra.mxu0 %v1573
    %v1575 = vand.u32 %v68, 4294901760
    %v1576 = vsub.f32 %v68, %v1575
    %v1577 = vand.u32 %v1576, 4294901760
    %1578 = vmatprep.subr.mxu0 %v1577
    %v1579 = vand.u32 %v67, 4294901760
    %v1580 = vsub.f32 %v67, %v1579
    %v1581 = vand.u32 %v1580, 4294901760
    %1582 = vmatpush1.msra.mxu0 %v1581
    %v1583 = vand.u32 %v70, 4294901760
    %v1584 = vsub.f32 %v70, %v1583
    %v1585 = vand.u32 %v1584, 4294901760
    %1586 = vmatprep.subr.mxu0 %v1585
    %v1587 = vand.u32 %v69, 4294901760
    %v1588 = vsub.f32 %v69, %v1587
    %v1589 = vand.u32 %v1588, 4294901760
    %1590 = vmatpush1.msra.mxu0 %v1589
    %v1591 = vand.u32 %v72, 4294901760
    %v1592 = vsub.f32 %v72, %v1591
    %v1593 = vand.u32 %v1592, 4294901760
    %1594 = vmatprep.subr.mxu0 %v1593
    %v1595 = vand.u32 %v71, 4294901760
    %v1596 = vsub.f32 %v71, %v1595
    %v1597 = vand.u32 %v1596, 4294901760
    %1598 = vmatpush1.msra.mxu0 %v1597
    %v1599 = vand.u32 %v74, 4294901760
    %v1600 = vsub.f32 %v74, %v1599
    %v1601 = vand.u32 %v1600, 4294901760
    %1602 = vmatprep.subr.mxu0 %v1601
    %v1603 = vand.u32 %v73, 4294901760
    %v1604 = vsub.f32 %v73, %v1603
    %v1605 = vand.u32 %v1604, 4294901760
    %1606 = vmatpush1.msra.mxu0 %v1605
    %v1607 = vand.u32 %v76, 4294901760
    %v1608 = vsub.f32 %v76, %v1607
    %v1609 = vand.u32 %v1608, 4294901760
    %1610 = vmatprep.subr.mxu0 %v1609
    %v1611 = vand.u32 %v75, 4294901760
    %v1612 = vsub.f32 %v75, %v1611
    %v1613 = vand.u32 %v1612, 4294901760
    %1614 = vmatpush1.msra.mxu0 %v1613
    %v1615 = vand.u32 %v78, 4294901760
    %v1616 = vsub.f32 %v78, %v1615
    %v1617 = vand.u32 %v1616, 4294901760
    %1618 = vmatprep.subr.mxu0 %v1617
    %v1619 = vand.u32 %v77, 4294901760
    %v1620 = vsub.f32 %v77, %v1619
    %v1621 = vand.u32 %v1620, 4294901760
    %1622 = vmatpush1.msra.mxu0 %v1621
    %v1623 = vand.u32 %v80, 4294901760
    %v1624 = vsub.f32 %v80, %v1623
    %v1625 = vand.u32 %v1624, 4294901760
    %1626 = vmatprep.subr.mxu0 %v1625
    %v1627 = vand.u32 %v79, 4294901760
    %v1628 = vsub.f32 %v79, %v1627
    %v1629 = vand.u32 %v1628, 4294901760
    %1630 = vmatpush1.msra.mxu0 %v1629
    %v1631 = vand.u32 %v82, 4294901760
    %v1632 = vsub.f32 %v82, %v1631
    %v1633 = vand.u32 %v1632, 4294901760
    %1634 = vmatprep.subr.mxu0 %v1633
    %v1635 = vand.u32 %v81, 4294901760
    %v1636 = vsub.f32 %v81, %v1635
    %v1637 = vand.u32 %v1636, 4294901760
    %1638 = vmatpush1.msra.mxu0 %v1637
    %v1639 = vand.u32 %v84, 4294901760
    %v1640 = vsub.f32 %v84, %v1639
    %v1641 = vand.u32 %v1640, 4294901760
    %1642 = vmatprep.subr.mxu0 %v1641
    %v1643 = vand.u32 %v83, 4294901760
    %v1644 = vsub.f32 %v83, %v1643
    %v1645 = vand.u32 %v1644, 4294901760
    %1646 = vmatpush1.msra.mxu0 %v1645
    %v1647 = vand.u32 %v86, 4294901760
    %v1648 = vsub.f32 %v86, %v1647
    %v1649 = vand.u32 %v1648, 4294901760
    %1650 = vmatprep.subr.mxu0 %v1649
    %v1651 = vand.u32 %v85, 4294901760
    %v1652 = vsub.f32 %v85, %v1651
    %v1653 = vand.u32 %v1652, 4294901760
    %1654 = vmatpush1.msra.mxu0 %v1653
    %v1655 = vand.u32 %v88, 4294901760
    %v1656 = vsub.f32 %v88, %v1655
    %v1657 = vand.u32 %v1656, 4294901760
    %1658 = vmatprep.subr.mxu0 %v1657
    %v1659 = vand.u32 %v87, 4294901760
    %v1660 = vsub.f32 %v87, %v1659
    %v1661 = vand.u32 %v1660, 4294901760
    %1662 = vmatpush1.msra.mxu0 %v1661
    %v1663 = vand.u32 %v90, 4294901760
    %v1664 = vsub.f32 %v90, %v1663
    %v1665 = vand.u32 %v1664, 4294901760
    %1666 = vmatprep.subr.mxu0 %v1665
    %v1667 = vand.u32 %v89, 4294901760
    %v1668 = vsub.f32 %v89, %v1667
    %v1669 = vand.u32 %v1668, 4294901760
    %1670 = vmatpush1.msra.mxu0 %v1669
    %v1671 = vand.u32 %v92, 4294901760
    %v1672 = vsub.f32 %v92, %v1671
    %v1673 = vand.u32 %v1672, 4294901760
    %1674 = vmatprep.subr.mxu0 %v1673
    %v1675 = vand.u32 %v91, 4294901760
    %v1676 = vsub.f32 %v91, %v1675
    %v1677 = vand.u32 %v1676, 4294901760
    %1678 = vmatpush1.msra.mxu0 %v1677
    %v1679 = vand.u32 %v94, 4294901760
    %v1680 = vsub.f32 %v94, %v1679
    %v1681 = vand.u32 %v1680, 4294901760
    %1682 = vmatprep.subr.mxu0 %v1681
    %v1683 = vand.u32 %v93, 4294901760
    %v1684 = vsub.f32 %v93, %v1683
    %v1685 = vand.u32 %v1684, 4294901760
    %1686 = vmatpush1.msra.mxu0 %v1685
    %v1687 = vand.u32 %v96, 4294901760
    %v1688 = vsub.f32 %v96, %v1687
    %v1689 = vand.u32 %v1688, 4294901760
    %1690 = vmatprep.subr.mxu0 %v1689
    %v1691 = vand.u32 %v95, 4294901760
    %v1692 = vsub.f32 %v95, %v1691
    %v1693 = vand.u32 %v1692, 4294901760
    %1694 = vmatpush1.msra.mxu0 %v1693
    %1695 = vmatprep.subr.mxu0 0.0
    %1696 = vmatpush1.msra.mxu0 0.0
    %1697 = vmatprep.subr.mxu0 0.0
    %1698 = vmatpush1.msra.mxu0 0.0
    %1699 = vmatprep.subr.mxu0 0.0
    %1700 = vmatpush1.msra.mxu0 0.0
    %1701 = vmatprep.subr.mxu0 0.0
    %1702 = vmatpush1.msra.mxu0 0.0
    %1703 = vmatprep.subr.mxu0 0.0
    %1704 = vmatpush1.msra.mxu0 0.0
    %1705 = vmatprep.subr.mxu0 0.0
    %1706 = vmatpush1.msra.mxu0 0.0
    %1707 = vmatprep.subr.mxu0 0.0
    %1708 = vmatpush1.msra.mxu0 0.0
    %1709 = vmatprep.subr.mxu0 0.0
    %1710 = vmatpush1.msra.mxu0 0.0
    %1711 = vmatprep.subr.mxu0 0.0
    %1712 = vmatpush1.msra.mxu0 0.0
    %1713 = vmatprep.subr.mxu0 0.0
    %1714 = vmatpush1.msra.mxu0 0.0
    %1715 = vmatprep.subr.mxu0 0.0
    %1716 = vmatpush1.msra.mxu0 0.0
    %1717 = vmatprep.subr.mxu0 0.0
    %1718 = vmatpush1.msra.mxu0 0.0
    %1719 = vmatprep.subr.mxu0 0.0
    %1720 = vmatpush1.msra.mxu0 0.0
    %1721 = vmatprep.subr.mxu0 0.0
    %1722 = vmatpush1.msra.mxu0 0.0
    %1723 = vmatprep.subr.mxu0 0.0
    %1724 = vmatpush1.msra.mxu0 0.0
    %1725 = vmatprep.subr.mxu0 0.0
    %1726 = vmatpush1.msra.mxu0 0.0
    %1727 = vmatprep.mubr.f32.mxu0 0.0
    %v1728 = vand.u32 %v54, 4294901760
    %1729 = vmatmul.mubr.f32.gmra.mrb[0].mxu0 %v1728
    %v1730 = vpop.f32.mrb[0].mxu0
    %v1731 = vadd.f32 %v1563, %v1730
    %v1732 = vpop.f32.mrb[0].mxu0
    %v1733 = vadd.f32 %v1565, %v1732
    %1734 = vdwg.mxu0
    %v1735 = vand.u32 %v66, 4294901760
    %1736 = vmatprep.subr.mxu0 %v1735
    %v1737 = vand.u32 %v65, 4294901760
    %1738 = vmatpush1.msra.mxu0 %v1737
    %v1739 = vand.u32 %v68, 4294901760
    %1740 = vmatprep.subr.mxu0 %v1739
    %v1741 = vand.u32 %v67, 4294901760
    %1742 = vmatpush1.msra.mxu0 %v1741
    %v1743 = vand.u32 %v70, 4294901760
    %1744 = vmatprep.subr.mxu0 %v1743
    %v1745 = vand.u32 %v69, 4294901760
    %1746 = vmatpush1.msra.mxu0 %v1745
    %v1747 = vand.u32 %v72, 4294901760
    %1748 = vmatprep.subr.mxu0 %v1747
    %v1749 = vand.u32 %v71, 4294901760
    %1750 = vmatpush1.msra.mxu0 %v1749
    %v1751 = vand.u32 %v74, 4294901760
    %1752 = vmatprep.subr.mxu0 %v1751
    %v1753 = vand.u32 %v73, 4294901760
    %1754 = vmatpush1.msra.mxu0 %v1753
    %v1755 = vand.u32 %v76, 4294901760
    %1756 = vmatprep.subr.mxu0 %v1755
    %v1757 = vand.u32 %v75, 4294901760
    %1758 = vmatpush1.msra.mxu0 %v1757
    %v1759 = vand.u32 %v78, 4294901760
    %1760 = vmatprep.subr.mxu0 %v1759
    %v1761 = vand.u32 %v77, 4294901760
    %1762 = vmatpush1.msra.mxu0 %v1761
    %v1763 = vand.u32 %v80, 4294901760
    %1764 = vmatprep.subr.mxu0 %v1763
    %v1765 = vand.u32 %v79, 4294901760
    %1766 = vmatpush1.msra.mxu0 %v1765
    %v1767 = vand.u32 %v82, 4294901760
    %1768 = vmatprep.subr.mxu0 %v1767
    %v1769 = vand.u32 %v81, 4294901760
    %1770 = vmatpush1.msra.mxu0 %v1769
    %v1771 = vand.u32 %v84, 4294901760
    %1772 = vmatprep.subr.mxu0 %v1771
    %v1773 = vand.u32 %v83, 4294901760
    %1774 = vmatpush1.msra.mxu0 %v1773
    %v1775 = vand.u32 %v86, 4294901760
    %1776 = vmatprep.subr.mxu0 %v1775
    %v1777 = vand.u32 %v85, 4294901760
    %1778 = vmatpush1.msra.mxu0 %v1777
    %v1779 = vand.u32 %v88, 4294901760
    %1780 = vmatprep.subr.mxu0 %v1779
    %v1781 = vand.u32 %v87, 4294901760
    %1782 = vmatpush1.msra.mxu0 %v1781
    %v1783 = vand.u32 %v90, 4294901760
    %1784 = vmatprep.subr.mxu0 %v1783
    %v1785 = vand.u32 %v89, 4294901760
    %1786 = vmatpush1.msra.mxu0 %v1785
    %v1787 = vand.u32 %v92, 4294901760
    %1788 = vmatprep.subr.mxu0 %v1787
    %v1789 = vand.u32 %v91, 4294901760
    %1790 = vmatpush1.msra.mxu0 %v1789
    %v1791 = vand.u32 %v94, 4294901760
    %1792 = vmatprep.subr.mxu0 %v1791
    %v1793 = vand.u32 %v93, 4294901760
    %1794 = vmatpush1.msra.mxu0 %v1793
    %v1795 = vand.u32 %v96, 4294901760
    %1796 = vmatprep.subr.mxu0 %v1795
    %v1797 = vand.u32 %v95, 4294901760
    %1798 = vmatpush1.msra.mxu0 %v1797
    %1799 = vmatprep.subr.mxu0 0.0
    %1800 = vmatpush1.msra.mxu0 0.0
    %1801 = vmatprep.subr.mxu0 0.0
    %1802 = vmatpush1.msra.mxu0 0.0
    %1803 = vmatprep.subr.mxu0 0.0
    %1804 = vmatpush1.msra.mxu0 0.0
    %1805 = vmatprep.subr.mxu0 0.0
    %1806 = vmatpush1.msra.mxu0 0.0
    %1807 = vmatprep.subr.mxu0 0.0
    %1808 = vmatpush1.msra.mxu0 0.0
    %1809 = vmatprep.subr.mxu0 0.0
    %1810 = vmatpush1.msra.mxu0 0.0
    %1811 = vmatprep.subr.mxu0 0.0
    %1812 = vmatpush1.msra.mxu0 0.0
    %1813 = vmatprep.subr.mxu0 0.0
    %1814 = vmatpush1.msra.mxu0 0.0
    %1815 = vmatprep.subr.mxu0 0.0
    %1816 = vmatpush1.msra.mxu0 0.0
    %1817 = vmatprep.subr.mxu0 0.0
    %1818 = vmatpush1.msra.mxu0 0.0
    %1819 = vmatprep.subr.mxu0 0.0
    %1820 = vmatpush1.msra.mxu0 0.0
    %1821 = vmatprep.subr.mxu0 0.0
    %1822 = vmatpush1.msra.mxu0 0.0
    %1823 = vmatprep.subr.mxu0 0.0
    %1824 = vmatpush1.msra.mxu0 0.0
    %1825 = vmatprep.subr.mxu0 0.0
    %1826 = vmatpush1.msra.mxu0 0.0
    %1827 = vmatprep.subr.mxu0 0.0
    %1828 = vmatpush1.msra.mxu0 0.0
    %1829 = vmatprep.subr.mxu0 0.0
    %1830 = vmatpush1.msra.mxu0 0.0
    %1831 = vmatprep.mubr.f32.mxu0 0.0
    %v1832 = vand.u32 %v54, 4294901760
    %1833 = vmatmul.mubr.f32.gmra.mrb[0].mxu0 %v1832
    %v1834 = vpop.f32.mrb[0].mxu0
    %v1835 = vadd.f32 %v1731, %v1834
    %v1836 = vpop.f32.mrb[0].mxu0
    %v1837 = vadd.f32 %v1733, %v1836
    %1838 = vdwg.mxu0
    %1839 = vst [vmem:[#allocation8] sm:$0xff] %v1835
    %1840 = vst [vmem:[#allocation8 + $0x8] sm:$0xff] %v1837
    // Predicated region
    $region26: #{tpu_custom_call.1} parent=1 // pred_check
      _
    $region27: #{tpu_custom_call.1} parent=1 // pred_check_branch
      %1842 = sbr.rel (0) target = $region29
    $region28: #{tpu_custom_call.1} parent=1 // pred_region
      %s1844 = ssub.s32 256, 256
      %1845 = vsyncadd [#allocation4], %s1844
      %s1847 = sshll.u32 [#allocation8], 4
      %s1848 = int_to_ptr.vmem [resolvable:$true] %s1847
      %1850 = dma.vmem_to_hbm [thread:$0]  %s1848, 256, %s3, [#allocation4]
    $region29: #{tpu_custom_call.1} parent=1 // pred_fallthru
      _
    // Predicated region
    $region30: #{tpu_custom_call.1} parent=1 // pred_check
      _
    $region31: #{tpu_custom_call.1} parent=1 // pred_check_branch
      %1852 = sbr.rel (0) target = $region33
    $region32: #{tpu_custom_call.1} parent=1 // pred_region
      %1853 = dma.done [#allocation4], 256
    $region33: #{tpu_custom_call.1} parent=1 // pred_fallthru
      _
    %1854 = vsyncpa [#allocation3], 1
    %1855 = vsyncpa [#allocation6], 1
    %1856 = vsyncpa [#allocation4], 1

</llo_original>
